<compile_context>
chip_gen: v5e
topology: v5e:2x2
jax: 0.10.0
libtpu: 0.0.40
codegen_flags: <defaults>
</compile_context>

<pallas_src>
import functools

import numpy as np

import jax
import jax.numpy as jnp
from jax.experimental import pallas as pl
from jax.experimental.pallas import tpu as pltpu


def _conv_out(n):  # 3x3 conv, stride 2, pad 1
    return (n + 2 - 3) // 2 + 1


# ----------------------------- the fused Pallas kernel ---------------------------

def _critic_kernel(xcols_ref, mask_ref,
                   w1_ref, b1_ref, w2_ref, b2_ref, w3_ref, b3_ref,
                   wf1_ref, bf1_ref, wf2_ref, bf2_ref, wf3_ref, bf3_ref,
                   out_ref, pad_ref, h3w_ref,
                   *, n_batch, n_path, r, h2, w2s, h3, w3s, nh, nw):
    f32, bf16 = jnp.float32, jnp.bfloat16

    # conv1 (1x1) + BN1 + ReLU over all 9 conv2 taps as ONE block-diagonal matmul,
    # then one wide mask multiply (zeros conv2's padding taps and padded image rows).
    h1 = jnp.maximum(jnp.dot(xcols_ref[...], w1_ref[...], preferred_element_type=f32)
                     + b1_ref[...], 0.0)
    h1 = h1 * mask_ref[...].astype(f32)                                 # (h2*w2s*r, 144)

    # conv2 + BN2 + ReLU: ONE K=144 matmul against the tap-stacked weight.
    h2v = jnp.maximum(jnp.dot(h1.astype(bf16), w2_ref[...], preferred_element_type=f32)
                      + b2_ref[...], 0.0)                               # (h2*w2s*r, 32)
    h2v = h2v.reshape(h2, w2s, r, 32)

    # Scatter conv2's output into a zero-padded, stride-2 DE-INTERLEAVED scratch
    # (index = parity*half + pos//2), so each conv3 tap below is a contiguous slice.
    pad_ref[...] = jnp.zeros(pad_ref.shape, f32)
    for ih in range(h2):
        d0 = ((ih + 1) % 2) * nh + (ih + 1) // 2
        for iw in range(w2s):
            d1 = ((iw + 1) % 2) * nw + (iw + 1) // 2
            pad_ref[d0, d1, :, :] = h2v[ih, iw, :, :]

    # conv3 + BN3 + ReLU: 9 tap matmuls fed by contiguous static slices of the scratch.
    acc3 = jnp.zeros((h3 * w3s * r, 64), f32)
    for kh in range(3):
        d0 = (kh % 2) * nh + kh // 2
        for kw in range(3):
            d1 = (kw % 2) * nw + kw // 2
            k = kh * 3 + kw
            tap = pad_ref[d0:d0 + h3, d1:d1 + w3s, :, :]                # (h3, w3s, r, 32)
            acc3 = acc3 + jnp.dot(tap.reshape(h3 * w3s * r, 32).astype(bf16),
                                  w3_ref[k * 32:(k + 1) * 32, :],
                                  preferred_element_type=f32)
    h3v = jnp.maximum(acc3 + b3_ref[...], 0.0)                # (16*r, 64), row = s3*r + bp

    # fc1: lay h3 out lane-dense as (r, 16*64) so fc1 is ONE K=1024 matmul.
    for s in range(h3 * w3s):
        h3w_ref[:, s * 64:(s + 1) * 64] = h3v[s * r:(s + 1) * r, :]
    h4 = jnp.maximum(jnp.dot(h3w_ref[...].astype(bf16), wf1_ref[...],
                             preferred_element_type=f32) + bf1_ref[...], 0.0)   # (r, 512)

    # fc2
    h5 = jnp.maximum(jnp.dot(h4.astype(bf16), wf2_ref[...],
                             preferred_element_type=f32) + bf2_ref[...], 0.0)   # (r, 128)

    # fc3 (out dim 1): VPU multiply + lane reduction instead of an N=1 matmul.
    v = jnp.sum(h5 * wf3_ref[...], axis=1, keepdims=True) + bf3_ref[...]        # (r, 1)

    # Max over paths on registers.  Row layout is bp = p*n_batch + b; rows
    # bp >= n_path*n_batch are image padding and are NEVER read here.
    m = v[0:n_batch, :]
    for p in range(1, n_path):
        m = jnp.maximum(m, v[p * n_batch:(p + 1) * n_batch, :])
    out_ref[...] = m.astype(out_ref.dtype)


# ------------------------------- params & one-time prep --------------------------

def init_critic_params(key, action_dim=4, init_w=0.003):
    # action_dim / init_w are unused by Critic.forward (kept for signature parity).
    ks = jax.random.split(key, 12)

    def rnd(k, shape, scale=0.05):
        return jax.random.normal(k, shape, dtype=jnp.float32) * scale

    params = {
        "conv1_w": rnd(ks[0], (16, 1, 1, 1)),   # torch Conv2d(1, 16, 1x1)
        "conv1_b": rnd(ks[1], (16,)),
        "conv2_w": rnd(ks[2], (32, 16, 3, 3)),  # torch Conv2d(16, 32, 3x3, s2, p1)
        "conv2_b": rnd(ks[3], (32,)),
        "conv3_w": rnd(ks[4], (64, 32, 3, 3)),  # torch Conv2d(32, 64, 3x3, s2, p1)
        "conv3_b": rnd(ks[5], (64,)),
        "fc1_w": rnd(ks[6], (64 * 4 * 4, 512), 0.02),  # stored (in, out)
        "fc1_b": rnd(ks[7], (512,)),
        "fc2_w": rnd(ks[8], (512, 128), 0.02),
        "fc2_b": rnd(ks[9], (128,)),
        "fc3_w": rnd(ks[10], (128, 1), 0.02),
        "fc3_b": rnd(ks[11], (1,)),
    }
    for name, c in (("bn1", 16), ("bn2", 32), ("bn3", 64)):   # PyTorch BN defaults
        params[f"{name}_gamma"] = jnp.ones((c,), jnp.float32)
        params[f"{name}_beta"] = jnp.zeros((c,), jnp.float32)
        params[f"{name}_mean"] = jnp.zeros((c,), jnp.float32)
        params[f"{name}_var"] = jnp.ones((c,), jnp.float32)
    return params


def prepare_params(params, batch, k_path, h=14, w=14, eps=1e-5):
    """One-time weight prep OUTSIDE the hot path: fold eval-mode BN, build the
    block-diagonal conv1 weight, stack conv2/conv3 weights as (tap*cin, cout),
    permute fc1 rows to absorb torch's NCHW flatten, pre-expand the conv2 tap mask
    to a lane-dense (rows, 144) bf16 array, and cast large weights to bf16."""
    f32, bf16 = jnp.float32, jnp.bfloat16
    pb = batch * k_path
    r = ((pb + 7) // 8) * 8
    h2, w2 = _conv_out(h), _conv_out(w)
    h3, w3 = _conv_out(h2), _conv_out(w2)
    assert h3 * w3 * 64 == params["fc1_w"].shape[0], "fc1 expects 64*4*4 conv output"

    def scale(g, var):
        return g / jnp.sqrt(var + eps)

    # conv1 (1x1, cin=1) + BN1 folded, replicated block-diagonally over the 9 taps.
    s1 = scale(params["bn1_gamma"], params["bn1_var"])
    w1f = params["conv1_w"].reshape(16) * s1
    b1f = (params["conv1_b"] - params["bn1_mean"]) * s1 + params["bn1_beta"]
    w1bd = jnp.kron(jnp.eye(9, dtype=f32), w1f[None, :]).astype(f32)        # (9, 144)
    b1t = jnp.tile(b1f, 9)[None, :].astype(f32)                             # (1, 144)

    # conv2 + BN2: rows ordered (tap, cin) to match conv1's column blocks.
    s2 = scale(params["bn2_gamma"], params["bn2_var"])
    w2m = params["conv2_w"].transpose(2, 3, 1, 0).reshape(9 * 16, 32) * s2[None, :]
    b2f = (params["conv2_b"] - params["bn2_mean"]) * s2 + params["bn2_beta"]

    # conv3 + BN3.
    s3 = scale(params["bn3_gamma"], params["bn3_var"])
    w3m = params["conv3_w"].transpose(2, 3, 1, 0).reshape(9 * 32, 64) * s3[None, :]
    b3f = (params["conv3_b"] - params["bn3_mean"]) * s3 + params["bn3_beta"]

    # fc1: torch flatten of (64, 4, 4) indexes features as c*16 + s; permute rows to
    # s*64 + c so the kernel's lane-dense (r, 1024) activation multiplies it directly.
    wf1 = params["fc1_w"].reshape(64, h3 * w3, 512).transpose(1, 0, 2)
    wf1 = wf1.reshape(h3 * w3 * 64, 512)

    # conv2-tap validity mask, pre-expanded to (rows, 9*16); also zeroes padded rows.
    m9 = np.zeros((h2, w2, r, 9), np.float32)
    for oh in range(h2):
        for ow in range(w2):
            for kh in range(3):
                for kw in range(3):
                    ih, iw = 2 * oh - 1 + kh, 2 * ow - 1 + kw
                    if 0 <= ih < h and 0 <= iw < w:
                        m9[oh, ow, :pb, kh * 3 + kw] = 1.0
    mask144 = np.repeat(m9.reshape(h2 * w2 * r, 9), 16, axis=1)

    return {
        "w1bd": w1bd, "b1": b1t,
        "w2": w2m.astype(bf16), "b2": b2f.reshape(1, 32).astype(f32),
        "w3": w3m.astype(bf16), "b3": b3f.reshape(1, 64).astype(f32),
        "wf1": wf1.astype(bf16), "bf1": params["fc1_b"].reshape(1, 512).astype(f32),
        "wf2": params["fc2_w"].astype(bf16),
        "bf2": params["fc2_b"].reshape(1, 128).astype(f32),
        "wf3": params["fc3_w"].reshape(1, 128).astype(f32),
        "bf3": params["fc3_b"].reshape(1, 1).astype(f32),
        "mask144": jnp.asarray(mask144, dtype=bf16),
    }


# --------------------------------- forward wrapper --------------------------------

def critic_forward(prep, state):
    """state: (B, K_path, 14, 14) -> (B, 1)  (max over paths, like torch .max(1)[0])."""
    b, p, h, w = state.shape
    pb = p * b
    r = ((pb + 7) // 8) * 8
    h2, w2 = _conv_out(h), _conv_out(w)
    h3, w3 = _conv_out(h2), _conv_out(w2)
    nh, nw = (h2 + 2 + 1) // 2, (w2 + 2 + 1) // 2
    assert prep["mask144"].shape == (h2 * w2 * r, 144), "prep/state geometry mismatch"

    # Shared weights + eval-mode BN across paths => fold (path, batch) into one image
    # axis (p-major so per-path value blocks are contiguous rows); pad images to r.
    x = jnp.transpose(state, (1, 0, 2, 3)).reshape(pb, h, w).astype(jnp.float32)
    xp = jnp.pad(x, ((0, r - pb), (1, 1), (1, 1)))
    cols = [xp[:, kh:kh + 2 * (h2 - 1) + 1:2, kw:kw + 2 * (w2 - 1) + 1:2]
            for kh in range(3) for kw in range(3)]
    taps = jnp.stack(cols, axis=-1)                                   # (r, h2, w2, 9)
    x_cols = jnp.transpose(taps, (1, 2, 0, 3)).reshape(h2 * w2 * r, 9)

    kernel = functools.partial(_critic_kernel, n_batch=b, n_path=p, r=r,
                               h2=h2, w2s=w2, h3=h3, w3s=w3, nh=nh, nw=nw)
    vmem_spec = pl.BlockSpec(memory_space=pltpu.MemorySpace.VMEM)
    args = (x_cols, prep["mask144"],
            prep["w1bd"], prep["b1"], prep["w2"], prep["b2"], prep["w3"], prep["b3"],
            prep["wf1"], prep["bf1"], prep["wf2"], prep["bf2"],
            prep["wf3"], prep["bf3"])

    # Single invocation (no grid): full-array, single-buffered VMEM operands; no
    # double-buffering / pipelining machinery for a one-step kernel.
    return pl.pallas_call(
        kernel,
        out_shape=jax.ShapeDtypeStruct((b, 1), jnp.float32),
        in_specs=[vmem_spec] * len(args),
        out_specs=vmem_spec,
        scratch_shapes=[pltpu.VMEM((2 * nh, 2 * nw, r, 32), jnp.float32),
                        pltpu.VMEM((r, h3 * w3 * 64), jnp.float32)],
    )(*args)


if __name__ == "__main__":
    key = jax.random.PRNGKey(0)
    pkey, skey = jax.random.split(key)
    params = init_critic_params(pkey, action_dim=4)

    batch, k_path = 2, 3
    prep = prepare_params(params, batch, k_path, h=14, w=14)   # one-time, off hot path

    state = jax.random.normal(skey, (batch, k_path, 14, 14), dtype=jnp.float32)
    out = jax.jit(critic_forward)(prep, state)
    out = jax.block_until_ready(out)
    assert out.shape == (batch, 1) and out.dtype == jnp.float32
    print("KERNEL_OK")
</pallas_src>

<mosaic_0001>
module attributes {stable_mosaic.version = 11 : i64} {
  func.func @_critic_kernel(%arg0: memref<392x9xf32, #tpu.memory_space<vmem>>, %arg1: memref<392x144xbf16, #tpu.memory_space<vmem>>, %arg2: memref<9x144xf32, #tpu.memory_space<vmem>>, %arg3: memref<1x144xf32, #tpu.memory_space<vmem>>, %arg4: memref<144x32xbf16, #tpu.memory_space<vmem>>, %arg5: memref<1x32xf32, #tpu.memory_space<vmem>>, %arg6: memref<288x64xbf16, #tpu.memory_space<vmem>>, %arg7: memref<1x64xf32, #tpu.memory_space<vmem>>, %arg8: memref<1024x512xbf16, #tpu.memory_space<vmem>>, %arg9: memref<1x512xf32, #tpu.memory_space<vmem>>, %arg10: memref<512x128xbf16, #tpu.memory_space<vmem>>, %arg11: memref<1x128xf32, #tpu.memory_space<vmem>>, %arg12: memref<1x128xf32, #tpu.memory_space<vmem>>, %arg13: memref<1x1xf32, #tpu.memory_space<vmem>>, %arg14: memref<2x1xf32, #tpu.memory_space<vmem>>, %arg15: memref<10x10x8x32xf32, #tpu.memory_space<vmem>>, %arg16: memref<8x1024xf32, #tpu.memory_space<vmem>>) attributes {dimension_semantics = [], scalar_prefetch = 0 : i64, scratch_operands = 2 : i64, tpu.core_type = #tpu.core_type<tc>} {
    %c0 = arith.constant 0 : index
    %c0_0 = arith.constant 0 : index
    %0 = vector.load %arg0[%c0, %c0_0] : memref<392x9xf32, #tpu.memory_space<vmem>>, vector<392x9xf32>
    %c0_1 = arith.constant 0 : index
    %c0_2 = arith.constant 0 : index
    %1 = vector.load %arg2[%c0_1, %c0_2] : memref<9x144xf32, #tpu.memory_space<vmem>>, vector<9x144xf32>
    %cst = arith.constant dense<0.000000e+00> : vector<392x144xf32>
    %2 = tpu.matmul %0, %1, %cst {dimension_numbers = #tpu.dot_dimension_numbers<[1], [0], [0], [1], [0, 0, 1, 1], [], []>} : vector<392x9xf32>, vector<9x144xf32>, vector<392x144xf32> -> vector<392x144xf32>
    %c0_3 = arith.constant 0 : index
    %c0_4 = arith.constant 0 : index
    %3 = vector.load %arg3[%c0_3, %c0_4] : memref<1x144xf32, #tpu.memory_space<vmem>>, vector<1x144xf32>
    %4 = vector.broadcast %3 : vector<1x144xf32> to vector<392x144xf32>
    %5 = arith.addf %2, %4 : vector<392x144xf32>
    %cst_5 = arith.constant 0.000000e+00 : f32
    %6 = vector.broadcast %cst_5 : f32 to vector<392x144xf32>
    %7 = arith.maximumf %5, %6 : vector<392x144xf32>
    %c0_6 = arith.constant 0 : index
    %c0_7 = arith.constant 0 : index
    %8 = vector.load %arg1[%c0_6, %c0_7] : memref<392x144xbf16, #tpu.memory_space<vmem>>, vector<392x144xbf16>
    %9 = arith.extf %8 : vector<392x144xbf16> to vector<392x144xf32>
    %10 = arith.mulf %7, %9 : vector<392x144xf32>
    %11 = arith.truncf %10 : vector<392x144xf32> to vector<392x144xbf16>
    %c0_8 = arith.constant 0 : index
    %c0_9 = arith.constant 0 : index
    %12 = vector.load %arg4[%c0_8, %c0_9] : memref<144x32xbf16, #tpu.memory_space<vmem>>, vector<144x32xbf16>
    %cst_10 = arith.constant dense<0.000000e+00> : vector<392x32xf32>
    %13 = tpu.matmul %11, %12, %cst_10 {dimension_numbers = #tpu.dot_dimension_numbers<[1], [0], [0], [1], [0, 0, 1, 1], [], []>} : vector<392x144xbf16>, vector<144x32xbf16>, vector<392x32xf32> -> vector<392x32xf32>
    %c0_11 = arith.constant 0 : index
    %c0_12 = arith.constant 0 : index
    %14 = vector.load %arg5[%c0_11, %c0_12] : memref<1x32xf32, #tpu.memory_space<vmem>>, vector<1x32xf32>
    %15 = vector.broadcast %14 : vector<1x32xf32> to vector<392x32xf32>
    %16 = arith.addf %13, %15 : vector<392x32xf32>
    %cst_13 = arith.constant 0.000000e+00 : f32
    %17 = vector.broadcast %cst_13 : f32 to vector<392x32xf32>
    %18 = arith.maximumf %16, %17 : vector<392x32xf32>
    %19 = vector.shape_cast %18 : vector<392x32xf32> to vector<7x7x8x32xf32>
    %cst_14 = arith.constant 0.000000e+00 : f32
    %20 = vector.broadcast %cst_14 : f32 to vector<10x10x8x32xf32>
    %c0_15 = arith.constant 0 : index
    %c0_16 = arith.constant 0 : index
    %c0_17 = arith.constant 0 : index
    %c0_18 = arith.constant 0 : index
    %21 = vector.load %arg15[%c0_15, %c0_16, %c0_17, %c0_18] : memref<10x10x8x32xf32, #tpu.memory_space<vmem>>, vector<10x10x8x32xf32>
    tpu.vector_store %arg15[%c0_15, %c0_16, %c0_17, %c0_18], %20 {strides = array<i32>} : memref<10x10x8x32xf32, #tpu.memory_space<vmem>>, vector<10x10x8x32xf32>,
    %22 = vector.extract_strided_slice %19 {offsets = [0, 0, 0, 0], sizes = [1, 1, 8, 32], strides = [1, 1, 1, 1]} : vector<7x7x8x32xf32> to vector<1x1x8x32xf32>
    %23 = vector.shape_cast %22 : vector<1x1x8x32xf32> to vector<8x32xf32>
    %c5 = arith.constant 5 : index
    %c5_19 = arith.constant 5 : index
    %c0_20 = arith.constant 0 : index
    %c0_21 = arith.constant 0 : index
    %24 = vector.load %arg15[%c5, %c5_19, %c0_20, %c0_21] : memref<10x10x8x32xf32, #tpu.memory_space<vmem>>, vector<1x1x8x32xf32>
    %25 = vector.shape_cast %24 : vector<1x1x8x32xf32> to vector<8x32xf32>
    %26 = vector.shape_cast %23 : vector<8x32xf32> to vector<1x1x8x32xf32>
    tpu.vector_store %arg15[%c5, %c5_19, %c0_20, %c0_21], %26 {strides = array<i32>} : memref<10x10x8x32xf32, #tpu.memory_space<vmem>>, vector<1x1x8x32xf32>,
    %27 = vector.extract_strided_slice %19 {offsets = [0, 1, 0, 0], sizes = [1, 1, 8, 32], strides = [1, 1, 1, 1]} : vector<7x7x8x32xf32> to vector<1x1x8x32xf32>
    %28 = vector.shape_cast %27 : vector<1x1x8x32xf32> to vector<8x32xf32>
    %c5_22 = arith.constant 5 : index
    %c1 = arith.constant 1 : index
    %c0_23 = arith.constant 0 : index
    %c0_24 = arith.constant 0 : index
    %29 = vector.load %arg15[%c5_22, %c1, %c0_23, %c0_24] : memref<10x10x8x32xf32, #tpu.memory_space<vmem>>, vector<1x1x8x32xf32>
    %30 = vector.shape_cast %29 : vector<1x1x8x32xf32> to vector<8x32xf32>
    %31 = vector.shape_cast %28 : vector<8x32xf32> to vector<1x1x8x32xf32>
    tpu.vector_store %arg15[%c5_22, %c1, %c0_23, %c0_24], %31 {strides = array<i32>} : memref<10x10x8x32xf32, #tpu.memory_space<vmem>>, vector<1x1x8x32xf32>,
    %32 = vector.extract_strided_slice %19 {offsets = [0, 2, 0, 0], sizes = [1, 1, 8, 32], strides = [1, 1, 1, 1]} : vector<7x7x8x32xf32> to vector<1x1x8x32xf32>
    %33 = vector.shape_cast %32 : vector<1x1x8x32xf32> to vector<8x32xf32>
    %c5_25 = arith.constant 5 : index
    %c6 = arith.constant 6 : index
    %c0_26 = arith.constant 0 : index
    %c0_27 = arith.constant 0 : index
    %34 = vector.load %arg15[%c5_25, %c6, %c0_26, %c0_27] : memref<10x10x8x32xf32, #tpu.memory_space<vmem>>, vector<1x1x8x32xf32>
    %35 = vector.shape_cast %34 : vector<1x1x8x32xf32> to vector<8x32xf32>
    %36 = vector.shape_cast %33 : vector<8x32xf32> to vector<1x1x8x32xf32>
    tpu.vector_store %arg15[%c5_25, %c6, %c0_26, %c0_27], %36 {strides = array<i32>} : memref<10x10x8x32xf32, #tpu.memory_space<vmem>>, vector<1x1x8x32xf32>,
    %37 = vector.extract_strided_slice %19 {offsets = [0, 3, 0, 0], sizes = [1, 1, 8, 32], strides = [1, 1, 1, 1]} : vector<7x7x8x32xf32> to vector<1x1x8x32xf32>
    %38 = vector.shape_cast %37 : vector<1x1x8x32xf32> to vector<8x32xf32>
    %c5_28 = arith.constant 5 : index
    %c2 = arith.constant 2 : index
    %c0_29 = arith.constant 0 : index
    %c0_30 = arith.constant 0 : index
    %39 = vector.load %arg15[%c5_28, %c2, %c0_29, %c0_30] : memref<10x10x8x32xf32, #tpu.memory_space<vmem>>, vector<1x1x8x32xf32>
    %40 = vector.shape_cast %39 : vector<1x1x8x32xf32> to vector<8x32xf32>
    %41 = vector.shape_cast %38 : vector<8x32xf32> to vector<1x1x8x32xf32>
    tpu.vector_store %arg15[%c5_28, %c2, %c0_29, %c0_30], %41 {strides = array<i32>} : memref<10x10x8x32xf32, #tpu.memory_space<vmem>>, vector<1x1x8x32xf32>,
    %42 = vector.extract_strided_slice %19 {offsets = [0, 4, 0, 0], sizes = [1, 1, 8, 32], strides = [1, 1, 1, 1]} : vector<7x7x8x32xf32> to vector<1x1x8x32xf32>
    %43 = vector.shape_cast %42 : vector<1x1x8x32xf32> to vector<8x32xf32>
    %c5_31 = arith.constant 5 : index
    %c7 = arith.constant 7 : index
    %c0_32 = arith.constant 0 : index
    %c0_33 = arith.constant 0 : index
    %44 = vector.load %arg15[%c5_31, %c7, %c0_32, %c0_33] : memref<10x10x8x32xf32, #tpu.memory_space<vmem>>, vector<1x1x8x32xf32>
    %45 = vector.shape_cast %44 : vector<1x1x8x32xf32> to vector<8x32xf32>
    %46 = vector.shape_cast %43 : vector<8x32xf32> to vector<1x1x8x32xf32>
    tpu.vector_store %arg15[%c5_31, %c7, %c0_32, %c0_33], %46 {strides = array<i32>} : memref<10x10x8x32xf32, #tpu.memory_space<vmem>>, vector<1x1x8x32xf32>,
    %47 = vector.extract_strided_slice %19 {offsets = [0, 5, 0, 0], sizes = [1, 1, 8, 32], strides = [1, 1, 1, 1]} : vector<7x7x8x32xf32> to vector<1x1x8x32xf32>
    %48 = vector.shape_cast %47 : vector<1x1x8x32xf32> to vector<8x32xf32>
    %c5_34 = arith.constant 5 : index
    %c3 = arith.constant 3 : index
    %c0_35 = arith.constant 0 : index
    %c0_36 = arith.constant 0 : index
    %49 = vector.load %arg15[%c5_34, %c3, %c0_35, %c0_36] : memref<10x10x8x32xf32, #tpu.memory_space<vmem>>, vector<1x1x8x32xf32>
    %50 = vector.shape_cast %49 : vector<1x1x8x32xf32> to vector<8x32xf32>
    %51 = vector.shape_cast %48 : vector<8x32xf32> to vector<1x1x8x32xf32>
    tpu.vector_store %arg15[%c5_34, %c3, %c0_35, %c0_36], %51 {strides = array<i32>} : memref<10x10x8x32xf32, #tpu.memory_space<vmem>>, vector<1x1x8x32xf32>,
    %52 = vector.extract_strided_slice %19 {offsets = [0, 6, 0, 0], sizes = [1, 1, 8, 32], strides = [1, 1, 1, 1]} : vector<7x7x8x32xf32> to vector<1x1x8x32xf32>
    %53 = vector.shape_cast %52 : vector<1x1x8x32xf32> to vector<8x32xf32>
    %c5_37 = arith.constant 5 : index
    %c8 = arith.constant 8 : index
    %c0_38 = arith.constant 0 : index
    %c0_39 = arith.constant 0 : index
    %54 = vector.load %arg15[%c5_37, %c8, %c0_38, %c0_39] : memref<10x10x8x32xf32, #tpu.memory_space<vmem>>, vector<1x1x8x32xf32>
    %55 = vector.shape_cast %54 : vector<1x1x8x32xf32> to vector<8x32xf32>
    %56 = vector.shape_cast %53 : vector<8x32xf32> to vector<1x1x8x32xf32>
    tpu.vector_store %arg15[%c5_37, %c8, %c0_38, %c0_39], %56 {strides = array<i32>} : memref<10x10x8x32xf32, #tpu.memory_space<vmem>>, vector<1x1x8x32xf32>,
    %57 = vector.extract_strided_slice %19 {offsets = [1, 0, 0, 0], sizes = [1, 1, 8, 32], strides = [1, 1, 1, 1]} : vector<7x7x8x32xf32> to vector<1x1x8x32xf32>
    %58 = vector.shape_cast %57 : vector<1x1x8x32xf32> to vector<8x32xf32>
    %c1_40 = arith.constant 1 : index
    %c5_41 = arith.constant 5 : index
    %c0_42 = arith.constant 0 : index
    %c0_43 = arith.constant 0 : index
    %59 = vector.load %arg15[%c1_40, %c5_41, %c0_42, %c0_43] : memref<10x10x8x32xf32, #tpu.memory_space<vmem>>, vector<1x1x8x32xf32>
    %60 = vector.shape_cast %59 : vector<1x1x8x32xf32> to vector<8x32xf32>
    %61 = vector.shape_cast %58 : vector<8x32xf32> to vector<1x1x8x32xf32>
    tpu.vector_store %arg15[%c1_40, %c5_41, %c0_42, %c0_43], %61 {strides = array<i32>} : memref<10x10x8x32xf32, #tpu.memory_space<vmem>>, vector<1x1x8x32xf32>,
    %62 = vector.extract_strided_slice %19 {offsets = [1, 1, 0, 0], sizes = [1, 1, 8, 32], strides = [1, 1, 1, 1]} : vector<7x7x8x32xf32> to vector<1x1x8x32xf32>
    %63 = vector.shape_cast %62 : vector<1x1x8x32xf32> to vector<8x32xf32>
    %c1_44 = arith.constant 1 : index
    %c1_45 = arith.constant 1 : index
    %c0_46 = arith.constant 0 : index
    %c0_47 = arith.constant 0 : index
    %64 = vector.load %arg15[%c1_44, %c1_45, %c0_46, %c0_47] : memref<10x10x8x32xf32, #tpu.memory_space<vmem>>, vector<1x1x8x32xf32>
    %65 = vector.shape_cast %64 : vector<1x1x8x32xf32> to vector<8x32xf32>
    %66 = vector.shape_cast %63 : vector<8x32xf32> to vector<1x1x8x32xf32>
    tpu.vector_store %arg15[%c1_44, %c1_45, %c0_46, %c0_47], %66 {strides = array<i32>} : memref<10x10x8x32xf32, #tpu.memory_space<vmem>>, vector<1x1x8x32xf32>,
    %67 = vector.extract_strided_slice %19 {offsets = [1, 2, 0, 0], sizes = [1, 1, 8, 32], strides = [1, 1, 1, 1]} : vector<7x7x8x32xf32> to vector<1x1x8x32xf32>
    %68 = vector.shape_cast %67 : vector<1x1x8x32xf32> to vector<8x32xf32>
    %c1_48 = arith.constant 1 : index
    %c6_49 = arith.constant 6 : index
    %c0_50 = arith.constant 0 : index
    %c0_51 = arith.constant 0 : index
    %69 = vector.load %arg15[%c1_48, %c6_49, %c0_50, %c0_51] : memref<10x10x8x32xf32, #tpu.memory_space<vmem>>, vector<1x1x8x32xf32>
    %70 = vector.shape_cast %69 : vector<1x1x8x32xf32> to vector<8x32xf32>
    %71 = vector.shape_cast %68 : vector<8x32xf32> to vector<1x1x8x32xf32>
    tpu.vector_store %arg15[%c1_48, %c6_49, %c0_50, %c0_51], %71 {strides = array<i32>} : memref<10x10x8x32xf32, #tpu.memory_space<vmem>>, vector<1x1x8x32xf32>,
    %72 = vector.extract_strided_slice %19 {offsets = [1, 3, 0, 0], sizes = [1, 1, 8, 32], strides = [1, 1, 1, 1]} : vector<7x7x8x32xf32> to vector<1x1x8x32xf32>
    %73 = vector.shape_cast %72 : vector<1x1x8x32xf32> to vector<8x32xf32>
    %c1_52 = arith.constant 1 : index
    %c2_53 = arith.constant 2 : index
    %c0_54 = arith.constant 0 : index
    %c0_55 = arith.constant 0 : index
    %74 = vector.load %arg15[%c1_52, %c2_53, %c0_54, %c0_55] : memref<10x10x8x32xf32, #tpu.memory_space<vmem>>, vector<1x1x8x32xf32>
    %75 = vector.shape_cast %74 : vector<1x1x8x32xf32> to vector<8x32xf32>
    %76 = vector.shape_cast %73 : vector<8x32xf32> to vector<1x1x8x32xf32>
    tpu.vector_store %arg15[%c1_52, %c2_53, %c0_54, %c0_55], %76 {strides = array<i32>} : memref<10x10x8x32xf32, #tpu.memory_space<vmem>>, vector<1x1x8x32xf32>,
    %77 = vector.extract_strided_slice %19 {offsets = [1, 4, 0, 0], sizes = [1, 1, 8, 32], strides = [1, 1, 1, 1]} : vector<7x7x8x32xf32> to vector<1x1x8x32xf32>
    %78 = vector.shape_cast %77 : vector<1x1x8x32xf32> to vector<8x32xf32>
    %c1_56 = arith.constant 1 : index
    %c7_57 = arith.constant 7 : index
    %c0_58 = arith.constant 0 : index
    %c0_59 = arith.constant 0 : index
    %79 = vector.load %arg15[%c1_56, %c7_57, %c0_58, %c0_59] : memref<10x10x8x32xf32, #tpu.memory_space<vmem>>, vector<1x1x8x32xf32>
    %80 = vector.shape_cast %79 : vector<1x1x8x32xf32> to vector<8x32xf32>
    %81 = vector.shape_cast %78 : vector<8x32xf32> to vector<1x1x8x32xf32>
    tpu.vector_store %arg15[%c1_56, %c7_57, %c0_58, %c0_59], %81 {strides = array<i32>} : memref<10x10x8x32xf32, #tpu.memory_space<vmem>>, vector<1x1x8x32xf32>,
    %82 = vector.extract_strided_slice %19 {offsets = [1, 5, 0, 0], sizes = [1, 1, 8, 32], strides = [1, 1, 1, 1]} : vector<7x7x8x32xf32> to vector<1x1x8x32xf32>
    %83 = vector.shape_cast %82 : vector<1x1x8x32xf32> to vector<8x32xf32>
    %c1_60 = arith.constant 1 : index
    %c3_61 = arith.constant 3 : index
    %c0_62 = arith.constant 0 : index
    %c0_63 = arith.constant 0 : index
    %84 = vector.load %arg15[%c1_60, %c3_61, %c0_62, %c0_63] : memref<10x10x8x32xf32, #tpu.memory_space<vmem>>, vector<1x1x8x32xf32>
    %85 = vector.shape_cast %84 : vector<1x1x8x32xf32> to vector<8x32xf32>
    %86 = vector.shape_cast %83 : vector<8x32xf32> to vector<1x1x8x32xf32>
    tpu.vector_store %arg15[%c1_60, %c3_61, %c0_62, %c0_63], %86 {strides = array<i32>} : memref<10x10x8x32xf32, #tpu.memory_space<vmem>>, vector<1x1x8x32xf32>,
    %87 = vector.extract_strided_slice %19 {offsets = [1, 6, 0, 0], sizes = [1, 1, 8, 32], strides = [1, 1, 1, 1]} : vector<7x7x8x32xf32> to vector<1x1x8x32xf32>
    %88 = vector.shape_cast %87 : vector<1x1x8x32xf32> to vector<8x32xf32>
    %c1_64 = arith.constant 1 : index
    %c8_65 = arith.constant 8 : index
    %c0_66 = arith.constant 0 : index
    %c0_67 = arith.constant 0 : index
    %89 = vector.load %arg15[%c1_64, %c8_65, %c0_66, %c0_67] : memref<10x10x8x32xf32, #tpu.memory_space<vmem>>, vector<1x1x8x32xf32>
    %90 = vector.shape_cast %89 : vector<1x1x8x32xf32> to vector<8x32xf32>
    %91 = vector.shape_cast %88 : vector<8x32xf32> to vector<1x1x8x32xf32>
    tpu.vector_store %arg15[%c1_64, %c8_65, %c0_66, %c0_67], %91 {strides = array<i32>} : memref<10x10x8x32xf32, #tpu.memory_space<vmem>>, vector<1x1x8x32xf32>,
    %92 = vector.extract_strided_slice %19 {offsets = [2, 0, 0, 0], sizes = [1, 1, 8, 32], strides = [1, 1, 1, 1]} : vector<7x7x8x32xf32> to vector<1x1x8x32xf32>
    %93 = vector.shape_cast %92 : vector<1x1x8x32xf32> to vector<8x32xf32>
    %c6_68 = arith.constant 6 : index
    %c5_69 = arith.constant 5 : index
    %c0_70 = arith.constant 0 : index
    %c0_71 = arith.constant 0 : index
    %94 = vector.load %arg15[%c6_68, %c5_69, %c0_70, %c0_71] : memref<10x10x8x32xf32, #tpu.memory_space<vmem>>, vector<1x1x8x32xf32>
    %95 = vector.shape_cast %94 : vector<1x1x8x32xf32> to vector<8x32xf32>
    %96 = vector.shape_cast %93 : vector<8x32xf32> to vector<1x1x8x32xf32>
    tpu.vector_store %arg15[%c6_68, %c5_69, %c0_70, %c0_71], %96 {strides = array<i32>} : memref<10x10x8x32xf32, #tpu.memory_space<vmem>>, vector<1x1x8x32xf32>,
    %97 = vector.extract_strided_slice %19 {offsets = [2, 1, 0, 0], sizes = [1, 1, 8, 32], strides = [1, 1, 1, 1]} : vector<7x7x8x32xf32> to vector<1x1x8x32xf32>
    %98 = vector.shape_cast %97 : vector<1x1x8x32xf32> to vector<8x32xf32>
    %c6_72 = arith.constant 6 : index
    %c1_73 = arith.constant 1 : index
    %c0_74 = arith.constant 0 : index
    %c0_75 = arith.constant 0 : index
    %99 = vector.load %arg15[%c6_72, %c1_73, %c0_74, %c0_75] : memref<10x10x8x32xf32, #tpu.memory_space<vmem>>, vector<1x1x8x32xf32>
    %100 = vector.shape_cast %99 : vector<1x1x8x32xf32> to vector<8x32xf32>
    %101 = vector.shape_cast %98 : vector<8x32xf32> to vector<1x1x8x32xf32>
    tpu.vector_store %arg15[%c6_72, %c1_73, %c0_74, %c0_75], %101 {strides = array<i32>} : memref<10x10x8x32xf32, #tpu.memory_space<vmem>>, vector<1x1x8x32xf32>,
    %102 = vector.extract_strided_slice %19 {offsets = [2, 2, 0, 0], sizes = [1, 1, 8, 32], strides = [1, 1, 1, 1]} : vector<7x7x8x32xf32> to vector<1x1x8x32xf32>
    %103 = vector.shape_cast %102 : vector<1x1x8x32xf32> to vector<8x32xf32>
    %c6_76 = arith.constant 6 : index
    %c6_77 = arith.constant 6 : index
    %c0_78 = arith.constant 0 : index
    %c0_79 = arith.constant 0 : index
    %104 = vector.load %arg15[%c6_76, %c6_77, %c0_78, %c0_79] : memref<10x10x8x32xf32, #tpu.memory_space<vmem>>, vector<1x1x8x32xf32>
    %105 = vector.shape_cast %104 : vector<1x1x8x32xf32> to vector<8x32xf32>
    %106 = vector.shape_cast %103 : vector<8x32xf32> to vector<1x1x8x32xf32>
    tpu.vector_store %arg15[%c6_76, %c6_77, %c0_78, %c0_79], %106 {strides = array<i32>} : memref<10x10x8x32xf32, #tpu.memory_space<vmem>>, vector<1x1x8x32xf32>,
    %107 = vector.extract_strided_slice %19 {offsets = [2, 3, 0, 0], sizes = [1, 1, 8, 32], strides = [1, 1, 1, 1]} : vector<7x7x8x32xf32> to vector<1x1x8x32xf32>
    %108 = vector.shape_cast %107 : vector<1x1x8x32xf32> to vector<8x32xf32>
    %c6_80 = arith.constant 6 : index
    %c2_81 = arith.constant 2 : index
    %c0_82 = arith.constant 0 : index
    %c0_83 = arith.constant 0 : index
    %109 = vector.load %arg15[%c6_80, %c2_81, %c0_82, %c0_83] : memref<10x10x8x32xf32, #tpu.memory_space<vmem>>, vector<1x1x8x32xf32>
    %110 = vector.shape_cast %109 : vector<1x1x8x32xf32> to vector<8x32xf32>
    %111 = vector.shape_cast %108 : vector<8x32xf32> to vector<1x1x8x32xf32>
    tpu.vector_store %arg15[%c6_80, %c2_81, %c0_82, %c0_83], %111 {strides = array<i32>} : memref<10x10x8x32xf32, #tpu.memory_space<vmem>>, vector<1x1x8x32xf32>,
    %112 = vector.extract_strided_slice %19 {offsets = [2, 4, 0, 0], sizes = [1, 1, 8, 32], strides = [1, 1, 1, 1]} : vector<7x7x8x32xf32> to vector<1x1x8x32xf32>
    %113 = vector.shape_cast %112 : vector<1x1x8x32xf32> to vector<8x32xf32>
    %c6_84 = arith.constant 6 : index
    %c7_85 = arith.constant 7 : index
    %c0_86 = arith.constant 0 : index
    %c0_87 = arith.constant 0 : index
    %114 = vector.load %arg15[%c6_84, %c7_85, %c0_86, %c0_87] : memref<10x10x8x32xf32, #tpu.memory_space<vmem>>, vector<1x1x8x32xf32>
    %115 = vector.shape_cast %114 : vector<1x1x8x32xf32> to vector<8x32xf32>
    %116 = vector.shape_cast %113 : vector<8x32xf32> to vector<1x1x8x32xf32>
    tpu.vector_store %arg15[%c6_84, %c7_85, %c0_86, %c0_87], %116 {strides = array<i32>} : memref<10x10x8x32xf32, #tpu.memory_space<vmem>>, vector<1x1x8x32xf32>,
    %117 = vector.extract_strided_slice %19 {offsets = [2, 5, 0, 0], sizes = [1, 1, 8, 32], strides = [1, 1, 1, 1]} : vector<7x7x8x32xf32> to vector<1x1x8x32xf32>
    %118 = vector.shape_cast %117 : vector<1x1x8x32xf32> to vector<8x32xf32>
    %c6_88 = arith.constant 6 : index
    %c3_89 = arith.constant 3 : index
    %c0_90 = arith.constant 0 : index
    %c0_91 = arith.constant 0 : index
    %119 = vector.load %arg15[%c6_88, %c3_89, %c0_90, %c0_91] : memref<10x10x8x32xf32, #tpu.memory_space<vmem>>, vector<1x1x8x32xf32>
    %120 = vector.shape_cast %119 : vector<1x1x8x32xf32> to vector<8x32xf32>
    %121 = vector.shape_cast %118 : vector<8x32xf32> to vector<1x1x8x32xf32>
    tpu.vector_store %arg15[%c6_88, %c3_89, %c0_90, %c0_91], %121 {strides = array<i32>} : memref<10x10x8x32xf32, #tpu.memory_space<vmem>>, vector<1x1x8x32xf32>,
    %122 = vector.extract_strided_slice %19 {offsets = [2, 6, 0, 0], sizes = [1, 1, 8, 32], strides = [1, 1, 1, 1]} : vector<7x7x8x32xf32> to vector<1x1x8x32xf32>
    %123 = vector.shape_cast %122 : vector<1x1x8x32xf32> to vector<8x32xf32>
    %c6_92 = arith.constant 6 : index
    %c8_93 = arith.constant 8 : index
    %c0_94 = arith.constant 0 : index
    %c0_95 = arith.constant 0 : index
    %124 = vector.load %arg15[%c6_92, %c8_93, %c0_94, %c0_95] : memref<10x10x8x32xf32, #tpu.memory_space<vmem>>, vector<1x1x8x32xf32>
    %125 = vector.shape_cast %124 : vector<1x1x8x32xf32> to vector<8x32xf32>
    %126 = vector.shape_cast %123 : vector<8x32xf32> to vector<1x1x8x32xf32>
    tpu.vector_store %arg15[%c6_92, %c8_93, %c0_94, %c0_95], %126 {strides = array<i32>} : memref<10x10x8x32xf32, #tpu.memory_space<vmem>>, vector<1x1x8x32xf32>,
    %127 = vector.extract_strided_slice %19 {offsets = [3, 0, 0, 0], sizes = [1, 1, 8, 32], strides = [1, 1, 1, 1]} : vector<7x7x8x32xf32> to vector<1x1x8x32xf32>
    %128 = vector.shape_cast %127 : vector<1x1x8x32xf32> to vector<8x32xf32>
    %c2_96 = arith.constant 2 : index
    %c5_97 = arith.constant 5 : index
    %c0_98 = arith.constant 0 : index
    %c0_99 = arith.constant 0 : index
    %129 = vector.load %arg15[%c2_96, %c5_97, %c0_98, %c0_99] : memref<10x10x8x32xf32, #tpu.memory_space<vmem>>, vector<1x1x8x32xf32>
    %130 = vector.shape_cast %129 : vector<1x1x8x32xf32> to vector<8x32xf32>
    %131 = vector.shape_cast %128 : vector<8x32xf32> to vector<1x1x8x32xf32>
    tpu.vector_store %arg15[%c2_96, %c5_97, %c0_98, %c0_99], %131 {strides = array<i32>} : memref<10x10x8x32xf32, #tpu.memory_space<vmem>>, vector<1x1x8x32xf32>,
    %132 = vector.extract_strided_slice %19 {offsets = [3, 1, 0, 0], sizes = [1, 1, 8, 32], strides = [1, 1, 1, 1]} : vector<7x7x8x32xf32> to vector<1x1x8x32xf32>
    %133 = vector.shape_cast %132 : vector<1x1x8x32xf32> to vector<8x32xf32>
    %c2_100 = arith.constant 2 : index
    %c1_101 = arith.constant 1 : index
    %c0_102 = arith.constant 0 : index
    %c0_103 = arith.constant 0 : index
    %134 = vector.load %arg15[%c2_100, %c1_101, %c0_102, %c0_103] : memref<10x10x8x32xf32, #tpu.memory_space<vmem>>, vector<1x1x8x32xf32>
    %135 = vector.shape_cast %134 : vector<1x1x8x32xf32> to vector<8x32xf32>
    %136 = vector.shape_cast %133 : vector<8x32xf32> to vector<1x1x8x32xf32>
    tpu.vector_store %arg15[%c2_100, %c1_101, %c0_102, %c0_103], %136 {strides = array<i32>} : memref<10x10x8x32xf32, #tpu.memory_space<vmem>>, vector<1x1x8x32xf32>,
    %137 = vector.extract_strided_slice %19 {offsets = [3, 2, 0, 0], sizes = [1, 1, 8, 32], strides = [1, 1, 1, 1]} : vector<7x7x8x32xf32> to vector<1x1x8x32xf32>
    %138 = vector.shape_cast %137 : vector<1x1x8x32xf32> to vector<8x32xf32>
    %c2_104 = arith.constant 2 : index
    %c6_105 = arith.constant 6 : index
    %c0_106 = arith.constant 0 : index
    %c0_107 = arith.constant 0 : index
    %139 = vector.load %arg15[%c2_104, %c6_105, %c0_106, %c0_107] : memref<10x10x8x32xf32, #tpu.memory_space<vmem>>, vector<1x1x8x32xf32>
    %140 = vector.shape_cast %139 : vector<1x1x8x32xf32> to vector<8x32xf32>
    %141 = vector.shape_cast %138 : vector<8x32xf32> to vector<1x1x8x32xf32>
    tpu.vector_store %arg15[%c2_104, %c6_105, %c0_106, %c0_107], %141 {strides = array<i32>} : memref<10x10x8x32xf32, #tpu.memory_space<vmem>>, vector<1x1x8x32xf32>,
    %142 = vector.extract_strided_slice %19 {offsets = [3, 3, 0, 0], sizes = [1, 1, 8, 32], strides = [1, 1, 1, 1]} : vector<7x7x8x32xf32> to vector<1x1x8x32xf32>
    %143 = vector.shape_cast %142 : vector<1x1x8x32xf32> to vector<8x32xf32>
    %c2_108 = arith.constant 2 : index
    %c2_109 = arith.constant 2 : index
    %c0_110 = arith.constant 0 : index
    %c0_111 = arith.constant 0 : index
    %144 = vector.load %arg15[%c2_108, %c2_109, %c0_110, %c0_111] : memref<10x10x8x32xf32, #tpu.memory_space<vmem>>, vector<1x1x8x32xf32>
    %145 = vector.shape_cast %144 : vector<1x1x8x32xf32> to vector<8x32xf32>
    %146 = vector.shape_cast %143 : vector<8x32xf32> to vector<1x1x8x32xf32>
    tpu.vector_store %arg15[%c2_108, %c2_109, %c0_110, %c0_111], %146 {strides = array<i32>} : memref<10x10x8x32xf32, #tpu.memory_space<vmem>>, vector<1x1x8x32xf32>,
    %147 = vector.extract_strided_slice %19 {offsets = [3, 4, 0, 0], sizes = [1, 1, 8, 32], strides = [1, 1, 1, 1]} : vector<7x7x8x32xf32> to vector<1x1x8x32xf32>
    %148 = vector.shape_cast %147 : vector<1x1x8x32xf32> to vector<8x32xf32>
    %c2_112 = arith.constant 2 : index
    %c7_113 = arith.constant 7 : index
    %c0_114 = arith.constant 0 : index
    %c0_115 = arith.constant 0 : index
    %149 = vector.load %arg15[%c2_112, %c7_113, %c0_114, %c0_115] : memref<10x10x8x32xf32, #tpu.memory_space<vmem>>, vector<1x1x8x32xf32>
    %150 = vector.shape_cast %149 : vector<1x1x8x32xf32> to vector<8x32xf32>
    %151 = vector.shape_cast %148 : vector<8x32xf32> to vector<1x1x8x32xf32>
    tpu.vector_store %arg15[%c2_112, %c7_113, %c0_114, %c0_115], %151 {strides = array<i32>} : memref<10x10x8x32xf32, #tpu.memory_space<vmem>>, vector<1x1x8x32xf32>,
    %152 = vector.extract_strided_slice %19 {offsets = [3, 5, 0, 0], sizes = [1, 1, 8, 32], strides = [1, 1, 1, 1]} : vector<7x7x8x32xf32> to vector<1x1x8x32xf32>
    %153 = vector.shape_cast %152 : vector<1x1x8x32xf32> to vector<8x32xf32>
    %c2_116 = arith.constant 2 : index
    %c3_117 = arith.constant 3 : index
    %c0_118 = arith.constant 0 : index
    %c0_119 = arith.constant 0 : index
    %154 = vector.load %arg15[%c2_116, %c3_117, %c0_118, %c0_119] : memref<10x10x8x32xf32, #tpu.memory_space<vmem>>, vector<1x1x8x32xf32>
    %155 = vector.shape_cast %154 : vector<1x1x8x32xf32> to vector<8x32xf32>
    %156 = vector.shape_cast %153 : vector<8x32xf32> to vector<1x1x8x32xf32>
    tpu.vector_store %arg15[%c2_116, %c3_117, %c0_118, %c0_119], %156 {strides = array<i32>} : memref<10x10x8x32xf32, #tpu.memory_space<vmem>>, vector<1x1x8x32xf32>,
    %157 = vector.extract_strided_slice %19 {offsets = [3, 6, 0, 0], sizes = [1, 1, 8, 32], strides = [1, 1, 1, 1]} : vector<7x7x8x32xf32> to vector<1x1x8x32xf32>
    %158 = vector.shape_cast %157 : vector<1x1x8x32xf32> to vector<8x32xf32>
    %c2_120 = arith.constant 2 : index
    %c8_121 = arith.constant 8 : index
    %c0_122 = arith.constant 0 : index
    %c0_123 = arith.constant 0 : index
    %159 = vector.load %arg15[%c2_120, %c8_121, %c0_122, %c0_123] : memref<10x10x8x32xf32, #tpu.memory_space<vmem>>, vector<1x1x8x32xf32>
    %160 = vector.shape_cast %159 : vector<1x1x8x32xf32> to vector<8x32xf32>
    %161 = vector.shape_cast %158 : vector<8x32xf32> to vector<1x1x8x32xf32>
    tpu.vector_store %arg15[%c2_120, %c8_121, %c0_122, %c0_123], %161 {strides = array<i32>} : memref<10x10x8x32xf32, #tpu.memory_space<vmem>>, vector<1x1x8x32xf32>,
    %162 = vector.extract_strided_slice %19 {offsets = [4, 0, 0, 0], sizes = [1, 1, 8, 32], strides = [1, 1, 1, 1]} : vector<7x7x8x32xf32> to vector<1x1x8x32xf32>
    %163 = vector.shape_cast %162 : vector<1x1x8x32xf32> to vector<8x32xf32>
    %c7_124 = arith.constant 7 : index
    %c5_125 = arith.constant 5 : index
    %c0_126 = arith.constant 0 : index
    %c0_127 = arith.constant 0 : index
    %164 = vector.load %arg15[%c7_124, %c5_125, %c0_126, %c0_127] : memref<10x10x8x32xf32, #tpu.memory_space<vmem>>, vector<1x1x8x32xf32>
    %165 = vector.shape_cast %164 : vector<1x1x8x32xf32> to vector<8x32xf32>
    %166 = vector.shape_cast %163 : vector<8x32xf32> to vector<1x1x8x32xf32>
    tpu.vector_store %arg15[%c7_124, %c5_125, %c0_126, %c0_127], %166 {strides = array<i32>} : memref<10x10x8x32xf32, #tpu.memory_space<vmem>>, vector<1x1x8x32xf32>,
    %167 = vector.extract_strided_slice %19 {offsets = [4, 1, 0, 0], sizes = [1, 1, 8, 32], strides = [1, 1, 1, 1]} : vector<7x7x8x32xf32> to vector<1x1x8x32xf32>
    %168 = vector.shape_cast %167 : vector<1x1x8x32xf32> to vector<8x32xf32>
    %c7_128 = arith.constant 7 : index
    %c1_129 = arith.constant 1 : index
    %c0_130 = arith.constant 0 : index
    %c0_131 = arith.constant 0 : index
    %169 = vector.load %arg15[%c7_128, %c1_129, %c0_130, %c0_131] : memref<10x10x8x32xf32, #tpu.memory_space<vmem>>, vector<1x1x8x32xf32>
    %170 = vector.shape_cast %169 : vector<1x1x8x32xf32> to vector<8x32xf32>
    %171 = vector.shape_cast %168 : vector<8x32xf32> to vector<1x1x8x32xf32>
    tpu.vector_store %arg15[%c7_128, %c1_129, %c0_130, %c0_131], %171 {strides = array<i32>} : memref<10x10x8x32xf32, #tpu.memory_space<vmem>>, vector<1x1x8x32xf32>,
    %172 = vector.extract_strided_slice %19 {offsets = [4, 2, 0, 0], sizes = [1, 1, 8, 32], strides = [1, 1, 1, 1]} : vector<7x7x8x32xf32> to vector<1x1x8x32xf32>
    %173 = vector.shape_cast %172 : vector<1x1x8x32xf32> to vector<8x32xf32>
    %c7_132 = arith.constant 7 : index
    %c6_133 = arith.constant 6 : index
    %c0_134 = arith.constant 0 : index
    %c0_135 = arith.constant 0 : index
    %174 = vector.load %arg15[%c7_132, %c6_133, %c0_134, %c0_135] : memref<10x10x8x32xf32, #tpu.memory_space<vmem>>, vector<1x1x8x32xf32>
    %175 = vector.shape_cast %174 : vector<1x1x8x32xf32> to vector<8x32xf32>
    %176 = vector.shape_cast %173 : vector<8x32xf32> to vector<1x1x8x32xf32>
    tpu.vector_store %arg15[%c7_132, %c6_133, %c0_134, %c0_135], %176 {strides = array<i32>} : memref<10x10x8x32xf32, #tpu.memory_space<vmem>>, vector<1x1x8x32xf32>,
    %177 = vector.extract_strided_slice %19 {offsets = [4, 3, 0, 0], sizes = [1, 1, 8, 32], strides = [1, 1, 1, 1]} : vector<7x7x8x32xf32> to vector<1x1x8x32xf32>
    %178 = vector.shape_cast %177 : vector<1x1x8x32xf32> to vector<8x32xf32>
    %c7_136 = arith.constant 7 : index
    %c2_137 = arith.constant 2 : index
    %c0_138 = arith.constant 0 : index
    %c0_139 = arith.constant 0 : index
    %179 = vector.load %arg15[%c7_136, %c2_137, %c0_138, %c0_139] : memref<10x10x8x32xf32, #tpu.memory_space<vmem>>, vector<1x1x8x32xf32>
    %180 = vector.shape_cast %179 : vector<1x1x8x32xf32> to vector<8x32xf32>
    %181 = vector.shape_cast %178 : vector<8x32xf32> to vector<1x1x8x32xf32>
    tpu.vector_store %arg15[%c7_136, %c2_137, %c0_138, %c0_139], %181 {strides = array<i32>} : memref<10x10x8x32xf32, #tpu.memory_space<vmem>>, vector<1x1x8x32xf32>,
    %182 = vector.extract_strided_slice %19 {offsets = [4, 4, 0, 0], sizes = [1, 1, 8, 32], strides = [1, 1, 1, 1]} : vector<7x7x8x32xf32> to vector<1x1x8x32xf32>
    %183 = vector.shape_cast %182 : vector<1x1x8x32xf32> to vector<8x32xf32>
    %c7_140 = arith.constant 7 : index
    %c7_141 = arith.constant 7 : index
    %c0_142 = arith.constant 0 : index
    %c0_143 = arith.constant 0 : index
    %184 = vector.load %arg15[%c7_140, %c7_141, %c0_142, %c0_143] : memref<10x10x8x32xf32, #tpu.memory_space<vmem>>, vector<1x1x8x32xf32>
    %185 = vector.shape_cast %184 : vector<1x1x8x32xf32> to vector<8x32xf32>
    %186 = vector.shape_cast %183 : vector<8x32xf32> to vector<1x1x8x32xf32>
    tpu.vector_store %arg15[%c7_140, %c7_141, %c0_142, %c0_143], %186 {strides = array<i32>} : memref<10x10x8x32xf32, #tpu.memory_space<vmem>>, vector<1x1x8x32xf32>,
    %187 = vector.extract_strided_slice %19 {offsets = [4, 5, 0, 0], sizes = [1, 1, 8, 32], strides = [1, 1, 1, 1]} : vector<7x7x8x32xf32> to vector<1x1x8x32xf32>
    %188 = vector.shape_cast %187 : vector<1x1x8x32xf32> to vector<8x32xf32>
    %c7_144 = arith.constant 7 : index
    %c3_145 = arith.constant 3 : index
    %c0_146 = arith.constant 0 : index
    %c0_147 = arith.constant 0 : index
    %189 = vector.load %arg15[%c7_144, %c3_145, %c0_146, %c0_147] : memref<10x10x8x32xf32, #tpu.memory_space<vmem>>, vector<1x1x8x32xf32>
    %190 = vector.shape_cast %189 : vector<1x1x8x32xf32> to vector<8x32xf32>
    %191 = vector.shape_cast %188 : vector<8x32xf32> to vector<1x1x8x32xf32>
    tpu.vector_store %arg15[%c7_144, %c3_145, %c0_146, %c0_147], %191 {strides = array<i32>} : memref<10x10x8x32xf32, #tpu.memory_space<vmem>>, vector<1x1x8x32xf32>,
    %192 = vector.extract_strided_slice %19 {offsets = [4, 6, 0, 0], sizes = [1, 1, 8, 32], strides = [1, 1, 1, 1]} : vector<7x7x8x32xf32> to vector<1x1x8x32xf32>
    %193 = vector.shape_cast %192 : vector<1x1x8x32xf32> to vector<8x32xf32>
    %c7_148 = arith.constant 7 : index
    %c8_149 = arith.constant 8 : index
    %c0_150 = arith.constant 0 : index
    %c0_151 = arith.constant 0 : index
    %194 = vector.load %arg15[%c7_148, %c8_149, %c0_150, %c0_151] : memref<10x10x8x32xf32, #tpu.memory_space<vmem>>, vector<1x1x8x32xf32>
    %195 = vector.shape_cast %194 : vector<1x1x8x32xf32> to vector<8x32xf32>
    %196 = vector.shape_cast %193 : vector<8x32xf32> to vector<1x1x8x32xf32>
    tpu.vector_store %arg15[%c7_148, %c8_149, %c0_150, %c0_151], %196 {strides = array<i32>} : memref<10x10x8x32xf32, #tpu.memory_space<vmem>>, vector<1x1x8x32xf32>,
    %197 = vector.extract_strided_slice %19 {offsets = [5, 0, 0, 0], sizes = [1, 1, 8, 32], strides = [1, 1, 1, 1]} : vector<7x7x8x32xf32> to vector<1x1x8x32xf32>
    %198 = vector.shape_cast %197 : vector<1x1x8x32xf32> to vector<8x32xf32>
    %c3_152 = arith.constant 3 : index
    %c5_153 = arith.constant 5 : index
    %c0_154 = arith.constant 0 : index
    %c0_155 = arith.constant 0 : index
    %199 = vector.load %arg15[%c3_152, %c5_153, %c0_154, %c0_155] : memref<10x10x8x32xf32, #tpu.memory_space<vmem>>, vector<1x1x8x32xf32>
    %200 = vector.shape_cast %199 : vector<1x1x8x32xf32> to vector<8x32xf32>
    %201 = vector.shape_cast %198 : vector<8x32xf32> to vector<1x1x8x32xf32>
    tpu.vector_store %arg15[%c3_152, %c5_153, %c0_154, %c0_155], %201 {strides = array<i32>} : memref<10x10x8x32xf32, #tpu.memory_space<vmem>>, vector<1x1x8x32xf32>,
    %202 = vector.extract_strided_slice %19 {offsets = [5, 1, 0, 0], sizes = [1, 1, 8, 32], strides = [1, 1, 1, 1]} : vector<7x7x8x32xf32> to vector<1x1x8x32xf32>
    %203 = vector.shape_cast %202 : vector<1x1x8x32xf32> to vector<8x32xf32>
    %c3_156 = arith.constant 3 : index
    %c1_157 = arith.constant 1 : index
    %c0_158 = arith.constant 0 : index
    %c0_159 = arith.constant 0 : index
    %204 = vector.load %arg15[%c3_156, %c1_157, %c0_158, %c0_159] : memref<10x10x8x32xf32, #tpu.memory_space<vmem>>, vector<1x1x8x32xf32>
    %205 = vector.shape_cast %204 : vector<1x1x8x32xf32> to vector<8x32xf32>
    %206 = vector.shape_cast %203 : vector<8x32xf32> to vector<1x1x8x32xf32>
    tpu.vector_store %arg15[%c3_156, %c1_157, %c0_158, %c0_159], %206 {strides = array<i32>} : memref<10x10x8x32xf32, #tpu.memory_space<vmem>>, vector<1x1x8x32xf32>,
    %207 = vector.extract_strided_slice %19 {offsets = [5, 2, 0, 0], sizes = [1, 1, 8, 32], strides = [1, 1, 1, 1]} : vector<7x7x8x32xf32> to vector<1x1x8x32xf32>
    %208 = vector.shape_cast %207 : vector<1x1x8x32xf32> to vector<8x32xf32>
    %c3_160 = arith.constant 3 : index
    %c6_161 = arith.constant 6 : index
    %c0_162 = arith.constant 0 : index
    %c0_163 = arith.constant 0 : index
    %209 = vector.load %arg15[%c3_160, %c6_161, %c0_162, %c0_163] : memref<10x10x8x32xf32, #tpu.memory_space<vmem>>, vector<1x1x8x32xf32>
    %210 = vector.shape_cast %209 : vector<1x1x8x32xf32> to vector<8x32xf32>
    %211 = vector.shape_cast %208 : vector<8x32xf32> to vector<1x1x8x32xf32>
    tpu.vector_store %arg15[%c3_160, %c6_161, %c0_162, %c0_163], %211 {strides = array<i32>} : memref<10x10x8x32xf32, #tpu.memory_space<vmem>>, vector<1x1x8x32xf32>,
    %212 = vector.extract_strided_slice %19 {offsets = [5, 3, 0, 0], sizes = [1, 1, 8, 32], strides = [1, 1, 1, 1]} : vector<7x7x8x32xf32> to vector<1x1x8x32xf32>
    %213 = vector.shape_cast %212 : vector<1x1x8x32xf32> to vector<8x32xf32>
    %c3_164 = arith.constant 3 : index
    %c2_165 = arith.constant 2 : index
    %c0_166 = arith.constant 0 : index
    %c0_167 = arith.constant 0 : index
    %214 = vector.load %arg15[%c3_164, %c2_165, %c0_166, %c0_167] : memref<10x10x8x32xf32, #tpu.memory_space<vmem>>, vector<1x1x8x32xf32>
    %215 = vector.shape_cast %214 : vector<1x1x8x32xf32> to vector<8x32xf32>
    %216 = vector.shape_cast %213 : vector<8x32xf32> to vector<1x1x8x32xf32>
    tpu.vector_store %arg15[%c3_164, %c2_165, %c0_166, %c0_167], %216 {strides = array<i32>} : memref<10x10x8x32xf32, #tpu.memory_space<vmem>>, vector<1x1x8x32xf32>,
    %217 = vector.extract_strided_slice %19 {offsets = [5, 4, 0, 0], sizes = [1, 1, 8, 32], strides = [1, 1, 1, 1]} : vector<7x7x8x32xf32> to vector<1x1x8x32xf32>
    %218 = vector.shape_cast %217 : vector<1x1x8x32xf32> to vector<8x32xf32>
    %c3_168 = arith.constant 3 : index
    %c7_169 = arith.constant 7 : index
    %c0_170 = arith.constant 0 : index
    %c0_171 = arith.constant 0 : index
    %219 = vector.load %arg15[%c3_168, %c7_169, %c0_170, %c0_171] : memref<10x10x8x32xf32, #tpu.memory_space<vmem>>, vector<1x1x8x32xf32>
    %220 = vector.shape_cast %219 : vector<1x1x8x32xf32> to vector<8x32xf32>
    %221 = vector.shape_cast %218 : vector<8x32xf32> to vector<1x1x8x32xf32>
    tpu.vector_store %arg15[%c3_168, %c7_169, %c0_170, %c0_171], %221 {strides = array<i32>} : memref<10x10x8x32xf32, #tpu.memory_space<vmem>>, vector<1x1x8x32xf32>,
    %222 = vector.extract_strided_slice %19 {offsets = [5, 5, 0, 0], sizes = [1, 1, 8, 32], strides = [1, 1, 1, 1]} : vector<7x7x8x32xf32> to vector<1x1x8x32xf32>
    %223 = vector.shape_cast %222 : vector<1x1x8x32xf32> to vector<8x32xf32>
    %c3_172 = arith.constant 3 : index
    %c3_173 = arith.constant 3 : index
    %c0_174 = arith.constant 0 : index
    %c0_175 = arith.constant 0 : index
    %224 = vector.load %arg15[%c3_172, %c3_173, %c0_174, %c0_175] : memref<10x10x8x32xf32, #tpu.memory_space<vmem>>, vector<1x1x8x32xf32>
    %225 = vector.shape_cast %224 : vector<1x1x8x32xf32> to vector<8x32xf32>
    %226 = vector.shape_cast %223 : vector<8x32xf32> to vector<1x1x8x32xf32>
    tpu.vector_store %arg15[%c3_172, %c3_173, %c0_174, %c0_175], %226 {strides = array<i32>} : memref<10x10x8x32xf32, #tpu.memory_space<vmem>>, vector<1x1x8x32xf32>,
    %227 = vector.extract_strided_slice %19 {offsets = [5, 6, 0, 0], sizes = [1, 1, 8, 32], strides = [1, 1, 1, 1]} : vector<7x7x8x32xf32> to vector<1x1x8x32xf32>
    %228 = vector.shape_cast %227 : vector<1x1x8x32xf32> to vector<8x32xf32>
    %c3_176 = arith.constant 3 : index
    %c8_177 = arith.constant 8 : index
    %c0_178 = arith.constant 0 : index
    %c0_179 = arith.constant 0 : index
    %229 = vector.load %arg15[%c3_176, %c8_177, %c0_178, %c0_179] : memref<10x10x8x32xf32, #tpu.memory_space<vmem>>, vector<1x1x8x32xf32>
    %230 = vector.shape_cast %229 : vector<1x1x8x32xf32> to vector<8x32xf32>
    %231 = vector.shape_cast %228 : vector<8x32xf32> to vector<1x1x8x32xf32>
    tpu.vector_store %arg15[%c3_176, %c8_177, %c0_178, %c0_179], %231 {strides = array<i32>} : memref<10x10x8x32xf32, #tpu.memory_space<vmem>>, vector<1x1x8x32xf32>,
    %232 = vector.extract_strided_slice %19 {offsets = [6, 0, 0, 0], sizes = [1, 1, 8, 32], strides = [1, 1, 1, 1]} : vector<7x7x8x32xf32> to vector<1x1x8x32xf32>
    %233 = vector.shape_cast %232 : vector<1x1x8x32xf32> to vector<8x32xf32>
    %c8_180 = arith.constant 8 : index
    %c5_181 = arith.constant 5 : index
    %c0_182 = arith.constant 0 : index
    %c0_183 = arith.constant 0 : index
    %234 = vector.load %arg15[%c8_180, %c5_181, %c0_182, %c0_183] : memref<10x10x8x32xf32, #tpu.memory_space<vmem>>, vector<1x1x8x32xf32>
    %235 = vector.shape_cast %234 : vector<1x1x8x32xf32> to vector<8x32xf32>
    %236 = vector.shape_cast %233 : vector<8x32xf32> to vector<1x1x8x32xf32>
    tpu.vector_store %arg15[%c8_180, %c5_181, %c0_182, %c0_183], %236 {strides = array<i32>} : memref<10x10x8x32xf32, #tpu.memory_space<vmem>>, vector<1x1x8x32xf32>,
    %237 = vector.extract_strided_slice %19 {offsets = [6, 1, 0, 0], sizes = [1, 1, 8, 32], strides = [1, 1, 1, 1]} : vector<7x7x8x32xf32> to vector<1x1x8x32xf32>
    %238 = vector.shape_cast %237 : vector<1x1x8x32xf32> to vector<8x32xf32>
    %c8_184 = arith.constant 8 : index
    %c1_185 = arith.constant 1 : index
    %c0_186 = arith.constant 0 : index
    %c0_187 = arith.constant 0 : index
    %239 = vector.load %arg15[%c8_184, %c1_185, %c0_186, %c0_187] : memref<10x10x8x32xf32, #tpu.memory_space<vmem>>, vector<1x1x8x32xf32>
    %240 = vector.shape_cast %239 : vector<1x1x8x32xf32> to vector<8x32xf32>
    %241 = vector.shape_cast %238 : vector<8x32xf32> to vector<1x1x8x32xf32>
    tpu.vector_store %arg15[%c8_184, %c1_185, %c0_186, %c0_187], %241 {strides = array<i32>} : memref<10x10x8x32xf32, #tpu.memory_space<vmem>>, vector<1x1x8x32xf32>,
    %242 = vector.extract_strided_slice %19 {offsets = [6, 2, 0, 0], sizes = [1, 1, 8, 32], strides = [1, 1, 1, 1]} : vector<7x7x8x32xf32> to vector<1x1x8x32xf32>
    %243 = vector.shape_cast %242 : vector<1x1x8x32xf32> to vector<8x32xf32>
    %c8_188 = arith.constant 8 : index
    %c6_189 = arith.constant 6 : index
    %c0_190 = arith.constant 0 : index
    %c0_191 = arith.constant 0 : index
    %244 = vector.load %arg15[%c8_188, %c6_189, %c0_190, %c0_191] : memref<10x10x8x32xf32, #tpu.memory_space<vmem>>, vector<1x1x8x32xf32>
    %245 = vector.shape_cast %244 : vector<1x1x8x32xf32> to vector<8x32xf32>
    %246 = vector.shape_cast %243 : vector<8x32xf32> to vector<1x1x8x32xf32>
    tpu.vector_store %arg15[%c8_188, %c6_189, %c0_190, %c0_191], %246 {strides = array<i32>} : memref<10x10x8x32xf32, #tpu.memory_space<vmem>>, vector<1x1x8x32xf32>,
    %247 = vector.extract_strided_slice %19 {offsets = [6, 3, 0, 0], sizes = [1, 1, 8, 32], strides = [1, 1, 1, 1]} : vector<7x7x8x32xf32> to vector<1x1x8x32xf32>
    %248 = vector.shape_cast %247 : vector<1x1x8x32xf32> to vector<8x32xf32>
    %c8_192 = arith.constant 8 : index
    %c2_193 = arith.constant 2 : index
    %c0_194 = arith.constant 0 : index
    %c0_195 = arith.constant 0 : index
    %249 = vector.load %arg15[%c8_192, %c2_193, %c0_194, %c0_195] : memref<10x10x8x32xf32, #tpu.memory_space<vmem>>, vector<1x1x8x32xf32>
    %250 = vector.shape_cast %249 : vector<1x1x8x32xf32> to vector<8x32xf32>
    %251 = vector.shape_cast %248 : vector<8x32xf32> to vector<1x1x8x32xf32>
    tpu.vector_store %arg15[%c8_192, %c2_193, %c0_194, %c0_195], %251 {strides = array<i32>} : memref<10x10x8x32xf32, #tpu.memory_space<vmem>>, vector<1x1x8x32xf32>,
    %252 = vector.extract_strided_slice %19 {offsets = [6, 4, 0, 0], sizes = [1, 1, 8, 32], strides = [1, 1, 1, 1]} : vector<7x7x8x32xf32> to vector<1x1x8x32xf32>
    %253 = vector.shape_cast %252 : vector<1x1x8x32xf32> to vector<8x32xf32>
    %c8_196 = arith.constant 8 : index
    %c7_197 = arith.constant 7 : index
    %c0_198 = arith.constant 0 : index
    %c0_199 = arith.constant 0 : index
    %254 = vector.load %arg15[%c8_196, %c7_197, %c0_198, %c0_199] : memref<10x10x8x32xf32, #tpu.memory_space<vmem>>, vector<1x1x8x32xf32>
    %255 = vector.shape_cast %254 : vector<1x1x8x32xf32> to vector<8x32xf32>
    %256 = vector.shape_cast %253 : vector<8x32xf32> to vector<1x1x8x32xf32>
    tpu.vector_store %arg15[%c8_196, %c7_197, %c0_198, %c0_199], %256 {strides = array<i32>} : memref<10x10x8x32xf32, #tpu.memory_space<vmem>>, vector<1x1x8x32xf32>,
    %257 = vector.extract_strided_slice %19 {offsets = [6, 5, 0, 0], sizes = [1, 1, 8, 32], strides = [1, 1, 1, 1]} : vector<7x7x8x32xf32> to vector<1x1x8x32xf32>
    %258 = vector.shape_cast %257 : vector<1x1x8x32xf32> to vector<8x32xf32>
    %c8_200 = arith.constant 8 : index
    %c3_201 = arith.constant 3 : index
    %c0_202 = arith.constant 0 : index
    %c0_203 = arith.constant 0 : index
    %259 = vector.load %arg15[%c8_200, %c3_201, %c0_202, %c0_203] : memref<10x10x8x32xf32, #tpu.memory_space<vmem>>, vector<1x1x8x32xf32>
    %260 = vector.shape_cast %259 : vector<1x1x8x32xf32> to vector<8x32xf32>
    %261 = vector.shape_cast %258 : vector<8x32xf32> to vector<1x1x8x32xf32>
    tpu.vector_store %arg15[%c8_200, %c3_201, %c0_202, %c0_203], %261 {strides = array<i32>} : memref<10x10x8x32xf32, #tpu.memory_space<vmem>>, vector<1x1x8x32xf32>,
    %262 = vector.extract_strided_slice %19 {offsets = [6, 6, 0, 0], sizes = [1, 1, 8, 32], strides = [1, 1, 1, 1]} : vector<7x7x8x32xf32> to vector<1x1x8x32xf32>
    %263 = vector.shape_cast %262 : vector<1x1x8x32xf32> to vector<8x32xf32>
    %c8_204 = arith.constant 8 : index
    %c8_205 = arith.constant 8 : index
    %c0_206 = arith.constant 0 : index
    %c0_207 = arith.constant 0 : index
    %264 = vector.load %arg15[%c8_204, %c8_205, %c0_206, %c0_207] : memref<10x10x8x32xf32, #tpu.memory_space<vmem>>, vector<1x1x8x32xf32>
    %265 = vector.shape_cast %264 : vector<1x1x8x32xf32> to vector<8x32xf32>
    %266 = vector.shape_cast %263 : vector<8x32xf32> to vector<1x1x8x32xf32>
    tpu.vector_store %arg15[%c8_204, %c8_205, %c0_206, %c0_207], %266 {strides = array<i32>} : memref<10x10x8x32xf32, #tpu.memory_space<vmem>>, vector<1x1x8x32xf32>,
    %cst_208 = arith.constant 0.000000e+00 : f32
    %267 = vector.broadcast %cst_208 : f32 to vector<128x64xf32>
    %c0_209 = arith.constant 0 : index
    %c0_210 = arith.constant 0 : index
    %c0_211 = arith.constant 0 : index
    %c0_212 = arith.constant 0 : index
    %268 = vector.load %arg15[%c0_209, %c0_210, %c0_211, %c0_212] : memref<10x10x8x32xf32, #tpu.memory_space<vmem>>, vector<4x4x8x32xf32>
    %269 = vector.shape_cast %268 : vector<4x4x8x32xf32> to vector<128x32xf32>
    %270 = arith.truncf %269 : vector<128x32xf32> to vector<128x32xbf16>
    %c0_213 = arith.constant 0 : index
    %c0_214 = arith.constant 0 : index
    %271 = vector.load %arg6[%c0_213, %c0_214] : memref<288x64xbf16, #tpu.memory_space<vmem>>, vector<32x64xbf16>
    %cst_215 = arith.constant dense<0.000000e+00> : vector<128x64xf32>
    %272 = tpu.matmul %270, %271, %cst_215 {dimension_numbers = #tpu.dot_dimension_numbers<[1], [0], [0], [1], [0, 0, 1, 1], [], []>} : vector<128x32xbf16>, vector<32x64xbf16>, vector<128x64xf32> -> vector<128x64xf32>
    %273 = arith.addf %267, %272 : vector<128x64xf32>
    %c0_216 = arith.constant 0 : index
    %c5_217 = arith.constant 5 : index
    %c0_218 = arith.constant 0 : index
    %c0_219 = arith.constant 0 : index
    %274 = vector.load %arg15[%c0_216, %c5_217, %c0_218, %c0_219] : memref<10x10x8x32xf32, #tpu.memory_space<vmem>>, vector<4x4x8x32xf32>
    %275 = vector.shape_cast %274 : vector<4x4x8x32xf32> to vector<128x32xf32>
    %276 = arith.truncf %275 : vector<128x32xf32> to vector<128x32xbf16>
    %c32 = arith.constant 32 : index
    %c0_220 = arith.constant 0 : index
    %277 = vector.load %arg6[%c32, %c0_220] : memref<288x64xbf16, #tpu.memory_space<vmem>>, vector<32x64xbf16>
    %cst_221 = arith.constant dense<0.000000e+00> : vector<128x64xf32>
    %278 = tpu.matmul %276, %277, %cst_221 {dimension_numbers = #tpu.dot_dimension_numbers<[1], [0], [0], [1], [0, 0, 1, 1], [], []>} : vector<128x32xbf16>, vector<32x64xbf16>, vector<128x64xf32> -> vector<128x64xf32>
    %279 = arith.addf %273, %278 : vector<128x64xf32>
    %c0_222 = arith.constant 0 : index
    %c1_223 = arith.constant 1 : index
    %c0_224 = arith.constant 0 : index
    %c0_225 = arith.constant 0 : index
    %280 = vector.load %arg15[%c0_222, %c1_223, %c0_224, %c0_225] : memref<10x10x8x32xf32, #tpu.memory_space<vmem>>, vector<4x4x8x32xf32>
    %281 = vector.shape_cast %280 : vector<4x4x8x32xf32> to vector<128x32xf32>
    %282 = arith.truncf %281 : vector<128x32xf32> to vector<128x32xbf16>
    %c64 = arith.constant 64 : index
    %c0_226 = arith.constant 0 : index
    %283 = vector.load %arg6[%c64, %c0_226] : memref<288x64xbf16, #tpu.memory_space<vmem>>, vector<32x64xbf16>
    %cst_227 = arith.constant dense<0.000000e+00> : vector<128x64xf32>
    %284 = tpu.matmul %282, %283, %cst_227 {dimension_numbers = #tpu.dot_dimension_numbers<[1], [0], [0], [1], [0, 0, 1, 1], [], []>} : vector<128x32xbf16>, vector<32x64xbf16>, vector<128x64xf32> -> vector<128x64xf32>
    %285 = arith.addf %279, %284 : vector<128x64xf32>
    %c5_228 = arith.constant 5 : index
    %c0_229 = arith.constant 0 : index
    %c0_230 = arith.constant 0 : index
    %c0_231 = arith.constant 0 : index
    %286 = vector.load %arg15[%c5_228, %c0_229, %c0_230, %c0_231] : memref<10x10x8x32xf32, #tpu.memory_space<vmem>>, vector<4x4x8x32xf32>
    %287 = vector.shape_cast %286 : vector<4x4x8x32xf32> to vector<128x32xf32>
    %288 = arith.truncf %287 : vector<128x32xf32> to vector<128x32xbf16>
    %c96 = arith.constant 96 : index
    %c0_232 = arith.constant 0 : index
    %289 = vector.load %arg6[%c96, %c0_232] : memref<288x64xbf16, #tpu.memory_space<vmem>>, vector<32x64xbf16>
    %cst_233 = arith.constant dense<0.000000e+00> : vector<128x64xf32>
    %290 = tpu.matmul %288, %289, %cst_233 {dimension_numbers = #tpu.dot_dimension_numbers<[1], [0], [0], [1], [0, 0, 1, 1], [], []>} : vector<128x32xbf16>, vector<32x64xbf16>, vector<128x64xf32> -> vector<128x64xf32>
    %291 = arith.addf %285, %290 : vector<128x64xf32>
    %c5_234 = arith.constant 5 : index
    %c5_235 = arith.constant 5 : index
    %c0_236 = arith.constant 0 : index
    %c0_237 = arith.constant 0 : index
    %292 = vector.load %arg15[%c5_234, %c5_235, %c0_236, %c0_237] : memref<10x10x8x32xf32, #tpu.memory_space<vmem>>, vector<4x4x8x32xf32>
    %293 = vector.shape_cast %292 : vector<4x4x8x32xf32> to vector<128x32xf32>
    %294 = arith.truncf %293 : vector<128x32xf32> to vector<128x32xbf16>
    %c128 = arith.constant 128 : index
    %c0_238 = arith.constant 0 : index
    %295 = vector.load %arg6[%c128, %c0_238] : memref<288x64xbf16, #tpu.memory_space<vmem>>, vector<32x64xbf16>
    %cst_239 = arith.constant dense<0.000000e+00> : vector<128x64xf32>
    %296 = tpu.matmul %294, %295, %cst_239 {dimension_numbers = #tpu.dot_dimension_numbers<[1], [0], [0], [1], [0, 0, 1, 1], [], []>} : vector<128x32xbf16>, vector<32x64xbf16>, vector<128x64xf32> -> vector<128x64xf32>
    %297 = arith.addf %291, %296 : vector<128x64xf32>
    %c5_240 = arith.constant 5 : index
    %c1_241 = arith.constant 1 : index
    %c0_242 = arith.constant 0 : index
    %c0_243 = arith.constant 0 : index
    %298 = vector.load %arg15[%c5_240, %c1_241, %c0_242, %c0_243] : memref<10x10x8x32xf32, #tpu.memory_space<vmem>>, vector<4x4x8x32xf32>
    %299 = vector.shape_cast %298 : vector<4x4x8x32xf32> to vector<128x32xf32>
    %300 = arith.truncf %299 : vector<128x32xf32> to vector<128x32xbf16>
    %c160 = arith.constant 160 : index
    %c0_244 = arith.constant 0 : index
    %301 = vector.load %arg6[%c160, %c0_244] : memref<288x64xbf16, #tpu.memory_space<vmem>>, vector<32x64xbf16>
    %cst_245 = arith.constant dense<0.000000e+00> : vector<128x64xf32>
    %302 = tpu.matmul %300, %301, %cst_245 {dimension_numbers = #tpu.dot_dimension_numbers<[1], [0], [0], [1], [0, 0, 1, 1], [], []>} : vector<128x32xbf16>, vector<32x64xbf16>, vector<128x64xf32> -> vector<128x64xf32>
    %303 = arith.addf %297, %302 : vector<128x64xf32>
    %c1_246 = arith.constant 1 : index
    %c0_247 = arith.constant 0 : index
    %c0_248 = arith.constant 0 : index
    %c0_249 = arith.constant 0 : index
    %304 = vector.load %arg15[%c1_246, %c0_247, %c0_248, %c0_249] : memref<10x10x8x32xf32, #tpu.memory_space<vmem>>, vector<4x4x8x32xf32>
    %305 = vector.shape_cast %304 : vector<4x4x8x32xf32> to vector<128x32xf32>
    %306 = arith.truncf %305 : vector<128x32xf32> to vector<128x32xbf16>
    %c192 = arith.constant 192 : index
    %c0_250 = arith.constant 0 : index
    %307 = vector.load %arg6[%c192, %c0_250] : memref<288x64xbf16, #tpu.memory_space<vmem>>, vector<32x64xbf16>
    %cst_251 = arith.constant dense<0.000000e+00> : vector<128x64xf32>
    %308 = tpu.matmul %306, %307, %cst_251 {dimension_numbers = #tpu.dot_dimension_numbers<[1], [0], [0], [1], [0, 0, 1, 1], [], []>} : vector<128x32xbf16>, vector<32x64xbf16>, vector<128x64xf32> -> vector<128x64xf32>
    %309 = arith.addf %303, %308 : vector<128x64xf32>
    %c1_252 = arith.constant 1 : index
    %c5_253 = arith.constant 5 : index
    %c0_254 = arith.constant 0 : index
    %c0_255 = arith.constant 0 : index
    %310 = vector.load %arg15[%c1_252, %c5_253, %c0_254, %c0_255] : memref<10x10x8x32xf32, #tpu.memory_space<vmem>>, vector<4x4x8x32xf32>
    %311 = vector.shape_cast %310 : vector<4x4x8x32xf32> to vector<128x32xf32>
    %312 = arith.truncf %311 : vector<128x32xf32> to vector<128x32xbf16>
    %c224 = arith.constant 224 : index
    %c0_256 = arith.constant 0 : index
    %313 = vector.load %arg6[%c224, %c0_256] : memref<288x64xbf16, #tpu.memory_space<vmem>>, vector<32x64xbf16>
    %cst_257 = arith.constant dense<0.000000e+00> : vector<128x64xf32>
    %314 = tpu.matmul %312, %313, %cst_257 {dimension_numbers = #tpu.dot_dimension_numbers<[1], [0], [0], [1], [0, 0, 1, 1], [], []>} : vector<128x32xbf16>, vector<32x64xbf16>, vector<128x64xf32> -> vector<128x64xf32>
    %315 = arith.addf %309, %314 : vector<128x64xf32>
    %c1_258 = arith.constant 1 : index
    %c1_259 = arith.constant 1 : index
    %c0_260 = arith.constant 0 : index
    %c0_261 = arith.constant 0 : index
    %316 = vector.load %arg15[%c1_258, %c1_259, %c0_260, %c0_261] : memref<10x10x8x32xf32, #tpu.memory_space<vmem>>, vector<4x4x8x32xf32>
    %317 = vector.shape_cast %316 : vector<4x4x8x32xf32> to vector<128x32xf32>
    %318 = arith.truncf %317 : vector<128x32xf32> to vector<128x32xbf16>
    %c256 = arith.constant 256 : index
    %c0_262 = arith.constant 0 : index
    %319 = vector.load %arg6[%c256, %c0_262] : memref<288x64xbf16, #tpu.memory_space<vmem>>, vector<32x64xbf16>
    %cst_263 = arith.constant dense<0.000000e+00> : vector<128x64xf32>
    %320 = tpu.matmul %318, %319, %cst_263 {dimension_numbers = #tpu.dot_dimension_numbers<[1], [0], [0], [1], [0, 0, 1, 1], [], []>} : vector<128x32xbf16>, vector<32x64xbf16>, vector<128x64xf32> -> vector<128x64xf32>
    %321 = arith.addf %315, %320 : vector<128x64xf32>
    %c0_264 = arith.constant 0 : index
    %c0_265 = arith.constant 0 : index
    %322 = vector.load %arg7[%c0_264, %c0_265] : memref<1x64xf32, #tpu.memory_space<vmem>>, vector<1x64xf32>
    %323 = vector.broadcast %322 : vector<1x64xf32> to vector<128x64xf32>
    %324 = arith.addf %321, %323 : vector<128x64xf32>
    %cst_266 = arith.constant 0.000000e+00 : f32
    %325 = vector.broadcast %cst_266 : f32 to vector<128x64xf32>
    %326 = arith.maximumf %324, %325 : vector<128x64xf32>
    %327 = vector.extract_strided_slice %326 {offsets = [0, 0], sizes = [8, 64], strides = [1, 1]} : vector<128x64xf32> to vector<8x64xf32>
    %c0_267 = arith.constant 0 : index
    %c0_268 = arith.constant 0 : index
    %328 = vector.load %arg16[%c0_267, %c0_268] : memref<8x1024xf32, #tpu.memory_space<vmem>>, vector<8x64xf32>
    tpu.vector_store %arg16[%c0_267, %c0_268], %327 {strides = array<i32>} : memref<8x1024xf32, #tpu.memory_space<vmem>>, vector<8x64xf32>,
    %329 = vector.extract_strided_slice %326 {offsets = [8, 0], sizes = [8, 64], strides = [1, 1]} : vector<128x64xf32> to vector<8x64xf32>
    %c0_269 = arith.constant 0 : index
    %c64_270 = arith.constant 64 : index
    %330 = vector.load %arg16[%c0_269, %c64_270] : memref<8x1024xf32, #tpu.memory_space<vmem>>, vector<8x64xf32>
    tpu.vector_store %arg16[%c0_269, %c64_270], %329 {strides = array<i32>} : memref<8x1024xf32, #tpu.memory_space<vmem>>, vector<8x64xf32>,
    %331 = vector.extract_strided_slice %326 {offsets = [16, 0], sizes = [8, 64], strides = [1, 1]} : vector<128x64xf32> to vector<8x64xf32>
    %c0_271 = arith.constant 0 : index
    %c128_272 = arith.constant 128 : index
    %332 = vector.load %arg16[%c0_271, %c128_272] : memref<8x1024xf32, #tpu.memory_space<vmem>>, vector<8x64xf32>
    tpu.vector_store %arg16[%c0_271, %c128_272], %331 {strides = array<i32>} : memref<8x1024xf32, #tpu.memory_space<vmem>>, vector<8x64xf32>,
    %333 = vector.extract_strided_slice %326 {offsets = [24, 0], sizes = [8, 64], strides = [1, 1]} : vector<128x64xf32> to vector<8x64xf32>
    %c0_273 = arith.constant 0 : index
    %c192_274 = arith.constant 192 : index
    %334 = vector.load %arg16[%c0_273, %c192_274] : memref<8x1024xf32, #tpu.memory_space<vmem>>, vector<8x64xf32>
    tpu.vector_store %arg16[%c0_273, %c192_274], %333 {strides = array<i32>} : memref<8x1024xf32, #tpu.memory_space<vmem>>, vector<8x64xf32>,
    %335 = vector.extract_strided_slice %326 {offsets = [32, 0], sizes = [8, 64], strides = [1, 1]} : vector<128x64xf32> to vector<8x64xf32>
    %c0_275 = arith.constant 0 : index
    %c256_276 = arith.constant 256 : index
    %336 = vector.load %arg16[%c0_275, %c256_276] : memref<8x1024xf32, #tpu.memory_space<vmem>>, vector<8x64xf32>
    tpu.vector_store %arg16[%c0_275, %c256_276], %335 {strides = array<i32>} : memref<8x1024xf32, #tpu.memory_space<vmem>>, vector<8x64xf32>,
    %337 = vector.extract_strided_slice %326 {offsets = [40, 0], sizes = [8, 64], strides = [1, 1]} : vector<128x64xf32> to vector<8x64xf32>
    %c0_277 = arith.constant 0 : index
    %c320 = arith.constant 320 : index
    %338 = vector.load %arg16[%c0_277, %c320] : memref<8x1024xf32, #tpu.memory_space<vmem>>, vector<8x64xf32>
    tpu.vector_store %arg16[%c0_277, %c320], %337 {strides = array<i32>} : memref<8x1024xf32, #tpu.memory_space<vmem>>, vector<8x64xf32>,
    %339 = vector.extract_strided_slice %326 {offsets = [48, 0], sizes = [8, 64], strides = [1, 1]} : vector<128x64xf32> to vector<8x64xf32>
    %c0_278 = arith.constant 0 : index
    %c384 = arith.constant 384 : index
    %340 = vector.load %arg16[%c0_278, %c384] : memref<8x1024xf32, #tpu.memory_space<vmem>>, vector<8x64xf32>
    tpu.vector_store %arg16[%c0_278, %c384], %339 {strides = array<i32>} : memref<8x1024xf32, #tpu.memory_space<vmem>>, vector<8x64xf32>,
    %341 = vector.extract_strided_slice %326 {offsets = [56, 0], sizes = [8, 64], strides = [1, 1]} : vector<128x64xf32> to vector<8x64xf32>
    %c0_279 = arith.constant 0 : index
    %c448 = arith.constant 448 : index
    %342 = vector.load %arg16[%c0_279, %c448] : memref<8x1024xf32, #tpu.memory_space<vmem>>, vector<8x64xf32>
    tpu.vector_store %arg16[%c0_279, %c448], %341 {strides = array<i32>} : memref<8x1024xf32, #tpu.memory_space<vmem>>, vector<8x64xf32>,
    %343 = vector.extract_strided_slice %326 {offsets = [64, 0], sizes = [8, 64], strides = [1, 1]} : vector<128x64xf32> to vector<8x64xf32>
    %c0_280 = arith.constant 0 : index
    %c512 = arith.constant 512 : index
    %344 = vector.load %arg16[%c0_280, %c512] : memref<8x1024xf32, #tpu.memory_space<vmem>>, vector<8x64xf32>
    tpu.vector_store %arg16[%c0_280, %c512], %343 {strides = array<i32>} : memref<8x1024xf32, #tpu.memory_space<vmem>>, vector<8x64xf32>,
    %345 = vector.extract_strided_slice %326 {offsets = [72, 0], sizes = [8, 64], strides = [1, 1]} : vector<128x64xf32> to vector<8x64xf32>
    %c0_281 = arith.constant 0 : index
    %c576 = arith.constant 576 : index
    %346 = vector.load %arg16[%c0_281, %c576] : memref<8x1024xf32, #tpu.memory_space<vmem>>, vector<8x64xf32>
    tpu.vector_store %arg16[%c0_281, %c576], %345 {strides = array<i32>} : memref<8x1024xf32, #tpu.memory_space<vmem>>, vector<8x64xf32>,
    %347 = vector.extract_strided_slice %326 {offsets = [80, 0], sizes = [8, 64], strides = [1, 1]} : vector<128x64xf32> to vector<8x64xf32>
    %c0_282 = arith.constant 0 : index
    %c640 = arith.constant 640 : index
    %348 = vector.load %arg16[%c0_282, %c640] : memref<8x1024xf32, #tpu.memory_space<vmem>>, vector<8x64xf32>
    tpu.vector_store %arg16[%c0_282, %c640], %347 {strides = array<i32>} : memref<8x1024xf32, #tpu.memory_space<vmem>>, vector<8x64xf32>,
    %349 = vector.extract_strided_slice %326 {offsets = [88, 0], sizes = [8, 64], strides = [1, 1]} : vector<128x64xf32> to vector<8x64xf32>
    %c0_283 = arith.constant 0 : index
    %c704 = arith.constant 704 : index
    %350 = vector.load %arg16[%c0_283, %c704] : memref<8x1024xf32, #tpu.memory_space<vmem>>, vector<8x64xf32>
    tpu.vector_store %arg16[%c0_283, %c704], %349 {strides = array<i32>} : memref<8x1024xf32, #tpu.memory_space<vmem>>, vector<8x64xf32>,
    %351 = vector.extract_strided_slice %326 {offsets = [96, 0], sizes = [8, 64], strides = [1, 1]} : vector<128x64xf32> to vector<8x64xf32>
    %c0_284 = arith.constant 0 : index
    %c768 = arith.constant 768 : index
    %352 = vector.load %arg16[%c0_284, %c768] : memref<8x1024xf32, #tpu.memory_space<vmem>>, vector<8x64xf32>
    tpu.vector_store %arg16[%c0_284, %c768], %351 {strides = array<i32>} : memref<8x1024xf32, #tpu.memory_space<vmem>>, vector<8x64xf32>,
    %353 = vector.extract_strided_slice %326 {offsets = [104, 0], sizes = [8, 64], strides = [1, 1]} : vector<128x64xf32> to vector<8x64xf32>
    %c0_285 = arith.constant 0 : index
    %c832 = arith.constant 832 : index
    %354 = vector.load %arg16[%c0_285, %c832] : memref<8x1024xf32, #tpu.memory_space<vmem>>, vector<8x64xf32>
    tpu.vector_store %arg16[%c0_285, %c832], %353 {strides = array<i32>} : memref<8x1024xf32, #tpu.memory_space<vmem>>, vector<8x64xf32>,
    %355 = vector.extract_strided_slice %326 {offsets = [112, 0], sizes = [8, 64], strides = [1, 1]} : vector<128x64xf32> to vector<8x64xf32>
    %c0_286 = arith.constant 0 : index
    %c896 = arith.constant 896 : index
    %356 = vector.load %arg16[%c0_286, %c896] : memref<8x1024xf32, #tpu.memory_space<vmem>>, vector<8x64xf32>
    tpu.vector_store %arg16[%c0_286, %c896], %355 {strides = array<i32>} : memref<8x1024xf32, #tpu.memory_space<vmem>>, vector<8x64xf32>,
    %357 = vector.extract_strided_slice %326 {offsets = [120, 0], sizes = [8, 64], strides = [1, 1]} : vector<128x64xf32> to vector<8x64xf32>
    %c0_287 = arith.constant 0 : index
    %c960 = arith.constant 960 : index
    %358 = vector.load %arg16[%c0_287, %c960] : memref<8x1024xf32, #tpu.memory_space<vmem>>, vector<8x64xf32>
    tpu.vector_store %arg16[%c0_287, %c960], %357 {strides = array<i32>} : memref<8x1024xf32, #tpu.memory_space<vmem>>, vector<8x64xf32>,
    %c0_288 = arith.constant 0 : index
    %c0_289 = arith.constant 0 : index
    %359 = vector.load %arg16[%c0_288, %c0_289] : memref<8x1024xf32, #tpu.memory_space<vmem>>, vector<8x1024xf32>
    %360 = arith.truncf %359 : vector<8x1024xf32> to vector<8x1024xbf16>
    %c0_290 = arith.constant 0 : index
    %c0_291 = arith.constant 0 : index
    %361 = vector.load %arg8[%c0_290, %c0_291] : memref<1024x512xbf16, #tpu.memory_space<vmem>>, vector<1024x512xbf16>
    %cst_292 = arith.constant dense<0.000000e+00> : vector<8x512xf32>
    %362 = tpu.matmul %360, %361, %cst_292 {dimension_numbers = #tpu.dot_dimension_numbers<[1], [0], [0], [1], [0, 0, 1, 1], [], []>} : vector<8x1024xbf16>, vector<1024x512xbf16>, vector<8x512xf32> -> vector<8x512xf32>
    %c0_293 = arith.constant 0 : index
    %c0_294 = arith.constant 0 : index
    %363 = vector.load %arg9[%c0_293, %c0_294] : memref<1x512xf32, #tpu.memory_space<vmem>>, vector<1x512xf32>
    %364 = vector.broadcast %363 : vector<1x512xf32> to vector<8x512xf32>
    %365 = arith.addf %362, %364 : vector<8x512xf32>
    %cst_295 = arith.constant 0.000000e+00 : f32
    %366 = vector.broadcast %cst_295 : f32 to vector<8x512xf32>
    %367 = arith.maximumf %365, %366 : vector<8x512xf32>
    %368 = arith.truncf %367 : vector<8x512xf32> to vector<8x512xbf16>
    %c0_296 = arith.constant 0 : index
    %c0_297 = arith.constant 0 : index
    %369 = vector.load %arg10[%c0_296, %c0_297] : memref<512x128xbf16, #tpu.memory_space<vmem>>, vector<512x128xbf16>
    %cst_298 = arith.constant dense<0.000000e+00> : vector<8x128xf32>
    %370 = tpu.matmul %368, %369, %cst_298 {dimension_numbers = #tpu.dot_dimension_numbers<[1], [0], [0], [1], [0, 0, 1, 1], [], []>} : vector<8x512xbf16>, vector<512x128xbf16>, vector<8x128xf32> -> vector<8x128xf32>
    %c0_299 = arith.constant 0 : index
    %c0_300 = arith.constant 0 : index
    %371 = vector.load %arg11[%c0_299, %c0_300] : memref<1x128xf32, #tpu.memory_space<vmem>>, vector<1x128xf32>
    %372 = vector.broadcast %371 : vector<1x128xf32> to vector<8x128xf32>
    %373 = arith.addf %370, %372 : vector<8x128xf32>
    %cst_301 = arith.constant 0.000000e+00 : f32
    %374 = vector.broadcast %cst_301 : f32 to vector<8x128xf32>
    %375 = arith.maximumf %373, %374 : vector<8x128xf32>
    %c0_302 = arith.constant 0 : index
    %c0_303 = arith.constant 0 : index
    %376 = vector.load %arg12[%c0_302, %c0_303] : memref<1x128xf32, #tpu.memory_space<vmem>>, vector<1x128xf32>
    %377 = vector.broadcast %376 : vector<1x128xf32> to vector<8x128xf32>
    %378 = arith.mulf %375, %377 : vector<8x128xf32>
    %cst_304 = arith.constant dense<0.000000e+00> : vector<8xf32>
    %379 = vector.multi_reduction <add>, %378, %cst_304 [1] : vector<8x128xf32> to vector<8xf32>
    %380 = vector.shape_cast %379 : vector<8xf32> to vector<8x1xf32>
    %c0_305 = arith.constant 0 : index
    %c0_306 = arith.constant 0 : index
    %381 = vector.load %arg13[%c0_305, %c0_306] : memref<1x1xf32, #tpu.memory_space<vmem>>, vector<1x1xf32>
    %382 = vector.broadcast %381 : vector<1x1xf32> to vector<8x1xf32>
    %383 = arith.addf %380, %382 : vector<8x1xf32>
    %384 = vector.extract_strided_slice %383 {offsets = [0, 0], sizes = [2, 1], strides = [1, 1]} : vector<8x1xf32> to vector<2x1xf32>
    %385 = vector.extract_strided_slice %383 {offsets = [2, 0], sizes = [2, 1], strides = [1, 1]} : vector<8x1xf32> to vector<2x1xf32>
    %386 = arith.maximumf %384, %385 : vector<2x1xf32>
    %387 = vector.extract_strided_slice %383 {offsets = [4, 0], sizes = [2, 1], strides = [1, 1]} : vector<8x1xf32> to vector<2x1xf32>
    %388 = arith.maximumf %386, %387 : vector<2x1xf32>
    %c0_307 = arith.constant 0 : index
    %c0_308 = arith.constant 0 : index
    %389 = vector.load %arg14[%c0_307, %c0_308] : memref<2x1xf32, #tpu.memory_space<vmem>>, vector<2x1xf32>
    tpu.vector_store %arg14[%c0_307, %c0_308], %388 {strides = array<i32>} : memref<2x1xf32, #tpu.memory_space<vmem>>, vector<2x1xf32>,
    return
  }
}

</mosaic_0001>

<llo_original>
// kernel: critic_forward.1
$region0: #{critic_forward.1}
  #allocation0 [shape = 'u32[]', space=smem, size = 0x4, offset = 0x4, fixed_abs, tag = 'smem constant byte address 0x4 - core index']
  #allocation1 [shape = 'u32[72,128]{1,0:T(1,128)}', space=vmem, size = 0x9000, scoped, tag = 'internal scratch']
  #allocation2 [shape = 'f32[10,10,8,32]{3,2,1,0:T(8,128)}', space=vmem, size = 0x64000, scoped, tag = 'scratch operand']
  #allocation3 [shape = 'f32[8,1024]{1,0:T(8,128)}', space=vmem, size = 0x8000, scoped, tag = 'scratch operand']
  #allocation4 [shape = 'f32[1,1]{1,0:T(1,128)S(1)}', space=vmem, size = 0x200, scoped, tag = 'scoped memory for critic_forward.1']
  %s0 = inlined_call_operand.vmem [shape: f32[392,9], index: 0, kind: input, shape index: {}]
  %s1 = inlined_call_operand.vmem [shape: bf16[392,144], index: 1, kind: input, shape index: {}]
  %s2 = inlined_call_operand.vmem [shape: f32[9,144], index: 2, kind: input, shape index: {}]
  %s3 = inlined_call_operand.vmem [shape: f32[1,144], index: 3, kind: input, shape index: {}]
  %s4 = inlined_call_operand.vmem [shape: bf16[144,32], index: 4, kind: input, shape index: {}]
  %s5 = inlined_call_operand.vmem [shape: f32[1,32], index: 5, kind: input, shape index: {}]
  %s6 = inlined_call_operand.vmem [shape: bf16[288,64], index: 6, kind: input, shape index: {}]
  %s7 = inlined_call_operand.vmem [shape: f32[1,64], index: 7, kind: input, shape index: {}]
  %s8 = inlined_call_operand.vmem [shape: bf16[1024,512], index: 8, kind: input, shape index: {}]
  %s9 = inlined_call_operand.vmem [shape: f32[1,512], index: 9, kind: input, shape index: {}]
  %s10 = inlined_call_operand.vmem [shape: bf16[512,128], index: 10, kind: input, shape index: {}]
  %s11 = inlined_call_operand.vmem [shape: f32[1,128], index: 11, kind: input, shape index: {}]
  %s12 = inlined_call_operand.vmem [shape: f32[1,128], index: 12, kind: input, shape index: {}]
  %s13 = inlined_call_operand.<no memory space> [shape: f32[1,1], index: 13, kind: input, shape index: {}]
  %s14 = inlined_call_operand.vmem [shape: f32[2,1], index: 14, kind: output, shape index: {}]
  %s15 = sld [smem:[#allocation0]]
  $region66: #{critic_forward.1} parent=0
    _
  %s17 = ssub.s32 1, %s15
  %s18 = scalar_select 0, %s17, %s15
  %v19 = vstv %s13
  %20 = vst [vmem:[#allocation4] sm:$0x1] %v19
  // Predicated region
  $region2: #{critic_forward.1} parent=0 // pred_check
    _
  $region3: #{critic_forward.1} parent=0 // pred_check_branch
    %22 = sbr.rel (0) target = $region5
  $region4: #{critic_forward.1} parent=0 // pred_region
    _
  $region5: #{critic_forward.1} parent=0 // pred_fallthru
    _
  // Predicated region
  $region6: #{critic_forward.1} parent=0 // pred_check
    _
  $region7: #{critic_forward.1} parent=0 // pred_check_branch
    %24 = sbr.rel (0) target = $region9
  $region8: #{critic_forward.1} parent=0 // pred_region
    _
  $region9: #{critic_forward.1} parent=0 // pred_fallthru
    _
  // Predicated region
  $region10: #{critic_forward.1} parent=0 // pred_check
    _
  $region11: #{critic_forward.1} parent=0 // pred_check_branch
    %26 = sbr.rel (0) target = $region13
  $region12: #{critic_forward.1} parent=0 // pred_region
    _
  $region13: #{critic_forward.1} parent=0 // pred_fallthru
    _
  // Predicated region
  $region14: #{critic_forward.1} parent=0 // pred_check
    _
  $region15: #{critic_forward.1} parent=0 // pred_check_branch
    %28 = sbr.rel (0) target = $region17
  $region16: #{critic_forward.1} parent=0 // pred_region
    _
  $region17: #{critic_forward.1} parent=0 // pred_fallthru
    _
  // Predicated region
  $region18: #{critic_forward.1} parent=0 // pred_check
    _
  $region19: #{critic_forward.1} parent=0 // pred_check_branch
    %30 = sbr.rel (0) target = $region21
  $region20: #{critic_forward.1} parent=0 // pred_region
    _
  $region21: #{critic_forward.1} parent=0 // pred_fallthru
    _
  // Predicated region
  $region22: #{critic_forward.1} parent=0 // pred_check
    _
  $region23: #{critic_forward.1} parent=0 // pred_check_branch
    %32 = sbr.rel (0) target = $region25
  $region24: #{critic_forward.1} parent=0 // pred_region
    _
  $region25: #{critic_forward.1} parent=0 // pred_fallthru
    _
  // Predicated region
  $region26: #{critic_forward.1} parent=0 // pred_check
    _
  $region27: #{critic_forward.1} parent=0 // pred_check_branch
    %34 = sbr.rel (0) target = $region29
  $region28: #{critic_forward.1} parent=0 // pred_region
    _
  $region29: #{critic_forward.1} parent=0 // pred_fallthru
    _
  // Predicated region
  $region30: #{critic_forward.1} parent=0 // pred_check
    _
  $region31: #{critic_forward.1} parent=0 // pred_check_branch
    %36 = sbr.rel (0) target = $region33
  $region32: #{critic_forward.1} parent=0 // pred_region
    _
  $region33: #{critic_forward.1} parent=0 // pred_fallthru
    _
  // Predicated region
  $region34: #{critic_forward.1} parent=0 // pred_check
    _
  $region35: #{critic_forward.1} parent=0 // pred_check_branch
    %38 = sbr.rel (0) target = $region37
  $region36: #{critic_forward.1} parent=0 // pred_region
    _
  $region37: #{critic_forward.1} parent=0 // pred_fallthru
    _
  // Predicated region
  $region38: #{critic_forward.1} parent=0 // pred_check
    _
  $region39: #{critic_forward.1} parent=0 // pred_check_branch
    %40 = sbr.rel (0) target = $region41
  $region40: #{critic_forward.1} parent=0 // pred_region
    _
  $region41: #{critic_forward.1} parent=0 // pred_fallthru
    _
  // Predicated region
  $region42: #{critic_forward.1} parent=0 // pred_check
    _
  $region43: #{critic_forward.1} parent=0 // pred_check_branch
    %42 = sbr.rel (0) target = $region45
  $region44: #{critic_forward.1} parent=0 // pred_region
    _
  $region45: #{critic_forward.1} parent=0 // pred_fallthru
    _
  // Predicated region
  $region46: #{critic_forward.1} parent=0 // pred_check
    _
  $region47: #{critic_forward.1} parent=0 // pred_check_branch
    %44 = sbr.rel (0) target = $region49
  $region48: #{critic_forward.1} parent=0 // pred_region
    _
  $region49: #{critic_forward.1} parent=0 // pred_fallthru
    _
  // Predicated region
  $region50: #{critic_forward.1} parent=0 // pred_check
    _
  $region51: #{critic_forward.1} parent=0 // pred_check_branch
    %46 = sbr.rel (0) target = $region53
  $region52: #{critic_forward.1} parent=0 // pred_region
    _
  $region53: #{critic_forward.1} parent=0 // pred_fallthru
    _
  // Predicated region
  $region54: #{critic_forward.1} parent=0 // pred_check
    _
  $region55: #{critic_forward.1} parent=0 // pred_check_branch
    %48 = sbr.rel (0) target = $region57
  $region56: #{critic_forward.1} parent=0 // pred_region
    _
  $region57: #{critic_forward.1} parent=0 // pred_fallthru
    _
  %v50 = vld [vmem:[%s0] sm:$0xff]
  %v51 = vld [vmem:[%s0 + $0x8] sm:$0xff]
  %v52 = vld [vmem:[%s0 + $0x10] sm:$0xff]
  %v53 = vld [vmem:[%s0 + $0x18] sm:$0xff]
  %v54 = vld [vmem:[%s0 + $0x20] sm:$0xff]
  %v55 = vld [vmem:[%s0 + $0x28] sm:$0xff]
  %v56 = vld [vmem:[%s0 + $0x30] sm:$0xff]
  %v57 = vld [vmem:[%s0 + $0x38] sm:$0xff]
  %v58 = vld [vmem:[%s0 + $0x40] sm:$0xff]
  %v59 = vld [vmem:[%s0 + $0x48] sm:$0xff]
  %v60 = vld [vmem:[%s0 + $0x50] sm:$0xff]
  %v61 = vld [vmem:[%s0 + $0x58] sm:$0xff]
  %v62 = vld [vmem:[%s0 + $0x60] sm:$0xff]
  %v63 = vld [vmem:[%s0 + $0x68] sm:$0xff]
  %v64 = vld [vmem:[%s0 + $0x70] sm:$0xff]
  %v65 = vld [vmem:[%s0 + $0x78] sm:$0xff]
  %v66 = vld [vmem:[%s0 + $0x80] sm:$0xff]
  %v67 = vld [vmem:[%s0 + $0x88] sm:$0xff]
  %v68 = vld [vmem:[%s0 + $0x90] sm:$0xff]
  %v69 = vld [vmem:[%s0 + $0x98] sm:$0xff]
  %v70 = vld [vmem:[%s0 + $0xa0] sm:$0xff]
  %v71 = vld [vmem:[%s0 + $0xa8] sm:$0xff]
  %v72 = vld [vmem:[%s0 + $0xb0] sm:$0xff]
  %v73 = vld [vmem:[%s0 + $0xb8] sm:$0xff]
  %v74 = vld [vmem:[%s0 + $0xc0] sm:$0xff]
  %v75 = vld [vmem:[%s0 + $0xc8] sm:$0xff]
  %v76 = vld [vmem:[%s0 + $0xd0] sm:$0xff]
  %v77 = vld [vmem:[%s0 + $0xd8] sm:$0xff]
  %v78 = vld [vmem:[%s0 + $0xe0] sm:$0xff]
  %v79 = vld [vmem:[%s0 + $0xe8] sm:$0xff]
  %v80 = vld [vmem:[%s0 + $0xf0] sm:$0xff]
  %v81 = vld [vmem:[%s0 + $0xf8] sm:$0xff]
  %v82 = vld [vmem:[%s0 + $0x100] sm:$0xff]
  %v83 = vld [vmem:[%s0 + $0x108] sm:$0xff]
  %v84 = vld [vmem:[%s0 + $0x110] sm:$0xff]
  %v85 = vld [vmem:[%s0 + $0x118] sm:$0xff]
  %v86 = vld [vmem:[%s0 + $0x120] sm:$0xff]
  %v87 = vld [vmem:[%s0 + $0x128] sm:$0xff]
  %v88 = vld [vmem:[%s0 + $0x130] sm:$0xff]
  %v89 = vld [vmem:[%s0 + $0x138] sm:$0xff]
  %v90 = vld [vmem:[%s0 + $0x140] sm:$0xff]
  %v91 = vld [vmem:[%s0 + $0x148] sm:$0xff]
  %v92 = vld [vmem:[%s0 + $0x150] sm:$0xff]
  %v93 = vld [vmem:[%s0 + $0x158] sm:$0xff]
  %v94 = vld [vmem:[%s0 + $0x160] sm:$0xff]
  %v95 = vld [vmem:[%s0 + $0x168] sm:$0xff]
  %v96 = vld [vmem:[%s0 + $0x170] sm:$0xff]
  %v97 = vld [vmem:[%s0 + $0x178] sm:$0xff]
  %v98 = vld [vmem:[%s0 + $0x180] sm:$0xff]
  %v99 = vld [vmem:[%s2] sm:$0xff]
  %v100 = vld [vmem:[%s2 + $0x8] sm:$0xff]
  %v101 = vld [vmem:[%s2 + $0x10] sm:$0x1]
  %v102 = vld [vmem:[%s2 + $0x18] sm:$0x1]
  %v103 = vld [vmem:[%s3] sm:$0x3]
  %v105 = vperm.slane %v103, 0
  %v106 = vperm.slane %v103, 1
  %vm109 = vcmask 72704
  %v111 = vsel %vm109, %v50, 0
  %v114 = vsel %vm109, %v51, 0
  %v117 = vsel %vm109, %v52, 0
  %v120 = vsel %vm109, %v53, 0
  %v123 = vsel %vm109, %v54, 0
  %v126 = vsel %vm109, %v55, 0
  %v129 = vsel %vm109, %v56, 0
  %v132 = vsel %vm109, %v57, 0
  %v135 = vsel %vm109, %v58, 0
  %v138 = vsel %vm109, %v59, 0
  %v141 = vsel %vm109, %v60, 0
  %v144 = vsel %vm109, %v61, 0
  %v147 = vsel %vm109, %v62, 0
  %v150 = vsel %vm109, %v63, 0
  %v153 = vsel %vm109, %v64, 0
  %v156 = vsel %vm109, %v65, 0
  %v159 = vsel %vm109, %v66, 0
  %v162 = vsel %vm109, %v67, 0
  %v165 = vsel %vm109, %v68, 0
  %v168 = vsel %vm109, %v69, 0
  %v171 = vsel %vm109, %v70, 0
  %v174 = vsel %vm109, %v71, 0
  %v177 = vsel %vm109, %v72, 0
  %v180 = vsel %vm109, %v73, 0
  %v183 = vsel %vm109, %v74, 0
  %v186 = vsel %vm109, %v75, 0
  %v189 = vsel %vm109, %v76, 0
  %v192 = vsel %vm109, %v77, 0
  %v195 = vsel %vm109, %v78, 0
  %v198 = vsel %vm109, %v79, 0
  %v201 = vsel %vm109, %v80, 0
  %v204 = vsel %vm109, %v81, 0
  %v207 = vsel %vm109, %v82, 0
  %v210 = vsel %vm109, %v83, 0
  %v213 = vsel %vm109, %v84, 0
  %v216 = vsel %vm109, %v85, 0
  %v219 = vsel %vm109, %v86, 0
  %v222 = vsel %vm109, %v87, 0
  %v225 = vsel %vm109, %v88, 0
  %v228 = vsel %vm109, %v89, 0
  %v231 = vsel %vm109, %v90, 0
  %v234 = vsel %vm109, %v91, 0
  %v237 = vsel %vm109, %v92, 0
  %v240 = vsel %vm109, %v93, 0
  %v243 = vsel %vm109, %v94, 0
  %v246 = vsel %vm109, %v95, 0
  %v249 = vsel %vm109, %v96, 0
  %v252 = vsel %vm109, %v97, 0
  %v255 = vsel %vm109, %v98, 0
  %vm257 = vcmask 1040384
  %v259 = vsel %vm257, %v101, 0
  %v262 = vsel %vm257, %v102, 0
  %264 = vmatpush.msra.mxu0 0.0
  %265 = vmatpush.msra.mxu0 0.0
  %266 = vmatpush.msra.mxu0 0.0
  %267 = vmatpush.msra.mxu0 0.0
  %268 = vmatpush.msra.mxu0 0.0
  %269 = vmatpush.msra.mxu0 0.0
  %270 = vmatpush.msra.mxu0 0.0
  %271 = vmatpush.msra.mxu0 0.0
  %272 = vmatpush.msra.mxu0 0.0
  %273 = vmatpush.msra.mxu0 0.0
  %274 = vmatpush.msra.mxu0 0.0
  %275 = vmatpush.msra.mxu0 0.0
  %276 = vmatpush.msra.mxu0 0.0
  %277 = vmatpush.msra.mxu0 0.0
  %278 = vmatpush.msra.mxu0 %v259
  %279 = vmatpush.msra.mxu0 %v99
  %280 = vmatmul.f32.gmra.mxu0 %v111
  %v281 = vpop.f32.mrf.mxu0
  %v282 = vadd.f32 %v105, %v281
  %283 = vmatmul.f32.gmra.mxu0 %v114
  %v284 = vpop.f32.mrf.mxu0
  %v285 = vadd.f32 %v105, %v284
  %286 = vmatmul.f32.gmra.mxu0 %v117
  %v287 = vpop.f32.mrf.mxu0
  %v288 = vadd.f32 %v105, %v287
  %289 = vmatmul.f32.gmra.mxu0 %v120
  %v290 = vpop.f32.mrf.mxu0
  %v291 = vadd.f32 %v105, %v290
  %292 = vmatmul.f32.gmra.mxu0 %v123
  %v293 = vpop.f32.mrf.mxu0
  %v294 = vadd.f32 %v105, %v293
  %295 = vmatmul.f32.gmra.mxu0 %v126
  %v296 = vpop.f32.mrf.mxu0
  %v297 = vadd.f32 %v105, %v296
  %298 = vmatmul.f32.gmra.mxu0 %v129
  %v299 = vpop.f32.mrf.mxu0
  %v300 = vadd.f32 %v105, %v299
  %301 = vmatmul.f32.gmra.mxu0 %v132
  %v302 = vpop.f32.mrf.mxu0
  %v303 = vadd.f32 %v105, %v302
  %304 = vmatmul.f32.gmra.mxu0 %v135
  %v305 = vpop.f32.mrf.mxu0
  %v306 = vadd.f32 %v105, %v305
  %307 = vmatmul.f32.gmra.mxu0 %v138
  %v308 = vpop.f32.mrf.mxu0
  %v309 = vadd.f32 %v105, %v308
  %310 = vmatmul.f32.gmra.mxu0 %v141
  %v311 = vpop.f32.mrf.mxu0
  %v312 = vadd.f32 %v105, %v311
  %313 = vmatmul.f32.gmra.mxu0 %v144
  %v314 = vpop.f32.mrf.mxu0
  %v315 = vadd.f32 %v105, %v314
  %316 = vmatmul.f32.gmra.mxu0 %v147
  %v317 = vpop.f32.mrf.mxu0
  %v318 = vadd.f32 %v105, %v317
  %319 = vmatmul.f32.gmra.mxu0 %v150
  %v320 = vpop.f32.mrf.mxu0
  %v321 = vadd.f32 %v105, %v320
  %322 = vmatmul.f32.gmra.mxu0 %v153
  %v323 = vpop.f32.mrf.mxu0
  %v324 = vadd.f32 %v105, %v323
  %325 = vmatmul.f32.gmra.mxu0 %v156
  %v326 = vpop.f32.mrf.mxu0
  %v327 = vadd.f32 %v105, %v326
  %328 = vmatmul.f32.gmra.mxu0 %v159
  %v329 = vpop.f32.mrf.mxu0
  %v330 = vadd.f32 %v105, %v329
  %331 = vmatmul.f32.gmra.mxu0 %v162
  %v332 = vpop.f32.mrf.mxu0
  %v333 = vadd.f32 %v105, %v332
  %334 = vmatmul.f32.gmra.mxu0 %v165
  %v335 = vpop.f32.mrf.mxu0
  %v336 = vadd.f32 %v105, %v335
  %337 = vmatmul.f32.gmra.mxu0 %v168
  %v338 = vpop.f32.mrf.mxu0
  %v339 = vadd.f32 %v105, %v338
  %340 = vmatmul.f32.gmra.mxu0 %v171
  %v341 = vpop.f32.mrf.mxu0
  %v342 = vadd.f32 %v105, %v341
  %343 = vmatmul.f32.gmra.mxu0 %v174
  %v344 = vpop.f32.mrf.mxu0
  %v345 = vadd.f32 %v105, %v344
  %346 = vmatmul.f32.gmra.mxu0 %v177
  %v347 = vpop.f32.mrf.mxu0
  %v348 = vadd.f32 %v105, %v347
  %349 = vmatmul.f32.gmra.mxu0 %v180
  %v350 = vpop.f32.mrf.mxu0
  %v351 = vadd.f32 %v105, %v350
  %352 = vmatmul.f32.gmra.mxu0 %v183
  %v353 = vpop.f32.mrf.mxu0
  %v354 = vadd.f32 %v105, %v353
  %355 = vmatmul.f32.gmra.mxu0 %v186
  %v356 = vpop.f32.mrf.mxu0
  %v357 = vadd.f32 %v105, %v356
  %358 = vmatmul.f32.gmra.mxu0 %v189
  %v359 = vpop.f32.mrf.mxu0
  %v360 = vadd.f32 %v105, %v359
  %361 = vmatmul.f32.gmra.mxu0 %v192
  %v362 = vpop.f32.mrf.mxu0
  %v363 = vadd.f32 %v105, %v362
  %364 = vmatmul.f32.gmra.mxu0 %v195
  %v365 = vpop.f32.mrf.mxu0
  %v366 = vadd.f32 %v105, %v365
  %367 = vmatmul.f32.gmra.mxu0 %v198
  %v368 = vpop.f32.mrf.mxu0
  %v369 = vadd.f32 %v105, %v368
  %370 = vmatmul.f32.gmra.mxu0 %v201
  %v371 = vpop.f32.mrf.mxu0
  %v372 = vadd.f32 %v105, %v371
  %373 = vmatmul.f32.gmra.mxu0 %v204
  %v374 = vpop.f32.mrf.mxu0
  %v375 = vadd.f32 %v105, %v374
  %376 = vmatmul.f32.gmra.mxu0 %v207
  %v377 = vpop.f32.mrf.mxu0
  %v378 = vadd.f32 %v105, %v377
  %379 = vmatmul.f32.gmra.mxu0 %v210
  %v380 = vpop.f32.mrf.mxu0
  %v381 = vadd.f32 %v105, %v380
  %382 = vmatmul.f32.gmra.mxu0 %v213
  %v383 = vpop.f32.mrf.mxu0
  %v384 = vadd.f32 %v105, %v383
  %385 = vmatmul.f32.gmra.mxu0 %v216
  %v386 = vpop.f32.mrf.mxu0
  %v387 = vadd.f32 %v105, %v386
  %388 = vmatmul.f32.gmra.mxu0 %v219
  %v389 = vpop.f32.mrf.mxu0
  %v390 = vadd.f32 %v105, %v389
  %391 = vmatmul.f32.gmra.mxu0 %v222
  %v392 = vpop.f32.mrf.mxu0
  %v393 = vadd.f32 %v105, %v392
  %394 = vmatmul.f32.gmra.mxu0 %v225
  %v395 = vpop.f32.mrf.mxu0
  %v396 = vadd.f32 %v105, %v395
  %397 = vmatmul.f32.gmra.mxu0 %v228
  %v398 = vpop.f32.mrf.mxu0
  %v399 = vadd.f32 %v105, %v398
  %400 = vmatmul.f32.gmra.mxu0 %v231
  %v401 = vpop.f32.mrf.mxu0
  %v402 = vadd.f32 %v105, %v401
  %403 = vmatmul.f32.gmra.mxu0 %v234
  %v404 = vpop.f32.mrf.mxu0
  %v405 = vadd.f32 %v105, %v404
  %406 = vmatmul.f32.gmra.mxu0 %v237
  %v407 = vpop.f32.mrf.mxu0
  %v408 = vadd.f32 %v105, %v407
  %409 = vmatmul.f32.gmra.mxu0 %v240
  %v410 = vpop.f32.mrf.mxu0
  %v411 = vadd.f32 %v105, %v410
  %412 = vmatmul.f32.gmra.mxu0 %v243
  %v413 = vpop.f32.mrf.mxu0
  %v414 = vadd.f32 %v105, %v413
  %415 = vmatmul.f32.gmra.mxu0 %v246
  %v416 = vpop.f32.mrf.mxu0
  %v417 = vadd.f32 %v105, %v416
  %418 = vmatmul.f32.gmra.mxu0 %v249
  %v419 = vpop.f32.mrf.mxu0
  %v420 = vadd.f32 %v105, %v419
  %421 = vmatmul.f32.gmra.mxu0 %v252
  %v422 = vpop.f32.mrf.mxu0
  %v423 = vadd.f32 %v105, %v422
  %424 = vmatmul.f32.gmra.mxu0 %v255
  %v425 = vpop.f32.mrf.mxu0
  %v426 = vadd.f32 %v105, %v425
  %427 = vdwg.mxu0
  %428 = vmatpush.msra.mxu0 0.0
  %429 = vmatpush.msra.mxu0 0.0
  %430 = vmatpush.msra.mxu0 0.0
  %431 = vmatpush.msra.mxu0 0.0
  %432 = vmatpush.msra.mxu0 0.0
  %433 = vmatpush.msra.mxu0 0.0
  %434 = vmatpush.msra.mxu0 0.0
  %435 = vmatpush.msra.mxu0 0.0
  %436 = vmatpush.msra.mxu0 0.0
  %437 = vmatpush.msra.mxu0 0.0
  %438 = vmatpush.msra.mxu0 0.0
  %439 = vmatpush.msra.mxu0 0.0
  %440 = vmatpush.msra.mxu0 0.0
  %441 = vmatpush.msra.mxu0 0.0
  %442 = vmatpush.msra.mxu0 %v262
  %443 = vmatpush.msra.mxu0 %v100
  %444 = vmatmul.f32.gmra.mxu0 %v111
  %v445 = vpop.f32.mrf.mxu0
  %v446 = vadd.f32 %v106, %v445
  %447 = vmatmul.f32.gmra.mxu0 %v114
  %v448 = vpop.f32.mrf.mxu0
  %v449 = vadd.f32 %v106, %v448
  %450 = vmatmul.f32.gmra.mxu0 %v117
  %v451 = vpop.f32.mrf.mxu0
  %v452 = vadd.f32 %v106, %v451
  %453 = vmatmul.f32.gmra.mxu0 %v120
  %v454 = vpop.f32.mrf.mxu0
  %v455 = vadd.f32 %v106, %v454
  %456 = vmatmul.f32.gmra.mxu0 %v123
  %v457 = vpop.f32.mrf.mxu0
  %v458 = vadd.f32 %v106, %v457
  %459 = vmatmul.f32.gmra.mxu0 %v126
  %v460 = vpop.f32.mrf.mxu0
  %v461 = vadd.f32 %v106, %v460
  %462 = vmatmul.f32.gmra.mxu0 %v129
  %v463 = vpop.f32.mrf.mxu0
  %v464 = vadd.f32 %v106, %v463
  %465 = vmatmul.f32.gmra.mxu0 %v132
  %v466 = vpop.f32.mrf.mxu0
  %v467 = vadd.f32 %v106, %v466
  %468 = vmatmul.f32.gmra.mxu0 %v135
  %v469 = vpop.f32.mrf.mxu0
  %v470 = vadd.f32 %v106, %v469
  %471 = vmatmul.f32.gmra.mxu0 %v138
  %v472 = vpop.f32.mrf.mxu0
  %v473 = vadd.f32 %v106, %v472
  %474 = vmatmul.f32.gmra.mxu0 %v141
  %v475 = vpop.f32.mrf.mxu0
  %v476 = vadd.f32 %v106, %v475
  %477 = vmatmul.f32.gmra.mxu0 %v144
  %v478 = vpop.f32.mrf.mxu0
  %v479 = vadd.f32 %v106, %v478
  %480 = vmatmul.f32.gmra.mxu0 %v147
  %v481 = vpop.f32.mrf.mxu0
  %v482 = vadd.f32 %v106, %v481
  %483 = vmatmul.f32.gmra.mxu0 %v150
  %v484 = vpop.f32.mrf.mxu0
  %v485 = vadd.f32 %v106, %v484
  %486 = vmatmul.f32.gmra.mxu0 %v153
  %v487 = vpop.f32.mrf.mxu0
  %v488 = vadd.f32 %v106, %v487
  %489 = vmatmul.f32.gmra.mxu0 %v156
  %v490 = vpop.f32.mrf.mxu0
  %v491 = vadd.f32 %v106, %v490
  %492 = vmatmul.f32.gmra.mxu0 %v159
  %v493 = vpop.f32.mrf.mxu0
  %v494 = vadd.f32 %v106, %v493
  %495 = vmatmul.f32.gmra.mxu0 %v162
  %v496 = vpop.f32.mrf.mxu0
  %v497 = vadd.f32 %v106, %v496
  %498 = vmatmul.f32.gmra.mxu0 %v165
  %v499 = vpop.f32.mrf.mxu0
  %v500 = vadd.f32 %v106, %v499
  %501 = vmatmul.f32.gmra.mxu0 %v168
  %v502 = vpop.f32.mrf.mxu0
  %v503 = vadd.f32 %v106, %v502
  %504 = vmatmul.f32.gmra.mxu0 %v171
  %v505 = vpop.f32.mrf.mxu0
  %v506 = vadd.f32 %v106, %v505
  %507 = vmatmul.f32.gmra.mxu0 %v174
  %v508 = vpop.f32.mrf.mxu0
  %v509 = vadd.f32 %v106, %v508
  %510 = vmatmul.f32.gmra.mxu0 %v177
  %v511 = vpop.f32.mrf.mxu0
  %v512 = vadd.f32 %v106, %v511
  %513 = vmatmul.f32.gmra.mxu0 %v180
  %v514 = vpop.f32.mrf.mxu0
  %v515 = vadd.f32 %v106, %v514
  %516 = vmatmul.f32.gmra.mxu0 %v183
  %v517 = vpop.f32.mrf.mxu0
  %v518 = vadd.f32 %v106, %v517
  %519 = vmatmul.f32.gmra.mxu0 %v186
  %v520 = vpop.f32.mrf.mxu0
  %v521 = vadd.f32 %v106, %v520
  %522 = vmatmul.f32.gmra.mxu0 %v189
  %v523 = vpop.f32.mrf.mxu0
  %v524 = vadd.f32 %v106, %v523
  %525 = vmatmul.f32.gmra.mxu0 %v192
  %v526 = vpop.f32.mrf.mxu0
  %v527 = vadd.f32 %v106, %v526
  %528 = vmatmul.f32.gmra.mxu0 %v195
  %v529 = vpop.f32.mrf.mxu0
  %v530 = vadd.f32 %v106, %v529
  %531 = vmatmul.f32.gmra.mxu0 %v198
  %v532 = vpop.f32.mrf.mxu0
  %v533 = vadd.f32 %v106, %v532
  %534 = vmatmul.f32.gmra.mxu0 %v201
  %v535 = vpop.f32.mrf.mxu0
  %v536 = vadd.f32 %v106, %v535
  %537 = vmatmul.f32.gmra.mxu0 %v204
  %v538 = vpop.f32.mrf.mxu0
  %v539 = vadd.f32 %v106, %v538
  %540 = vmatmul.f32.gmra.mxu0 %v207
  %v541 = vpop.f32.mrf.mxu0
  %v542 = vadd.f32 %v106, %v541
  %543 = vmatmul.f32.gmra.mxu0 %v210
  %v544 = vpop.f32.mrf.mxu0
  %v545 = vadd.f32 %v106, %v544
  %546 = vmatmul.f32.gmra.mxu0 %v213
  %v547 = vpop.f32.mrf.mxu0
  %v548 = vadd.f32 %v106, %v547
  %549 = vmatmul.f32.gmra.mxu0 %v216
  %v550 = vpop.f32.mrf.mxu0
  %v551 = vadd.f32 %v106, %v550
  %552 = vmatmul.f32.gmra.mxu0 %v219
  %v553 = vpop.f32.mrf.mxu0
  %v554 = vadd.f32 %v106, %v553
  %555 = vmatmul.f32.gmra.mxu0 %v222
  %v556 = vpop.f32.mrf.mxu0
  %v557 = vadd.f32 %v106, %v556
  %558 = vmatmul.f32.gmra.mxu0 %v225
  %v559 = vpop.f32.mrf.mxu0
  %v560 = vadd.f32 %v106, %v559
  %561 = vmatmul.f32.gmra.mxu0 %v228
  %v562 = vpop.f32.mrf.mxu0
  %v563 = vadd.f32 %v106, %v562
  %564 = vmatmul.f32.gmra.mxu0 %v231
  %v565 = vpop.f32.mrf.mxu0
  %v566 = vadd.f32 %v106, %v565
  %567 = vmatmul.f32.gmra.mxu0 %v234
  %v568 = vpop.f32.mrf.mxu0
  %v569 = vadd.f32 %v106, %v568
  %570 = vmatmul.f32.gmra.mxu0 %v237
  %v571 = vpop.f32.mrf.mxu0
  %v572 = vadd.f32 %v106, %v571
  %573 = vmatmul.f32.gmra.mxu0 %v240
  %v574 = vpop.f32.mrf.mxu0
  %v575 = vadd.f32 %v106, %v574
  %576 = vmatmul.f32.gmra.mxu0 %v243
  %v577 = vpop.f32.mrf.mxu0
  %v578 = vadd.f32 %v106, %v577
  %579 = vmatmul.f32.gmra.mxu0 %v246
  %v580 = vpop.f32.mrf.mxu0
  %v581 = vadd.f32 %v106, %v580
  %582 = vmatmul.f32.gmra.mxu0 %v249
  %v583 = vpop.f32.mrf.mxu0
  %v584 = vadd.f32 %v106, %v583
  %585 = vmatmul.f32.gmra.mxu0 %v252
  %v586 = vpop.f32.mrf.mxu0
  %v587 = vadd.f32 %v106, %v586
  %588 = vmatmul.f32.gmra.mxu0 %v255
  %v589 = vpop.f32.mrf.mxu0
  %v590 = vadd.f32 %v106, %v589
  %591 = vdwg.mxu0
  %v592 = vmax.f32 %v282, 0.0
  %v593 = vmax.f32 %v446, 0.0
  %v594 = vmax.f32 %v285, 0.0
  %v595 = vmax.f32 %v449, 0.0
  %v596 = vmax.f32 %v288, 0.0
  %v597 = vmax.f32 %v452, 0.0
  %v598 = vmax.f32 %v291, 0.0
  %v599 = vmax.f32 %v455, 0.0
  %v600 = vmax.f32 %v294, 0.0
  %v601 = vmax.f32 %v458, 0.0
  %v602 = vmax.f32 %v297, 0.0
  %v603 = vmax.f32 %v461, 0.0
  %v604 = vmax.f32 %v300, 0.0
  %v605 = vmax.f32 %v464, 0.0
  %v606 = vmax.f32 %v303, 0.0
  %v607 = vmax.f32 %v467, 0.0
  %v608 = vmax.f32 %v306, 0.0
  %v609 = vmax.f32 %v470, 0.0
  %v610 = vmax.f32 %v309, 0.0
  %v611 = vmax.f32 %v473, 0.0
  %v612 = vmax.f32 %v312, 0.0
  %v613 = vmax.f32 %v476, 0.0
  %v614 = vmax.f32 %v315, 0.0
  %v615 = vmax.f32 %v479, 0.0
  %v616 = vmax.f32 %v318, 0.0
  %v617 = vmax.f32 %v482, 0.0
  %v618 = vmax.f32 %v321, 0.0
  %v619 = vmax.f32 %v485, 0.0
  %v620 = vmax.f32 %v324, 0.0
  %v621 = vmax.f32 %v488, 0.0
  %v622 = vmax.f32 %v327, 0.0
  %v623 = vmax.f32 %v491, 0.0
  %v624 = vmax.f32 %v330, 0.0
  %v625 = vmax.f32 %v494, 0.0
  %v626 = vmax.f32 %v333, 0.0
  %v627 = vmax.f32 %v497, 0.0
  %v628 = vmax.f32 %v336, 0.0
  %v629 = vmax.f32 %v500, 0.0
  %v630 = vmax.f32 %v339, 0.0
  %v631 = vmax.f32 %v503, 0.0
  %v632 = vmax.f32 %v342, 0.0
  %v633 = vmax.f32 %v506, 0.0
  %v634 = vmax.f32 %v345, 0.0
  %v635 = vmax.f32 %v509, 0.0
  %v636 = vmax.f32 %v348, 0.0
  %v637 = vmax.f32 %v512, 0.0
  %v638 = vmax.f32 %v351, 0.0
  %v639 = vmax.f32 %v515, 0.0
  %v640 = vmax.f32 %v354, 0.0
  %v641 = vmax.f32 %v518, 0.0
  %v642 = vmax.f32 %v357, 0.0
  %v643 = vmax.f32 %v521, 0.0
  %v644 = vmax.f32 %v360, 0.0
  %v645 = vmax.f32 %v524, 0.0
  %v646 = vmax.f32 %v363, 0.0
  %v647 = vmax.f32 %v527, 0.0
  %v648 = vmax.f32 %v366, 0.0
  %v649 = vmax.f32 %v530, 0.0
  %v650 = vmax.f32 %v369, 0.0
  %v651 = vmax.f32 %v533, 0.0
  %v652 = vmax.f32 %v372, 0.0
  %v653 = vmax.f32 %v536, 0.0
  %v654 = vmax.f32 %v375, 0.0
  %v655 = vmax.f32 %v539, 0.0
  %v656 = vmax.f32 %v378, 0.0
  %v657 = vmax.f32 %v542, 0.0
  %v658 = vmax.f32 %v381, 0.0
  %v659 = vmax.f32 %v545, 0.0
  %v660 = vmax.f32 %v384, 0.0
  %v661 = vmax.f32 %v548, 0.0
  %v662 = vmax.f32 %v387, 0.0
  %v663 = vmax.f32 %v551, 0.0
  %v664 = vmax.f32 %v390, 0.0
  %v665 = vmax.f32 %v554, 0.0
  %v666 = vmax.f32 %v393, 0.0
  %v667 = vmax.f32 %v557, 0.0
  %v668 = vmax.f32 %v396, 0.0
  %v669 = vmax.f32 %v560, 0.0
  %v670 = vmax.f32 %v399, 0.0
  %v671 = vmax.f32 %v563, 0.0
  %v672 = vmax.f32 %v402, 0.0
  %v673 = vmax.f32 %v566, 0.0
  %v674 = vmax.f32 %v405, 0.0
  %v675 = vmax.f32 %v569, 0.0
  %v676 = vmax.f32 %v408, 0.0
  %v677 = vmax.f32 %v572, 0.0
  %v678 = vmax.f32 %v411, 0.0
  %v679 = vmax.f32 %v575, 0.0
  %v680 = vmax.f32 %v414, 0.0
  %v681 = vmax.f32 %v578, 0.0
  %v682 = vmax.f32 %v417, 0.0
  %v683 = vmax.f32 %v581, 0.0
  %v684 = vmax.f32 %v420, 0.0
  %v685 = vmax.f32 %v584, 0.0
  %v686 = vmax.f32 %v423, 0.0
  %v687 = vmax.f32 %v587, 0.0
  %v688 = vmax.f32 %v426, 0.0
  %v689 = vmax.f32 %v590, 0.0
  %v690 = vld [vmem:[%s1] sm:$0xff]
  %v691 = vld [vmem:[%s1 + $0x8] sm:$0xff]
  %v692 = vld [vmem:[%s1 + $0x10] sm:$0xff]
  %v693 = vld [vmem:[%s1 + $0x18] sm:$0xff]
  %v694 = vld [vmem:[%s1 + $0x20] sm:$0xff]
  %v695 = vld [vmem:[%s1 + $0x28] sm:$0xff]
  %v696 = vld [vmem:[%s1 + $0x30] sm:$0xff]
  %v697 = vld [vmem:[%s1 + $0x38] sm:$0xff]
  %v698 = vld [vmem:[%s1 + $0x40] sm:$0xff]
  %v699 = vld [vmem:[%s1 + $0x48] sm:$0xff]
  %v700 = vld [vmem:[%s1 + $0x50] sm:$0xff]
  %v701 = vld [vmem:[%s1 + $0x58] sm:$0xff]
  %v702 = vld [vmem:[%s1 + $0x60] sm:$0xff]
  %v703 = vld [vmem:[%s1 + $0x68] sm:$0xff]
  %v704 = vld [vmem:[%s1 + $0x70] sm:$0xff]
  %v705 = vld [vmem:[%s1 + $0x78] sm:$0xff]
  %v706 = vld [vmem:[%s1 + $0x80] sm:$0xff]
  %v707 = vld [vmem:[%s1 + $0x88] sm:$0xff]
  %v708 = vld [vmem:[%s1 + $0x90] sm:$0xff]
  %v709 = vld [vmem:[%s1 + $0x98] sm:$0xff]
  %v710 = vld [vmem:[%s1 + $0xa0] sm:$0xff]
  %v711 = vld [vmem:[%s1 + $0xa8] sm:$0xff]
  %v712 = vld [vmem:[%s1 + $0xb0] sm:$0xff]
  %v713 = vld [vmem:[%s1 + $0xb8] sm:$0xff]
  %v714 = vld [vmem:[%s1 + $0xc0] sm:$0xff]
  %v715 = vld [vmem:[%s1 + $0xc8] sm:$0xff]
  %v716 = vld [vmem:[%s1 + $0xd0] sm:$0xff]
  %v717 = vld [vmem:[%s1 + $0xd8] sm:$0xff]
  %v718 = vld [vmem:[%s1 + $0xe0] sm:$0xff]
  %v719 = vld [vmem:[%s1 + $0xe8] sm:$0xff]
  %v720 = vld [vmem:[%s1 + $0xf0] sm:$0xff]
  %v721 = vld [vmem:[%s1 + $0xf8] sm:$0xff]
  %v722 = vld [vmem:[%s1 + $0x100] sm:$0xff]
  %v723 = vld [vmem:[%s1 + $0x108] sm:$0xff]
  %v724 = vld [vmem:[%s1 + $0x110] sm:$0xff]
  %v725 = vld [vmem:[%s1 + $0x118] sm:$0xff]
  %v726 = vld [vmem:[%s1 + $0x120] sm:$0xff]
  %v727 = vld [vmem:[%s1 + $0x128] sm:$0xff]
  %v728 = vld [vmem:[%s1 + $0x130] sm:$0xff]
  %v729 = vld [vmem:[%s1 + $0x138] sm:$0xff]
  %v730 = vld [vmem:[%s1 + $0x140] sm:$0xff]
  %v731 = vld [vmem:[%s1 + $0x148] sm:$0xff]
  %v732 = vld [vmem:[%s1 + $0x150] sm:$0xff]
  %v733 = vld [vmem:[%s1 + $0x158] sm:$0xff]
  %v734 = vld [vmem:[%s1 + $0x160] sm:$0xff]
  %v735 = vld [vmem:[%s1 + $0x168] sm:$0xff]
  %v736 = vld [vmem:[%s1 + $0x170] sm:$0xff]
  %v737 = vld [vmem:[%s1 + $0x178] sm:$0xff]
  %v738 = vld [vmem:[%s1 + $0x180] sm:$0xff]
  %v739 = vunpack.c.l.bf16 %v690
  %v740 = vunpack.c.h.bf16 %v690
  %v741 = vunpack.c.l.bf16 %v691
  %v742 = vunpack.c.h.bf16 %v691
  %v743 = vunpack.c.l.bf16 %v692
  %v744 = vunpack.c.h.bf16 %v692
  %v745 = vunpack.c.l.bf16 %v693
  %v746 = vunpack.c.h.bf16 %v693
  %v747 = vunpack.c.l.bf16 %v694
  %v748 = vunpack.c.h.bf16 %v694
  %v749 = vunpack.c.l.bf16 %v695
  %v750 = vunpack.c.h.bf16 %v695
  %v751 = vunpack.c.l.bf16 %v696
  %v752 = vunpack.c.h.bf16 %v696
  %v753 = vunpack.c.l.bf16 %v697
  %v754 = vunpack.c.h.bf16 %v697
  %v755 = vunpack.c.l.bf16 %v698
  %v756 = vunpack.c.h.bf16 %v698
  %v757 = vunpack.c.l.bf16 %v699
  %v758 = vunpack.c.h.bf16 %v699
  %v759 = vunpack.c.l.bf16 %v700
  %v760 = vunpack.c.h.bf16 %v700
  %v761 = vunpack.c.l.bf16 %v701
  %v762 = vunpack.c.h.bf16 %v701
  %v763 = vunpack.c.l.bf16 %v702
  %v764 = vunpack.c.h.bf16 %v702
  %v765 = vunpack.c.l.bf16 %v703
  %v766 = vunpack.c.h.bf16 %v703
  %v767 = vunpack.c.l.bf16 %v704
  %v768 = vunpack.c.h.bf16 %v704
  %v769 = vunpack.c.l.bf16 %v705
  %v770 = vunpack.c.h.bf16 %v705
  %v771 = vunpack.c.l.bf16 %v706
  %v772 = vunpack.c.h.bf16 %v706
  %v773 = vunpack.c.l.bf16 %v707
  %v774 = vunpack.c.h.bf16 %v707
  %v775 = vunpack.c.l.bf16 %v708
  %v776 = vunpack.c.h.bf16 %v708
  %v777 = vunpack.c.l.bf16 %v709
  %v778 = vunpack.c.h.bf16 %v709
  %v779 = vunpack.c.l.bf16 %v710
  %v780 = vunpack.c.h.bf16 %v710
  %v781 = vunpack.c.l.bf16 %v711
  %v782 = vunpack.c.h.bf16 %v711
  %v783 = vunpack.c.l.bf16 %v712
  %v784 = vunpack.c.h.bf16 %v712
  %v785 = vunpack.c.l.bf16 %v713
  %v786 = vunpack.c.h.bf16 %v713
  %v787 = vunpack.c.l.bf16 %v714
  %v788 = vunpack.c.h.bf16 %v714
  %v789 = vunpack.c.l.bf16 %v715
  %v790 = vunpack.c.h.bf16 %v715
  %v791 = vunpack.c.l.bf16 %v716
  %v792 = vunpack.c.h.bf16 %v716
  %v793 = vunpack.c.l.bf16 %v717
  %v794 = vunpack.c.h.bf16 %v717
  %v795 = vunpack.c.l.bf16 %v718
  %v796 = vunpack.c.h.bf16 %v718
  %v797 = vunpack.c.l.bf16 %v719
  %v798 = vunpack.c.h.bf16 %v719
  %v799 = vunpack.c.l.bf16 %v720
  %v800 = vunpack.c.h.bf16 %v720
  %v801 = vunpack.c.l.bf16 %v721
  %v802 = vunpack.c.h.bf16 %v721
  %v803 = vunpack.c.l.bf16 %v722
  %v804 = vunpack.c.h.bf16 %v722
  %v805 = vunpack.c.l.bf16 %v723
  %v806 = vunpack.c.h.bf16 %v723
  %v807 = vunpack.c.l.bf16 %v724
  %v808 = vunpack.c.h.bf16 %v724
  %v809 = vunpack.c.l.bf16 %v725
  %v810 = vunpack.c.h.bf16 %v725
  %v811 = vunpack.c.l.bf16 %v726
  %v812 = vunpack.c.h.bf16 %v726
  %v813 = vunpack.c.l.bf16 %v727
  %v814 = vunpack.c.h.bf16 %v727
  %v815 = vunpack.c.l.bf16 %v728
  %v816 = vunpack.c.h.bf16 %v728
  %v817 = vunpack.c.l.bf16 %v729
  %v818 = vunpack.c.h.bf16 %v729
  %v819 = vunpack.c.l.bf16 %v730
  %v820 = vunpack.c.h.bf16 %v730
  %v821 = vunpack.c.l.bf16 %v731
  %v822 = vunpack.c.h.bf16 %v731
  %v823 = vunpack.c.l.bf16 %v732
  %v824 = vunpack.c.h.bf16 %v732
  %v825 = vunpack.c.l.bf16 %v733
  %v826 = vunpack.c.h.bf16 %v733
  %v827 = vunpack.c.l.bf16 %v734
  %v828 = vunpack.c.h.bf16 %v734
  %v829 = vunpack.c.l.bf16 %v735
  %v830 = vunpack.c.h.bf16 %v735
  %v831 = vunpack.c.l.bf16 %v736
  %v832 = vunpack.c.h.bf16 %v736
  %v833 = vunpack.c.l.bf16 %v737
  %v834 = vunpack.c.h.bf16 %v737
  %v835 = vunpack.c.l.bf16 %v738
  %v836 = vunpack.c.h.bf16 %v738
  %v837 = vmul.f32 %v592, %v739
  %v838 = vmul.f32 %v593, %v740
  %v839 = vmul.f32 %v594, %v741
  %v840 = vmul.f32 %v595, %v742
  %v841 = vmul.f32 %v596, %v743
  %v842 = vmul.f32 %v597, %v744
  %v843 = vmul.f32 %v598, %v745
  %v844 = vmul.f32 %v599, %v746
  %v845 = vmul.f32 %v600, %v747
  %v846 = vmul.f32 %v601, %v748
  %v847 = vmul.f32 %v602, %v749
  %v848 = vmul.f32 %v603, %v750
  %v849 = vmul.f32 %v604, %v751
  %v850 = vmul.f32 %v605, %v752
  %v851 = vmul.f32 %v606, %v753
  %v852 = vmul.f32 %v607, %v754
  %v853 = vmul.f32 %v608, %v755
  %v854 = vmul.f32 %v609, %v756
  %v855 = vmul.f32 %v610, %v757
  %v856 = vmul.f32 %v611, %v758
  %v857 = vmul.f32 %v612, %v759
  %v858 = vmul.f32 %v613, %v760
  %v859 = vmul.f32 %v614, %v761
  %v860 = vmul.f32 %v615, %v762
  %v861 = vmul.f32 %v616, %v763
  %v862 = vmul.f32 %v617, %v764
  %v863 = vmul.f32 %v618, %v765
  %v864 = vmul.f32 %v619, %v766
  %v865 = vmul.f32 %v620, %v767
  %v866 = vmul.f32 %v621, %v768
  %v867 = vmul.f32 %v622, %v769
  %v868 = vmul.f32 %v623, %v770
  %v869 = vmul.f32 %v624, %v771
  %v870 = vmul.f32 %v625, %v772
  %v871 = vmul.f32 %v626, %v773
  %v872 = vmul.f32 %v627, %v774
  %v873 = vmul.f32 %v628, %v775
  %v874 = vmul.f32 %v629, %v776
  %v875 = vmul.f32 %v630, %v777
  %v876 = vmul.f32 %v631, %v778
  %v877 = vmul.f32 %v632, %v779
  %v878 = vmul.f32 %v633, %v780
  %v879 = vmul.f32 %v634, %v781
  %v880 = vmul.f32 %v635, %v782
  %v881 = vmul.f32 %v636, %v783
  %v882 = vmul.f32 %v637, %v784
  %v883 = vmul.f32 %v638, %v785
  %v884 = vmul.f32 %v639, %v786
  %v885 = vmul.f32 %v640, %v787
  %v886 = vmul.f32 %v641, %v788
  %v887 = vmul.f32 %v642, %v789
  %v888 = vmul.f32 %v643, %v790
  %v889 = vmul.f32 %v644, %v791
  %v890 = vmul.f32 %v645, %v792
  %v891 = vmul.f32 %v646, %v793
  %v892 = vmul.f32 %v647, %v794
  %v893 = vmul.f32 %v648, %v795
  %v894 = vmul.f32 %v649, %v796
  %v895 = vmul.f32 %v650, %v797
  %v896 = vmul.f32 %v651, %v798
  %v897 = vmul.f32 %v652, %v799
  %v898 = vmul.f32 %v653, %v800
  %v899 = vmul.f32 %v654, %v801
  %v900 = vmul.f32 %v655, %v802
  %v901 = vmul.f32 %v656, %v803
  %v902 = vmul.f32 %v657, %v804
  %v903 = vmul.f32 %v658, %v805
  %v904 = vmul.f32 %v659, %v806
  %v905 = vmul.f32 %v660, %v807
  %v906 = vmul.f32 %v661, %v808
  %v907 = vmul.f32 %v662, %v809
  %v908 = vmul.f32 %v663, %v810
  %v909 = vmul.f32 %v664, %v811
  %v910 = vmul.f32 %v665, %v812
  %v911 = vmul.f32 %v666, %v813
  %v912 = vmul.f32 %v667, %v814
  %v913 = vmul.f32 %v668, %v815
  %v914 = vmul.f32 %v669, %v816
  %v915 = vmul.f32 %v670, %v817
  %v916 = vmul.f32 %v671, %v818
  %v917 = vmul.f32 %v672, %v819
  %v918 = vmul.f32 %v673, %v820
  %v919 = vmul.f32 %v674, %v821
  %v920 = vmul.f32 %v675, %v822
  %v921 = vmul.f32 %v676, %v823
  %v922 = vmul.f32 %v677, %v824
  %v923 = vmul.f32 %v678, %v825
  %v924 = vmul.f32 %v679, %v826
  %v925 = vmul.f32 %v680, %v827
  %v926 = vmul.f32 %v681, %v828
  %v927 = vmul.f32 %v682, %v829
  %v928 = vmul.f32 %v683, %v830
  %v929 = vmul.f32 %v684, %v831
  %v930 = vmul.f32 %v685, %v832
  %v931 = vmul.f32 %v686, %v833
  %v932 = vmul.f32 %v687, %v834
  %v933 = vmul.f32 %v688, %v835
  %v934 = vmul.f32 %v689, %v836
  %v935 = vpack.c.bf16 %v839, %v837
  %v936 = vpack.c.bf16 %v840, %v838
  %v937 = vpack.c.bf16 %v843, %v841
  %v938 = vpack.c.bf16 %v844, %v842
  %v939 = vpack.c.bf16 %v847, %v845
  %v940 = vpack.c.bf16 %v848, %v846
  %v941 = vpack.c.bf16 %v851, %v849
  %v942 = vpack.c.bf16 %v852, %v850
  %v943 = vpack.c.bf16 %v855, %v853
  %v944 = vpack.c.bf16 %v856, %v854
  %v945 = vpack.c.bf16 %v859, %v857
  %v946 = vpack.c.bf16 %v860, %v858
  %v947 = vpack.c.bf16 %v863, %v861
  %v948 = vpack.c.bf16 %v864, %v862
  %v949 = vpack.c.bf16 %v867, %v865
  %v950 = vpack.c.bf16 %v868, %v866
  %v951 = vpack.c.bf16 %v871, %v869
  %v952 = vpack.c.bf16 %v872, %v870
  %v953 = vpack.c.bf16 %v875, %v873
  %v954 = vpack.c.bf16 %v876, %v874
  %v955 = vpack.c.bf16 %v879, %v877
  %v956 = vpack.c.bf16 %v880, %v878
  %v957 = vpack.c.bf16 %v883, %v881
  %v958 = vpack.c.bf16 %v884, %v882
  %v959 = vpack.c.bf16 %v887, %v885
  %v960 = vpack.c.bf16 %v888, %v886
  %v961 = vpack.c.bf16 %v891, %v889
  %v962 = vpack.c.bf16 %v892, %v890
  %v963 = vpack.c.bf16 %v895, %v893
  %v964 = vpack.c.bf16 %v896, %v894
  %v965 = vpack.c.bf16 %v899, %v897
  %v966 = vpack.c.bf16 %v900, %v898
  %v967 = vpack.c.bf16 %v903, %v901
  %v968 = vpack.c.bf16 %v904, %v902
  %v969 = vpack.c.bf16 %v907, %v905
  %v970 = vpack.c.bf16 %v908, %v906
  %v971 = vpack.c.bf16 %v911, %v909
  %v972 = vpack.c.bf16 %v912, %v910
  %v973 = vpack.c.bf16 %v915, %v913
  %v974 = vpack.c.bf16 %v916, %v914
  %v975 = vpack.c.bf16 %v919, %v917
  %v976 = vpack.c.bf16 %v920, %v918
  %v977 = vpack.c.bf16 %v923, %v921
  %v978 = vpack.c.bf16 %v924, %v922
  %v979 = vpack.c.bf16 %v927, %v925
  %v980 = vpack.c.bf16 %v928, %v926
  %v981 = vpack.c.bf16 %v931, %v929
  %v982 = vpack.c.bf16 %v932, %v930
  %v983 = vpack.c.bf16 %v933, %v933
  %v984 = vpack.c.bf16 %v934, %v934
  %v985 = vld [vmem:[%s4] sm:$0xf]
  %v986 = vld [vmem:[%s4 + $0x4] sm:$0xf]
  %v987 = vld [vmem:[%s4 + $0x8] sm:$0xf]
  %v988 = vld [vmem:[%s4 + $0xc] sm:$0xf]
  %v989 = vld [vmem:[%s4 + $0x10] sm:$0xf]
  %v990 = vld [vmem:[%s4 + $0x14] sm:$0xf]
  %v991 = vld [vmem:[%s4 + $0x18] sm:$0xf]
  %v992 = vld [vmem:[%s4 + $0x1c] sm:$0xf]
  %v993 = vld [vmem:[%s4 + $0x20] sm:$0xf]
  %v994 = vld [vmem:[%s4 + $0x24] sm:$0xf]
  %v995 = vld [vmem:[%s4 + $0x28] sm:$0xf]
  %v996 = vld [vmem:[%s4 + $0x2c] sm:$0xf]
  %v997 = vld [vmem:[%s4 + $0x30] sm:$0xf]
  %v998 = vld [vmem:[%s4 + $0x34] sm:$0xf]
  %v999 = vld [vmem:[%s4 + $0x38] sm:$0xf]
  %v1000 = vld [vmem:[%s4 + $0x3c] sm:$0xf]
  %v1001 = vld [vmem:[%s4 + $0x40] sm:$0xf]
  %v1002 = vld [vmem:[%s4 + $0x44] sm:$0xf]
  %v1003 = vld [vmem:[%s5] sm:$0x1]
  %v1005 = vperm.slane %v1003, 0
  %v1025 = vunpack.c.l.b16 %v985
  %v1026 = vunpack.c.l.b16 %v986
  %v1027 = vunpack.c.l.b16 %v987
  %v1028 = vunpack.c.l.b16 %v988
  %v1029 = vunpack.c.l.b16 %v989
  %v1030 = vunpack.c.l.b16 %v990
  %v1031 = vunpack.c.l.b16 %v991
  %v1032 = vunpack.c.l.b16 %v992
  %v1033 = vunpack.c.l.b16 %v993
  %v1034 = vunpack.c.l.b16 %v994
  %v1035 = vunpack.c.l.b16 %v995
  %v1036 = vunpack.c.l.b16 %v996
  %v1037 = vunpack.c.l.b16 %v997
  %v1038 = vunpack.c.l.b16 %v998
  %v1039 = vunpack.c.l.b16 %v999
  %v1040 = vunpack.c.l.b16 %v1000
  %v1041 = vunpack.c.l.b16 %v1001
  %v1042 = vunpack.c.l.b16 %v1002
  %v1043 = vpack.c.b16 %v1026, %v1025
  %v1044 = vpack.c.b16 %v1028, %v1027
  %v1045 = vpack.c.b16 %v1030, %v1029
  %v1046 = vpack.c.b16 %v1032, %v1031
  %v1047 = vpack.c.b16 %v1034, %v1033
  %v1048 = vpack.c.b16 %v1036, %v1035
  %v1049 = vpack.c.b16 %v1038, %v1037
  %v1050 = vpack.c.b16 %v1040, %v1039
  %v1051 = vpack.c.b16 %v1042, %v1041
  %vm1061 = vcmask 130048
  %v1063 = vsel %vm1061, %v936, 0
  %v1066 = vsel %vm1061, %v938, 0
  %v1069 = vsel %vm1061, %v940, 0
  %v1072 = vsel %vm1061, %v942, 0
  %v1075 = vsel %vm1061, %v944, 0
  %v1078 = vsel %vm1061, %v946, 0
  %v1081 = vsel %vm1061, %v948, 0
  %v1084 = vsel %vm1061, %v950, 0
  %v1087 = vsel %vm1061, %v952, 0
  %v1090 = vsel %vm1061, %v954, 0
  %v1093 = vsel %vm1061, %v956, 0
  %v1096 = vsel %vm1061, %v958, 0
  %v1099 = vsel %vm1061, %v960, 0
  %v1102 = vsel %vm1061, %v962, 0
  %v1105 = vsel %vm1061, %v964, 0
  %v1108 = vsel %vm1061, %v966, 0
  %v1111 = vsel %vm1061, %v968, 0
  %v1114 = vsel %vm1061, %v970, 0
  %v1117 = vsel %vm1061, %v972, 0
  %v1120 = vsel %vm1061, %v974, 0
  %v1123 = vsel %vm1061, %v976, 0
  %v1126 = vsel %vm1061, %v978, 0
  %v1129 = vsel %vm1061, %v980, 0
  %v1132 = vsel %vm1061, %v982, 0
  %v1135 = vsel %vm1061, %v984, 0
  %1137 = vmatpush.bf16.msra.mxu0 %v1050
  %1138 = vmatpush.bf16.msra.mxu0 %v1049
  %1139 = vmatpush.bf16.msra.mxu0 %v1048
  %1140 = vmatpush.bf16.msra.mxu0 %v1047
  %1141 = vmatpush.bf16.msra.mxu0 %v1046
  %1142 = vmatpush.bf16.msra.mxu0 %v1045
  %1143 = vmatpush.bf16.msra.mxu0 %v1044
  %1144 = vmatpush.bf16.msra.mxu0 %v1043
  %1145 = vmatmul.bf16.gmra.mxu0 %v935
  %v1146 = vpop.f32.mrf.mxu0
  %v1147 = vadd.f32 %v1005, %v1146
  %v1148 = vpop.f32.mrf.mxu0
  %v1149 = vadd.f32 %v1005, %v1148
  %1150 = vmatmul.bf16.gmra.mxu0 %v937
  %v1151 = vpop.f32.mrf.mxu0
  %v1152 = vadd.f32 %v1005, %v1151
  %v1153 = vpop.f32.mrf.mxu0
  %v1154 = vadd.f32 %v1005, %v1153
  %1155 = vmatmul.bf16.gmra.mxu0 %v939
  %v1156 = vpop.f32.mrf.mxu0
  %v1157 = vadd.f32 %v1005, %v1156
  %v1158 = vpop.f32.mrf.mxu0
  %v1159 = vadd.f32 %v1005, %v1158
  %1160 = vmatmul.bf16.gmra.mxu0 %v941
  %v1161 = vpop.f32.mrf.mxu0
  %v1162 = vadd.f32 %v1005, %v1161
  %v1163 = vpop.f32.mrf.mxu0
  %v1164 = vadd.f32 %v1005, %v1163
  %1165 = vmatmul.bf16.gmra.mxu0 %v943
  %v1166 = vpop.f32.mrf.mxu0
  %v1167 = vadd.f32 %v1005, %v1166
  %v1168 = vpop.f32.mrf.mxu0
  %v1169 = vadd.f32 %v1005, %v1168
  %1170 = vmatmul.bf16.gmra.mxu0 %v945
  %v1171 = vpop.f32.mrf.mxu0
  %v1172 = vadd.f32 %v1005, %v1171
  %v1173 = vpop.f32.mrf.mxu0
  %v1174 = vadd.f32 %v1005, %v1173
  %1175 = vmatmul.bf16.gmra.mxu0 %v947
  %v1176 = vpop.f32.mrf.mxu0
  %v1177 = vadd.f32 %v1005, %v1176
  %v1178 = vpop.f32.mrf.mxu0
  %v1179 = vadd.f32 %v1005, %v1178
  %1180 = vmatmul.bf16.gmra.mxu0 %v949
  %v1181 = vpop.f32.mrf.mxu0
  %v1182 = vadd.f32 %v1005, %v1181
  %v1183 = vpop.f32.mrf.mxu0
  %v1184 = vadd.f32 %v1005, %v1183
  %1185 = vmatmul.bf16.gmra.mxu0 %v951
  %v1186 = vpop.f32.mrf.mxu0
  %v1187 = vadd.f32 %v1005, %v1186
  %v1188 = vpop.f32.mrf.mxu0
  %v1189 = vadd.f32 %v1005, %v1188
  %1190 = vmatmul.bf16.gmra.mxu0 %v953
  %v1191 = vpop.f32.mrf.mxu0
  %v1192 = vadd.f32 %v1005, %v1191
  %v1193 = vpop.f32.mrf.mxu0
  %v1194 = vadd.f32 %v1005, %v1193
  %1195 = vmatmul.bf16.gmra.mxu0 %v955
  %v1196 = vpop.f32.mrf.mxu0
  %v1197 = vadd.f32 %v1005, %v1196
  %v1198 = vpop.f32.mrf.mxu0
  %v1199 = vadd.f32 %v1005, %v1198
  %1200 = vmatmul.bf16.gmra.mxu0 %v957
  %v1201 = vpop.f32.mrf.mxu0
  %v1202 = vadd.f32 %v1005, %v1201
  %v1203 = vpop.f32.mrf.mxu0
  %v1204 = vadd.f32 %v1005, %v1203
  %1205 = vmatmul.bf16.gmra.mxu0 %v959
  %v1206 = vpop.f32.mrf.mxu0
  %v1207 = vadd.f32 %v1005, %v1206
  %v1208 = vpop.f32.mrf.mxu0
  %v1209 = vadd.f32 %v1005, %v1208
  %1210 = vmatmul.bf16.gmra.mxu0 %v961
  %v1211 = vpop.f32.mrf.mxu0
  %v1212 = vadd.f32 %v1005, %v1211
  %v1213 = vpop.f32.mrf.mxu0
  %v1214 = vadd.f32 %v1005, %v1213
  %1215 = vmatmul.bf16.gmra.mxu0 %v963
  %v1216 = vpop.f32.mrf.mxu0
  %v1217 = vadd.f32 %v1005, %v1216
  %v1218 = vpop.f32.mrf.mxu0
  %v1219 = vadd.f32 %v1005, %v1218
  %1220 = vmatmul.bf16.gmra.mxu0 %v965
  %v1221 = vpop.f32.mrf.mxu0
  %v1222 = vadd.f32 %v1005, %v1221
  %v1223 = vpop.f32.mrf.mxu0
  %v1224 = vadd.f32 %v1005, %v1223
  %1225 = vmatmul.bf16.gmra.mxu0 %v967
  %v1226 = vpop.f32.mrf.mxu0
  %v1227 = vadd.f32 %v1005, %v1226
  %v1228 = vpop.f32.mrf.mxu0
  %v1229 = vadd.f32 %v1005, %v1228
  %1230 = vmatmul.bf16.gmra.mxu0 %v969
  %v1231 = vpop.f32.mrf.mxu0
  %v1232 = vadd.f32 %v1005, %v1231
  %v1233 = vpop.f32.mrf.mxu0
  %v1234 = vadd.f32 %v1005, %v1233
  %1235 = vmatmul.bf16.gmra.mxu0 %v971
  %v1236 = vpop.f32.mrf.mxu0
  %v1237 = vadd.f32 %v1005, %v1236
  %v1238 = vpop.f32.mrf.mxu0
  %v1239 = vadd.f32 %v1005, %v1238
  %1240 = vmatmul.bf16.gmra.mxu0 %v973
  %v1241 = vpop.f32.mrf.mxu0
  %v1242 = vadd.f32 %v1005, %v1241
  %v1243 = vpop.f32.mrf.mxu0
  %v1244 = vadd.f32 %v1005, %v1243
  %1245 = vmatmul.bf16.gmra.mxu0 %v975
  %v1246 = vpop.f32.mrf.mxu0
  %v1247 = vadd.f32 %v1005, %v1246
  %v1248 = vpop.f32.mrf.mxu0
  %v1249 = vadd.f32 %v1005, %v1248
  %1250 = vmatmul.bf16.gmra.mxu0 %v977
  %v1251 = vpop.f32.mrf.mxu0
  %v1252 = vadd.f32 %v1005, %v1251
  %v1253 = vpop.f32.mrf.mxu0
  %v1254 = vadd.f32 %v1005, %v1253
  %1255 = vmatmul.bf16.gmra.mxu0 %v979
  %v1256 = vpop.f32.mrf.mxu0
  %v1257 = vadd.f32 %v1005, %v1256
  %v1258 = vpop.f32.mrf.mxu0
  %v1259 = vadd.f32 %v1005, %v1258
  %1260 = vmatmul.bf16.gmra.mxu0 %v981
  %v1261 = vpop.f32.mrf.mxu0
  %v1262 = vadd.f32 %v1005, %v1261
  %v1263 = vpop.f32.mrf.mxu0
  %v1264 = vadd.f32 %v1005, %v1263
  %1265 = vmatmul.bf16.gmra.mxu0 %v983
  %v1266 = vpop.f32.mrf.mxu0
  %v1267 = vadd.f32 %v1005, %v1266
  %v1268 = vpop.f32.mrf.mxu0
  %1269 = vdwg.mxu0
  %1270 = vmatpush.bf16.msra.mxu0 0
  %1271 = vmatpush.bf16.msra.mxu0 0
  %1272 = vmatpush.bf16.msra.mxu0 0
  %1273 = vmatpush.bf16.msra.mxu0 0
  %1274 = vmatpush.bf16.msra.mxu0 0
  %1275 = vmatpush.bf16.msra.mxu0 0
  %1276 = vmatpush.bf16.msra.mxu0 0
  %1277 = vmatpush.bf16.msra.mxu0 %v1051
  %1278 = vmatmul.bf16.gmra.mxu0 %v1063
  %v1279 = vpop.f32.mrf.mxu0
  %v1280 = vadd.f32 %v1147, %v1279
  %v1281 = vpop.f32.mrf.mxu0
  %v1282 = vadd.f32 %v1149, %v1281
  %1283 = vmatmul.bf16.gmra.mxu0 %v1066
  %v1284 = vpop.f32.mrf.mxu0
  %v1285 = vadd.f32 %v1152, %v1284
  %v1286 = vpop.f32.mrf.mxu0
  %v1287 = vadd.f32 %v1154, %v1286
  %1288 = vmatmul.bf16.gmra.mxu0 %v1069
  %v1289 = vpop.f32.mrf.mxu0
  %v1290 = vadd.f32 %v1157, %v1289
  %v1291 = vpop.f32.mrf.mxu0
  %v1292 = vadd.f32 %v1159, %v1291
  %1293 = vmatmul.bf16.gmra.mxu0 %v1072
  %v1294 = vpop.f32.mrf.mxu0
  %v1295 = vadd.f32 %v1162, %v1294
  %v1296 = vpop.f32.mrf.mxu0
  %v1297 = vadd.f32 %v1164, %v1296
  %1298 = vmatmul.bf16.gmra.mxu0 %v1075
  %v1299 = vpop.f32.mrf.mxu0
  %v1300 = vadd.f32 %v1167, %v1299
  %v1301 = vpop.f32.mrf.mxu0
  %v1302 = vadd.f32 %v1169, %v1301
  %1303 = vmatmul.bf16.gmra.mxu0 %v1078
  %v1304 = vpop.f32.mrf.mxu0
  %v1305 = vadd.f32 %v1172, %v1304
  %v1306 = vpop.f32.mrf.mxu0
  %v1307 = vadd.f32 %v1174, %v1306
  %1308 = vmatmul.bf16.gmra.mxu0 %v1081
  %v1309 = vpop.f32.mrf.mxu0
  %v1310 = vadd.f32 %v1177, %v1309
  %v1311 = vpop.f32.mrf.mxu0
  %v1312 = vadd.f32 %v1179, %v1311
  %1313 = vmatmul.bf16.gmra.mxu0 %v1084
  %v1314 = vpop.f32.mrf.mxu0
  %v1315 = vadd.f32 %v1182, %v1314
  %v1316 = vpop.f32.mrf.mxu0
  %v1317 = vadd.f32 %v1184, %v1316
  %1318 = vmatmul.bf16.gmra.mxu0 %v1087
  %v1319 = vpop.f32.mrf.mxu0
  %v1320 = vadd.f32 %v1187, %v1319
  %v1321 = vpop.f32.mrf.mxu0
  %v1322 = vadd.f32 %v1189, %v1321
  %1323 = vmatmul.bf16.gmra.mxu0 %v1090
  %v1324 = vpop.f32.mrf.mxu0
  %v1325 = vadd.f32 %v1192, %v1324
  %v1326 = vpop.f32.mrf.mxu0
  %v1327 = vadd.f32 %v1194, %v1326
  %1328 = vmatmul.bf16.gmra.mxu0 %v1093
  %v1329 = vpop.f32.mrf.mxu0
  %v1330 = vadd.f32 %v1197, %v1329
  %v1331 = vpop.f32.mrf.mxu0
  %v1332 = vadd.f32 %v1199, %v1331
  %1333 = vmatmul.bf16.gmra.mxu0 %v1096
  %v1334 = vpop.f32.mrf.mxu0
  %v1335 = vadd.f32 %v1202, %v1334
  %v1336 = vpop.f32.mrf.mxu0
  %v1337 = vadd.f32 %v1204, %v1336
  %1338 = vmatmul.bf16.gmra.mxu0 %v1099
  %v1339 = vpop.f32.mrf.mxu0
  %v1340 = vadd.f32 %v1207, %v1339
  %v1341 = vpop.f32.mrf.mxu0
  %v1342 = vadd.f32 %v1209, %v1341
  %1343 = vmatmul.bf16.gmra.mxu0 %v1102
  %v1344 = vpop.f32.mrf.mxu0
  %v1345 = vadd.f32 %v1212, %v1344
  %v1346 = vpop.f32.mrf.mxu0
  %v1347 = vadd.f32 %v1214, %v1346
  %1348 = vmatmul.bf16.gmra.mxu0 %v1105
  %v1349 = vpop.f32.mrf.mxu0
  %v1350 = vadd.f32 %v1217, %v1349
  %v1351 = vpop.f32.mrf.mxu0
  %v1352 = vadd.f32 %v1219, %v1351
  %1353 = vmatmul.bf16.gmra.mxu0 %v1108
  %v1354 = vpop.f32.mrf.mxu0
  %v1355 = vadd.f32 %v1222, %v1354
  %v1356 = vpop.f32.mrf.mxu0
  %v1357 = vadd.f32 %v1224, %v1356
  %1358 = vmatmul.bf16.gmra.mxu0 %v1111
  %v1359 = vpop.f32.mrf.mxu0
  %v1360 = vadd.f32 %v1227, %v1359
  %v1361 = vpop.f32.mrf.mxu0
  %v1362 = vadd.f32 %v1229, %v1361
  %1363 = vmatmul.bf16.gmra.mxu0 %v1114
  %v1364 = vpop.f32.mrf.mxu0
  %v1365 = vadd.f32 %v1232, %v1364
  %v1366 = vpop.f32.mrf.mxu0
  %v1367 = vadd.f32 %v1234, %v1366
  %1368 = vmatmul.bf16.gmra.mxu0 %v1117
  %v1369 = vpop.f32.mrf.mxu0
  %v1370 = vadd.f32 %v1237, %v1369
  %v1371 = vpop.f32.mrf.mxu0
  %v1372 = vadd.f32 %v1239, %v1371
  %1373 = vmatmul.bf16.gmra.mxu0 %v1120
  %v1374 = vpop.f32.mrf.mxu0
  %v1375 = vadd.f32 %v1242, %v1374
  %v1376 = vpop.f32.mrf.mxu0
  %v1377 = vadd.f32 %v1244, %v1376
  %1378 = vmatmul.bf16.gmra.mxu0 %v1123
  %v1379 = vpop.f32.mrf.mxu0
  %v1380 = vadd.f32 %v1247, %v1379
  %v1381 = vpop.f32.mrf.mxu0
  %v1382 = vadd.f32 %v1249, %v1381
  %1383 = vmatmul.bf16.gmra.mxu0 %v1126
  %v1384 = vpop.f32.mrf.mxu0
  %v1385 = vadd.f32 %v1252, %v1384
  %v1386 = vpop.f32.mrf.mxu0
  %v1387 = vadd.f32 %v1254, %v1386
  %1388 = vmatmul.bf16.gmra.mxu0 %v1129
  %v1389 = vpop.f32.mrf.mxu0
  %v1390 = vadd.f32 %v1257, %v1389
  %v1391 = vpop.f32.mrf.mxu0
  %v1392 = vadd.f32 %v1259, %v1391
  %1393 = vmatmul.bf16.gmra.mxu0 %v1132
  %v1394 = vpop.f32.mrf.mxu0
  %v1395 = vadd.f32 %v1262, %v1394
  %v1396 = vpop.f32.mrf.mxu0
  %v1397 = vadd.f32 %v1264, %v1396
  %1398 = vmatmul.bf16.gmra.mxu0 %v1135
  %v1399 = vpop.f32.mrf.mxu0
  %v1400 = vadd.f32 %v1267, %v1399
  %v1401 = vpop.f32.mrf.mxu0
  %1402 = vdwg.mxu0
  %v1403 = vmax.f32 %v1280, 0.0
  %v1404 = vmax.f32 %v1282, 0.0
  %v1405 = vmax.f32 %v1285, 0.0
  %v1406 = vmax.f32 %v1287, 0.0
  %v1407 = vmax.f32 %v1290, 0.0
  %v1408 = vmax.f32 %v1292, 0.0
  %v1409 = vmax.f32 %v1295, 0.0
  %v1410 = vmax.f32 %v1297, 0.0
  %v1411 = vmax.f32 %v1300, 0.0
  %v1412 = vmax.f32 %v1302, 0.0
  %v1413 = vmax.f32 %v1305, 0.0
  %v1414 = vmax.f32 %v1307, 0.0
  %v1415 = vmax.f32 %v1310, 0.0
  %v1416 = vmax.f32 %v1312, 0.0
  %v1417 = vmax.f32 %v1315, 0.0
  %v1418 = vmax.f32 %v1317, 0.0
  %v1419 = vmax.f32 %v1320, 0.0
  %v1420 = vmax.f32 %v1322, 0.0
  %v1421 = vmax.f32 %v1325, 0.0
  %v1422 = vmax.f32 %v1327, 0.0
  %v1423 = vmax.f32 %v1330, 0.0
  %v1424 = vmax.f32 %v1332, 0.0
  %v1425 = vmax.f32 %v1335, 0.0
  %v1426 = vmax.f32 %v1337, 0.0
  %v1427 = vmax.f32 %v1340, 0.0
  %v1428 = vmax.f32 %v1342, 0.0
  %v1429 = vmax.f32 %v1345, 0.0
  %v1430 = vmax.f32 %v1347, 0.0
  %v1431 = vmax.f32 %v1350, 0.0
  %v1432 = vmax.f32 %v1352, 0.0
  %v1433 = vmax.f32 %v1355, 0.0
  %v1434 = vmax.f32 %v1357, 0.0
  %v1435 = vmax.f32 %v1360, 0.0
  %v1436 = vmax.f32 %v1362, 0.0
  %v1437 = vmax.f32 %v1365, 0.0
  %v1438 = vmax.f32 %v1367, 0.0
  %v1439 = vmax.f32 %v1370, 0.0
  %v1440 = vmax.f32 %v1372, 0.0
  %v1441 = vmax.f32 %v1375, 0.0
  %v1442 = vmax.f32 %v1377, 0.0
  %v1443 = vmax.f32 %v1380, 0.0
  %v1444 = vmax.f32 %v1382, 0.0
  %v1445 = vmax.f32 %v1385, 0.0
  %v1446 = vmax.f32 %v1387, 0.0
  %v1447 = vmax.f32 %v1390, 0.0
  %v1448 = vmax.f32 %v1392, 0.0
  %v1449 = vmax.f32 %v1395, 0.0
  %v1450 = vmax.f32 %v1397, 0.0
  %v1451 = vmax.f32 %v1400, 0.0
  %vm1452 = vcmask 261120
  %1453 = vst.msk [vmem:[#allocation2] sm:$0xff] %vm1452, 0.0
  %1454 = vst.msk [vmem:[#allocation2 + $0x8] sm:$0xff] %vm1452, 0.0
  %1455 = vst.msk [vmem:[#allocation2 + $0x10] sm:$0xff] %vm1452, 0.0
  %1456 = vst.msk [vmem:[#allocation2 + $0x18] sm:$0xff] %vm1452, 0.0
  %1457 = vst.msk [vmem:[#allocation2 + $0x20] sm:$0xff] %vm1452, 0.0
  %1458 = vst.msk [vmem:[#allocation2 + $0x28] sm:$0xff] %vm1452, 0.0
  %1459 = vst.msk [vmem:[#allocation2 + $0x30] sm:$0xff] %vm1452, 0.0
  %1460 = vst.msk [vmem:[#allocation2 + $0x38] sm:$0xff] %vm1452, 0.0
  %1461 = vst.msk [vmem:[#allocation2 + $0x40] sm:$0xff] %vm1452, 0.0
  %1462 = vst.msk [vmem:[#allocation2 + $0x48] sm:$0xff] %vm1452, 0.0
  %1463 = vst.msk [vmem:[#allocation2 + $0x50] sm:$0xff] %vm1452, 0.0
  %1464 = vst.msk [vmem:[#allocation2 + $0x58] sm:$0xff] %vm1452, 0.0
  %1465 = vst.msk [vmem:[#allocation2 + $0x60] sm:$0xff] %vm1452, 0.0
  %1466 = vst.msk [vmem:[#allocation2 + $0x68] sm:$0xff] %vm1452, 0.0
  %1467 = vst.msk [vmem:[#allocation2 + $0x70] sm:$0xff] %vm1452, 0.0
  %1468 = vst.msk [vmem:[#allocation2 + $0x78] sm:$0xff] %vm1452, 0.0
  %1469 = vst.msk [vmem:[#allocation2 + $0x80] sm:$0xff] %vm1452, 0.0
  %1470 = vst.msk [vmem:[#allocation2 + $0x88] sm:$0xff] %vm1452, 0.0
  %1471 = vst.msk [vmem:[#allocation2 + $0x90] sm:$0xff] %vm1452, 0.0
  %1472 = vst.msk [vmem:[#allocation2 + $0x98] sm:$0xff] %vm1452, 0.0
  %1473 = vst.msk [vmem:[#allocation2 + $0xa0] sm:$0xff] %vm1452, 0.0
  %1474 = vst.msk [vmem:[#allocation2 + $0xa8] sm:$0xff] %vm1452, 0.0
  %1475 = vst.msk [vmem:[#allocation2 + $0xb0] sm:$0xff] %vm1452, 0.0
  %1476 = vst.msk [vmem:[#allocation2 + $0xb8] sm:$0xff] %vm1452, 0.0
  %1477 = vst.msk [vmem:[#allocation2 + $0xc0] sm:$0xff] %vm1452, 0.0
  %1478 = vst.msk [vmem:[#allocation2 + $0xc8] sm:$0xff] %vm1452, 0.0
  %1479 = vst.msk [vmem:[#allocation2 + $0xd0] sm:$0xff] %vm1452, 0.0
  %1480 = vst.msk [vmem:[#allocation2 + $0xd8] sm:$0xff] %vm1452, 0.0
  %1481 = vst.msk [vmem:[#allocation2 + $0xe0] sm:$0xff] %vm1452, 0.0
  %1482 = vst.msk [vmem:[#allocation2 + $0xe8] sm:$0xff] %vm1452, 0.0
  %1483 = vst.msk [vmem:[#allocation2 + $0xf0] sm:$0xff] %vm1452, 0.0
  %1484 = vst.msk [vmem:[#allocation2 + $0xf8] sm:$0xff] %vm1452, 0.0
  %1485 = vst.msk [vmem:[#allocation2 + $0x100] sm:$0xff] %vm1452, 0.0
  %1486 = vst.msk [vmem:[#allocation2 + $0x108] sm:$0xff] %vm1452, 0.0
  %1487 = vst.msk [vmem:[#allocation2 + $0x110] sm:$0xff] %vm1452, 0.0
  %1488 = vst.msk [vmem:[#allocation2 + $0x118] sm:$0xff] %vm1452, 0.0
  %1489 = vst.msk [vmem:[#allocation2 + $0x120] sm:$0xff] %vm1452, 0.0
  %1490 = vst.msk [vmem:[#allocation2 + $0x128] sm:$0xff] %vm1452, 0.0
  %1491 = vst.msk [vmem:[#allocation2 + $0x130] sm:$0xff] %vm1452, 0.0
  %1492 = vst.msk [vmem:[#allocation2 + $0x138] sm:$0xff] %vm1452, 0.0
  %1493 = vst.msk [vmem:[#allocation2 + $0x140] sm:$0xff] %vm1452, 0.0
  %1494 = vst.msk [vmem:[#allocation2 + $0x148] sm:$0xff] %vm1452, 0.0
  %1495 = vst.msk [vmem:[#allocation2 + $0x150] sm:$0xff] %vm1452, 0.0
  %1496 = vst.msk [vmem:[#allocation2 + $0x158] sm:$0xff] %vm1452, 0.0
  %1497 = vst.msk [vmem:[#allocation2 + $0x160] sm:$0xff] %vm1452, 0.0
  %1498 = vst.msk [vmem:[#allocation2 + $0x168] sm:$0xff] %vm1452, 0.0
  %1499 = vst.msk [vmem:[#allocation2 + $0x170] sm:$0xff] %vm1452, 0.0
  %1500 = vst.msk [vmem:[#allocation2 + $0x178] sm:$0xff] %vm1452, 0.0
  %1501 = vst.msk [vmem:[#allocation2 + $0x180] sm:$0xff] %vm1452, 0.0
  %1502 = vst.msk [vmem:[#allocation2 + $0x188] sm:$0xff] %vm1452, 0.0
  %1503 = vst.msk [vmem:[#allocation2 + $0x190] sm:$0xff] %vm1452, 0.0
  %1504 = vst.msk [vmem:[#allocation2 + $0x198] sm:$0xff] %vm1452, 0.0
  %1505 = vst.msk [vmem:[#allocation2 + $0x1a0] sm:$0xff] %vm1452, 0.0
  %1506 = vst.msk [vmem:[#allocation2 + $0x1a8] sm:$0xff] %vm1452, 0.0
  %1507 = vst.msk [vmem:[#allocation2 + $0x1b0] sm:$0xff] %vm1452, 0.0
  %1508 = vst.msk [vmem:[#allocation2 + $0x1b8] sm:$0xff] %vm1452, 0.0
  %1509 = vst.msk [vmem:[#allocation2 + $0x1c0] sm:$0xff] %vm1452, 0.0
  %1510 = vst.msk [vmem:[#allocation2 + $0x1c8] sm:$0xff] %vm1452, 0.0
  %1511 = vst.msk [vmem:[#allocation2 + $0x1d0] sm:$0xff] %vm1452, 0.0
  %1512 = vst.msk [vmem:[#allocation2 + $0x1d8] sm:$0xff] %vm1452, 0.0
  %1513 = vst.msk [vmem:[#allocation2 + $0x1e0] sm:$0xff] %vm1452, 0.0
  %1514 = vst.msk [vmem:[#allocation2 + $0x1e8] sm:$0xff] %vm1452, 0.0
  %1515 = vst.msk [vmem:[#allocation2 + $0x1f0] sm:$0xff] %vm1452, 0.0
  %1516 = vst.msk [vmem:[#allocation2 + $0x1f8] sm:$0xff] %vm1452, 0.0
  %1517 = vst.msk [vmem:[#allocation2 + $0x200] sm:$0xff] %vm1452, 0.0
  %1518 = vst.msk [vmem:[#allocation2 + $0x208] sm:$0xff] %vm1452, 0.0
  %1519 = vst.msk [vmem:[#allocation2 + $0x210] sm:$0xff] %vm1452, 0.0
  %1520 = vst.msk [vmem:[#allocation2 + $0x218] sm:$0xff] %vm1452, 0.0
  %1521 = vst.msk [vmem:[#allocation2 + $0x220] sm:$0xff] %vm1452, 0.0
  %1522 = vst.msk [vmem:[#allocation2 + $0x228] sm:$0xff] %vm1452, 0.0
  %1523 = vst.msk [vmem:[#allocation2 + $0x230] sm:$0xff] %vm1452, 0.0
  %1524 = vst.msk [vmem:[#allocation2 + $0x238] sm:$0xff] %vm1452, 0.0
  %1525 = vst.msk [vmem:[#allocation2 + $0x240] sm:$0xff] %vm1452, 0.0
  %1526 = vst.msk [vmem:[#allocation2 + $0x248] sm:$0xff] %vm1452, 0.0
  %1527 = vst.msk [vmem:[#allocation2 + $0x250] sm:$0xff] %vm1452, 0.0
  %1528 = vst.msk [vmem:[#allocation2 + $0x258] sm:$0xff] %vm1452, 0.0
  %1529 = vst.msk [vmem:[#allocation2 + $0x260] sm:$0xff] %vm1452, 0.0
  %1530 = vst.msk [vmem:[#allocation2 + $0x268] sm:$0xff] %vm1452, 0.0
  %1531 = vst.msk [vmem:[#allocation2 + $0x270] sm:$0xff] %vm1452, 0.0
  %1532 = vst.msk [vmem:[#allocation2 + $0x278] sm:$0xff] %vm1452, 0.0
  %1533 = vst.msk [vmem:[#allocation2 + $0x280] sm:$0xff] %vm1452, 0.0
  %1534 = vst.msk [vmem:[#allocation2 + $0x288] sm:$0xff] %vm1452, 0.0
  %1535 = vst.msk [vmem:[#allocation2 + $0x290] sm:$0xff] %vm1452, 0.0
  %1536 = vst.msk [vmem:[#allocation2 + $0x298] sm:$0xff] %vm1452, 0.0
  %1537 = vst.msk [vmem:[#allocation2 + $0x2a0] sm:$0xff] %vm1452, 0.0
  %1538 = vst.msk [vmem:[#allocation2 + $0x2a8] sm:$0xff] %vm1452, 0.0
  %1539 = vst.msk [vmem:[#allocation2 + $0x2b0] sm:$0xff] %vm1452, 0.0
  %1540 = vst.msk [vmem:[#allocation2 + $0x2b8] sm:$0xff] %vm1452, 0.0
  %1541 = vst.msk [vmem:[#allocation2 + $0x2c0] sm:$0xff] %vm1452, 0.0
  %1542 = vst.msk [vmem:[#allocation2 + $0x2c8] sm:$0xff] %vm1452, 0.0
  %1543 = vst.msk [vmem:[#allocation2 + $0x2d0] sm:$0xff] %vm1452, 0.0
  %1544 = vst.msk [vmem:[#allocation2 + $0x2d8] sm:$0xff] %vm1452, 0.0
  %1545 = vst.msk [vmem:[#allocation2 + $0x2e0] sm:$0xff] %vm1452, 0.0
  %1546 = vst.msk [vmem:[#allocation2 + $0x2e8] sm:$0xff] %vm1452, 0.0
  %1547 = vst.msk [vmem:[#allocation2 + $0x2f0] sm:$0xff] %vm1452, 0.0
  %1548 = vst.msk [vmem:[#allocation2 + $0x2f8] sm:$0xff] %vm1452, 0.0
  %1549 = vst.msk [vmem:[#allocation2 + $0x300] sm:$0xff] %vm1452, 0.0
  %1550 = vst.msk [vmem:[#allocation2 + $0x308] sm:$0xff] %vm1452, 0.0
  %1551 = vst.msk [vmem:[#allocation2 + $0x310] sm:$0xff] %vm1452, 0.0
  %1552 = vst.msk [vmem:[#allocation2 + $0x318] sm:$0xff] %vm1452, 0.0
  %s1553 = scalar_lea.vmem [#allocation2], 440
  %1554 = vst.msk [vmem:[%s1553] sm:$0xff] %vm1452, %v1403
  %s1555 = scalar_lea.vmem [#allocation2], 408
  %1556 = vst.msk [vmem:[%s1555] sm:$0xff] %vm1452, %v1404
  %s1557 = scalar_lea.vmem [#allocation2], 448
  %1558 = vst.msk [vmem:[%s1557] sm:$0xff] %vm1452, %v1405
  %s1559 = scalar_lea.vmem [#allocation2], 416
  %1560 = vst.msk [vmem:[%s1559] sm:$0xff] %vm1452, %v1406
  %s1561 = scalar_lea.vmem [#allocation2], 456
  %1562 = vst.msk [vmem:[%s1561] sm:$0xff] %vm1452, %v1407
  %s1563 = scalar_lea.vmem [#allocation2], 424
  %1564 = vst.msk [vmem:[%s1563] sm:$0xff] %vm1452, %v1408
  %s1565 = scalar_lea.vmem [#allocation2], 464
  %1566 = vst.msk [vmem:[%s1565] sm:$0xff] %vm1452, %v1409
  %s1567 = scalar_lea.vmem [#allocation2], 120
  %1568 = vst.msk [vmem:[%s1567] sm:$0xff] %vm1452, %v1410
  %s1569 = scalar_lea.vmem [#allocation2], 88
  %1570 = vst.msk [vmem:[%s1569] sm:$0xff] %vm1452, %v1411
  %s1571 = scalar_lea.vmem [#allocation2], 128
  %1572 = vst.msk [vmem:[%s1571] sm:$0xff] %vm1452, %v1412
  %s1573 = scalar_lea.vmem [#allocation2], 96
  %1574 = vst.msk [vmem:[%s1573] sm:$0xff] %vm1452, %v1413
  %s1575 = scalar_lea.vmem [#allocation2], 136
  %1576 = vst.msk [vmem:[%s1575] sm:$0xff] %vm1452, %v1414
  %s1577 = scalar_lea.vmem [#allocation2], 104
  %1578 = vst.msk [vmem:[%s1577] sm:$0xff] %vm1452, %v1415
  %s1579 = scalar_lea.vmem [#allocation2], 144
  %1580 = vst.msk [vmem:[%s1579] sm:$0xff] %vm1452, %v1416
  %s1581 = scalar_lea.vmem [#allocation2], 520
  %1582 = vst.msk [vmem:[%s1581] sm:$0xff] %vm1452, %v1417
  %s1583 = scalar_lea.vmem [#allocation2], 488
  %1584 = vst.msk [vmem:[%s1583] sm:$0xff] %vm1452, %v1418
  %s1585 = scalar_lea.vmem [#allocation2], 528
  %1586 = vst.msk [vmem:[%s1585] sm:$0xff] %vm1452, %v1419
  %s1587 = scalar_lea.vmem [#allocation2], 496
  %1588 = vst.msk [vmem:[%s1587] sm:$0xff] %vm1452, %v1420
  %s1589 = scalar_lea.vmem [#allocation2], 536
  %1590 = vst.msk [vmem:[%s1589] sm:$0xff] %vm1452, %v1421
  %s1591 = scalar_lea.vmem [#allocation2], 504
  %1592 = vst.msk [vmem:[%s1591] sm:$0xff] %vm1452, %v1422
  %s1593 = scalar_lea.vmem [#allocation2], 544
  %1594 = vst.msk [vmem:[%s1593] sm:$0xff] %vm1452, %v1423
  %s1595 = scalar_lea.vmem [#allocation2], 200
  %1596 = vst.msk [vmem:[%s1595] sm:$0xff] %vm1452, %v1424
  %s1597 = scalar_lea.vmem [#allocation2], 168
  %1598 = vst.msk [vmem:[%s1597] sm:$0xff] %vm1452, %v1425
  %s1599 = scalar_lea.vmem [#allocation2], 208
  %1600 = vst.msk [vmem:[%s1599] sm:$0xff] %vm1452, %v1426
  %s1601 = scalar_lea.vmem [#allocation2], 176
  %1602 = vst.msk [vmem:[%s1601] sm:$0xff] %vm1452, %v1427
  %s1603 = scalar_lea.vmem [#allocation2], 216
  %1604 = vst.msk [vmem:[%s1603] sm:$0xff] %vm1452, %v1428
  %s1605 = scalar_lea.vmem [#allocation2], 184
  %1606 = vst.msk [vmem:[%s1605] sm:$0xff] %vm1452, %v1429
  %s1607 = scalar_lea.vmem [#allocation2], 224
  %1608 = vst.msk [vmem:[%s1607] sm:$0xff] %vm1452, %v1430
  %s1609 = scalar_lea.vmem [#allocation2], 600
  %1610 = vst.msk [vmem:[%s1609] sm:$0xff] %vm1452, %v1431
  %s1611 = scalar_lea.vmem [#allocation2], 568
  %1612 = vst.msk [vmem:[%s1611] sm:$0xff] %vm1452, %v1432
  %s1613 = scalar_lea.vmem [#allocation2], 608
  %1614 = vst.msk [vmem:[%s1613] sm:$0xff] %vm1452, %v1433
  %s1615 = scalar_lea.vmem [#allocation2], 576
  %1616 = vst.msk [vmem:[%s1615] sm:$0xff] %vm1452, %v1434
  %s1617 = scalar_lea.vmem [#allocation2], 616
  %1618 = vst.msk [vmem:[%s1617] sm:$0xff] %vm1452, %v1435
  %s1619 = scalar_lea.vmem [#allocation2], 584
  %1620 = vst.msk [vmem:[%s1619] sm:$0xff] %vm1452, %v1436
  %s1621 = scalar_lea.vmem [#allocation2], 624
  %1622 = vst.msk [vmem:[%s1621] sm:$0xff] %vm1452, %v1437
  %s1623 = scalar_lea.vmem [#allocation2], 280
  %1624 = vst.msk [vmem:[%s1623] sm:$0xff] %vm1452, %v1438
  %s1625 = scalar_lea.vmem [#allocation2], 248
  %1626 = vst.msk [vmem:[%s1625] sm:$0xff] %vm1452, %v1439
  %s1627 = scalar_lea.vmem [#allocation2], 288
  %1628 = vst.msk [vmem:[%s1627] sm:$0xff] %vm1452, %v1440
  %s1629 = scalar_lea.vmem [#allocation2], 256
  %1630 = vst.msk [vmem:[%s1629] sm:$0xff] %vm1452, %v1441
  %s1631 = scalar_lea.vmem [#allocation2], 296
  %1632 = vst.msk [vmem:[%s1631] sm:$0xff] %vm1452, %v1442
  %s1633 = scalar_lea.vmem [#allocation2], 264
  %1634 = vst.msk [vmem:[%s1633] sm:$0xff] %vm1452, %v1443
  %s1635 = scalar_lea.vmem [#allocation2], 304
  %1636 = vst.msk [vmem:[%s1635] sm:$0xff] %vm1452, %v1444
  %s1637 = scalar_lea.vmem [#allocation2], 680
  %1638 = vst.msk [vmem:[%s1637] sm:$0xff] %vm1452, %v1445
  %s1639 = scalar_lea.vmem [#allocation2], 648
  %1640 = vst.msk [vmem:[%s1639] sm:$0xff] %vm1452, %v1446
  %s1641 = scalar_lea.vmem [#allocation2], 688
  %1642 = vst.msk [vmem:[%s1641] sm:$0xff] %vm1452, %v1447
  %s1643 = scalar_lea.vmem [#allocation2], 656
  %1644 = vst.msk [vmem:[%s1643] sm:$0xff] %vm1452, %v1448
  %s1645 = scalar_lea.vmem [#allocation2], 696
  %1646 = vst.msk [vmem:[%s1645] sm:$0xff] %vm1452, %v1449
  %s1647 = scalar_lea.vmem [#allocation2], 664
  %1648 = vst.msk [vmem:[%s1647] sm:$0xff] %vm1452, %v1450
  %s1649 = scalar_lea.vmem [#allocation2], 704
  %1650 = vst.msk [vmem:[%s1649] sm:$0xff] %vm1452, %v1451
  %v1651 = vld [vmem:[#allocation2] sm:$0xff]
  %v1652 = vld [vmem:[#allocation2 + $0x8] sm:$0xff]
  %v1653 = vld [vmem:[#allocation2 + $0x10] sm:$0xff]
  %v1654 = vld [vmem:[#allocation2 + $0x18] sm:$0xff]
  %v1655 = vld [vmem:[#allocation2 + $0x50] sm:$0xff]
  %v1656 = vld [vmem:[#allocation2 + $0x58] sm:$0xff]
  %v1657 = vld [vmem:[#allocation2 + $0x60] sm:$0xff]
  %v1658 = vld [vmem:[#allocation2 + $0x68] sm:$0xff]
  %v1659 = vld [vmem:[#allocation2 + $0xa0] sm:$0xff]
  %v1660 = vld [vmem:[#allocation2 + $0xa8] sm:$0xff]
  %v1661 = vld [vmem:[#allocation2 + $0xb0] sm:$0xff]
  %v1662 = vld [vmem:[#allocation2 + $0xb8] sm:$0xff]
  %v1663 = vld [vmem:[#allocation2 + $0xf0] sm:$0xff]
  %v1664 = vld [vmem:[#allocation2 + $0xf8] sm:$0xff]
  %v1665 = vld [vmem:[#allocation2 + $0x100] sm:$0xff]
  %v1666 = vld [vmem:[#allocation2 + $0x108] sm:$0xff]
  %v1667 = vpack.c.bf16 %v1652, %v1651
  %v1668 = vpack.c.bf16 %v1654, %v1653
  %v1669 = vpack.c.bf16 %v1656, %v1655
  %v1670 = vpack.c.bf16 %v1658, %v1657
  %v1671 = vpack.c.bf16 %v1660, %v1659
  %v1672 = vpack.c.bf16 %v1662, %v1661
  %v1673 = vpack.c.bf16 %v1664, %v1663
  %v1674 = vpack.c.bf16 %v1666, %v1665
  %v1675 = vld [vmem:[%s6] sm:$0xf]
  %v1676 = vld [vmem:[%s6 + $0x4] sm:$0xf]
  %v1677 = vld [vmem:[%s6 + $0x8] sm:$0xf]
  %v1678 = vld [vmem:[%s6 + $0xc] sm:$0xf]
  %s1679 = scalar_lea.vmem [#allocation2], 40
  %v1680 = vld [vmem:[%s1679] sm:$0xff]
  %v1681 = vld [vmem:[%s1679 + $0x8] sm:$0xff]
  %v1682 = vld [vmem:[%s1679 + $0x10] sm:$0xff]
  %v1683 = vld [vmem:[%s1679 + $0x18] sm:$0xff]
  %v1684 = vld [vmem:[%s1679 + $0x50] sm:$0xff]
  %v1685 = vld [vmem:[%s1679 + $0x58] sm:$0xff]
  %v1686 = vld [vmem:[%s1679 + $0x60] sm:$0xff]
  %v1687 = vld [vmem:[%s1679 + $0x68] sm:$0xff]
  %v1688 = vld [vmem:[%s1679 + $0xa0] sm:$0xff]
  %v1689 = vld [vmem:[%s1679 + $0xa8] sm:$0xff]
  %v1690 = vld [vmem:[%s1679 + $0xb0] sm:$0xff]
  %v1691 = vld [vmem:[%s1679 + $0xb8] sm:$0xff]
  %v1692 = vld [vmem:[%s1679 + $0xf0] sm:$0xff]
  %v1693 = vld [vmem:[%s1679 + $0xf8] sm:$0xff]
  %v1694 = vld [vmem:[%s1679 + $0x100] sm:$0xff]
  %v1695 = vld [vmem:[%s1679 + $0x108] sm:$0xff]
  %v1696 = vpack.c.bf16 %v1681, %v1680
  %v1697 = vpack.c.bf16 %v1683, %v1682
  %v1698 = vpack.c.bf16 %v1685, %v1684
  %v1699 = vpack.c.bf16 %v1687, %v1686
  %v1700 = vpack.c.bf16 %v1689, %v1688
  %v1701 = vpack.c.bf16 %v1691, %v1690
  %v1702 = vpack.c.bf16 %v1693, %v1692
  %v1703 = vpack.c.bf16 %v1695, %v1694
  %v1704 = vld [vmem:[%s6 + $0x10] sm:$0xf]
  %v1705 = vld [vmem:[%s6 + $0x14] sm:$0xf]
  %v1706 = vld [vmem:[%s6 + $0x18] sm:$0xf]
  %v1707 = vld [vmem:[%s6 + $0x1c] sm:$0xf]
  %v1712 = vunpack.c.l.b16 %v1704
  %v1713 = vunpack.c.l.b16 %v1705
  %v1714 = vunpack.c.l.b16 %v1706
  %v1715 = vunpack.c.l.b16 %v1707
  %v1716 = vpack.c.b16 %v1713, %v1712
  %v1717 = vpack.c.b16 %v1715, %v1714
  %v1721 = vsel %vm1452, %v1696, 0
  %v1724 = vsel %vm1452, %v1697, 0
  %v1727 = vsel %vm1452, %v1698, 0
  %v1730 = vsel %vm1452, %v1699, 0
  %v1733 = vsel %vm1452, %v1700, 0
  %v1736 = vsel %vm1452, %v1701, 0
  %v1739 = vsel %vm1452, %v1702, 0
  %v1742 = vsel %vm1452, %v1703, 0
  %1744 = vmatpush.bf16.msra.mxu0 0
  %1745 = vmatpush.bf16.msra.mxu0 0
  %1746 = vmatpush.bf16.msra.mxu0 0
  %1747 = vmatpush.bf16.msra.mxu0 0
  %1748 = vmatpush.bf16.msra.mxu0 0
  %1749 = vmatpush.bf16.msra.mxu0 0
  %1750 = vmatpush.bf16.msra.mxu0 %v1717
  %1751 = vmatpush.bf16.msra.mxu0 %v1716
  %1752 = vmatmul.bf16.gmra.mxu0 %v1721
  %v1753 = vpop.f32.mrf.mxu0
  %v1754 = vadd.f32 0.0, %v1753
  %v1755 = vpop.f32.mrf.mxu0
  %v1756 = vadd.f32 0.0, %v1755
  %1757 = vmatmul.bf16.gmra.mxu0 %v1724
  %v1758 = vpop.f32.mrf.mxu0
  %v1759 = vadd.f32 0.0, %v1758
  %v1760 = vpop.f32.mrf.mxu0
  %v1761 = vadd.f32 0.0, %v1760
  %1762 = vmatmul.bf16.gmra.mxu0 %v1727
  %v1763 = vpop.f32.mrf.mxu0
  %v1764 = vadd.f32 0.0, %v1763
  %v1765 = vpop.f32.mrf.mxu0
  %v1766 = vadd.f32 0.0, %v1765
  %1767 = vmatmul.bf16.gmra.mxu0 %v1730
  %v1768 = vpop.f32.mrf.mxu0
  %v1769 = vadd.f32 0.0, %v1768
  %v1770 = vpop.f32.mrf.mxu0
  %v1771 = vadd.f32 0.0, %v1770
  %1772 = vmatmul.bf16.gmra.mxu0 %v1733
  %v1773 = vpop.f32.mrf.mxu0
  %v1774 = vadd.f32 0.0, %v1773
  %v1775 = vpop.f32.mrf.mxu0
  %v1776 = vadd.f32 0.0, %v1775
  %1777 = vmatmul.bf16.gmra.mxu0 %v1736
  %v1778 = vpop.f32.mrf.mxu0
  %v1779 = vadd.f32 0.0, %v1778
  %v1780 = vpop.f32.mrf.mxu0
  %v1781 = vadd.f32 0.0, %v1780
  %1782 = vmatmul.bf16.gmra.mxu0 %v1739
  %v1783 = vpop.f32.mrf.mxu0
  %v1784 = vadd.f32 0.0, %v1783
  %v1785 = vpop.f32.mrf.mxu0
  %v1786 = vadd.f32 0.0, %v1785
  %1787 = vmatmul.bf16.gmra.mxu0 %v1742
  %v1788 = vpop.f32.mrf.mxu0
  %v1789 = vadd.f32 0.0, %v1788
  %v1790 = vpop.f32.mrf.mxu0
  %v1791 = vadd.f32 0.0, %v1790
  %1792 = vdwg.mxu0
  %v1797 = vunpack.c.l.b16 %v1675
  %v1798 = vunpack.c.l.b16 %v1676
  %v1799 = vunpack.c.l.b16 %v1677
  %v1800 = vunpack.c.l.b16 %v1678
  %v1801 = vpack.c.b16 %v1798, %v1797
  %v1802 = vpack.c.b16 %v1800, %v1799
  %v1806 = vsel %vm1452, %v1667, 0
  %v1809 = vsel %vm1452, %v1668, 0
  %v1812 = vsel %vm1452, %v1669, 0
  %v1815 = vsel %vm1452, %v1670, 0
  %v1818 = vsel %vm1452, %v1671, 0
  %v1821 = vsel %vm1452, %v1672, 0
  %v1824 = vsel %vm1452, %v1673, 0
  %v1827 = vsel %vm1452, %v1674, 0
  %1829 = vmatpush.bf16.msra.mxu0 0
  %1830 = vmatpush.bf16.msra.mxu0 0
  %1831 = vmatpush.bf16.msra.mxu0 0
  %1832 = vmatpush.bf16.msra.mxu0 0
  %1833 = vmatpush.bf16.msra.mxu0 0
  %1834 = vmatpush.bf16.msra.mxu0 0
  %1835 = vmatpush.bf16.msra.mxu0 %v1802
  %1836 = vmatpush.bf16.msra.mxu0 %v1801
  %1837 = vmatmul.bf16.gmra.mxu0 %v1806
  %v1838 = vpop.f32.mrf.mxu0
  %v1839 = vadd.f32 %v1754, %v1838
  %v1840 = vpop.f32.mrf.mxu0
  %v1841 = vadd.f32 %v1756, %v1840
  %1842 = vmatmul.bf16.gmra.mxu0 %v1809
  %v1843 = vpop.f32.mrf.mxu0
  %v1844 = vadd.f32 %v1759, %v1843
  %v1845 = vpop.f32.mrf.mxu0
  %v1846 = vadd.f32 %v1761, %v1845
  %1847 = vmatmul.bf16.gmra.mxu0 %v1812
  %v1848 = vpop.f32.mrf.mxu0
  %v1849 = vadd.f32 %v1764, %v1848
  %v1850 = vpop.f32.mrf.mxu0
  %v1851 = vadd.f32 %v1766, %v1850
  %1852 = vmatmul.bf16.gmra.mxu0 %v1815
  %v1853 = vpop.f32.mrf.mxu0
  %v1854 = vadd.f32 %v1769, %v1853
  %v1855 = vpop.f32.mrf.mxu0
  %v1856 = vadd.f32 %v1771, %v1855
  %1857 = vmatmul.bf16.gmra.mxu0 %v1818
  %v1858 = vpop.f32.mrf.mxu0
  %v1859 = vadd.f32 %v1774, %v1858
  %v1860 = vpop.f32.mrf.mxu0
  %v1861 = vadd.f32 %v1776, %v1860
  %1862 = vmatmul.bf16.gmra.mxu0 %v1821
  %v1863 = vpop.f32.mrf.mxu0
  %v1864 = vadd.f32 %v1779, %v1863
  %v1865 = vpop.f32.mrf.mxu0
  %v1866 = vadd.f32 %v1781, %v1865
  %1867 = vmatmul.bf16.gmra.mxu0 %v1824
  %v1868 = vpop.f32.mrf.mxu0
  %v1869 = vadd.f32 %v1784, %v1868
  %v1870 = vpop.f32.mrf.mxu0
  %v1871 = vadd.f32 %v1786, %v1870
  %1872 = vmatmul.bf16.gmra.mxu0 %v1827
  %v1873 = vpop.f32.mrf.mxu0
  %v1874 = vadd.f32 %v1789, %v1873
  %v1875 = vpop.f32.mrf.mxu0
  %v1876 = vadd.f32 %v1791, %v1875
  %1877 = vdwg.mxu0
  %s1878 = scalar_lea.vmem [#allocation2], 8
  %v1879 = vld [vmem:[%s1878] sm:$0xff]
  %v1880 = vld [vmem:[%s1878 + $0x8] sm:$0xff]
  %v1881 = vld [vmem:[%s1878 + $0x10] sm:$0xff]
  %v1882 = vld [vmem:[%s1878 + $0x18] sm:$0xff]
  %v1883 = vld [vmem:[%s1878 + $0x50] sm:$0xff]
  %v1884 = vld [vmem:[%s1878 + $0x58] sm:$0xff]
  %v1885 = vld [vmem:[%s1878 + $0x60] sm:$0xff]
  %v1886 = vld [vmem:[%s1878 + $0x68] sm:$0xff]
  %v1887 = vld [vmem:[%s1878 + $0xa0] sm:$0xff]
  %v1888 = vld [vmem:[%s1878 + $0xa8] sm:$0xff]
  %v1889 = vld [vmem:[%s1878 + $0xb0] sm:$0xff]
  %v1890 = vld [vmem:[%s1878 + $0xb8] sm:$0xff]
  %v1891 = vld [vmem:[%s1878 + $0xf0] sm:$0xff]
  %v1892 = vld [vmem:[%s1878 + $0xf8] sm:$0xff]
  %v1893 = vld [vmem:[%s1878 + $0x100] sm:$0xff]
  %v1894 = vld [vmem:[%s1878 + $0x108] sm:$0xff]
  %v1895 = vpack.c.bf16 %v1880, %v1879
  %v1896 = vpack.c.bf16 %v1882, %v1881
  %v1897 = vpack.c.bf16 %v1884, %v1883
  %v1898 = vpack.c.bf16 %v1886, %v1885
  %v1899 = vpack.c.bf16 %v1888, %v1887
  %v1900 = vpack.c.bf16 %v1890, %v1889
  %v1901 = vpack.c.bf16 %v1892, %v1891
  %v1902 = vpack.c.bf16 %v1894, %v1893
  %v1903 = vld [vmem:[%s6 + $0x20] sm:$0xf]
  %v1904 = vld [vmem:[%s6 + $0x24] sm:$0xf]
  %v1905 = vld [vmem:[%s6 + $0x28] sm:$0xf]
  %v1906 = vld [vmem:[%s6 + $0x2c] sm:$0xf]
  %v1911 = vunpack.c.l.b16 %v1903
  %v1912 = vunpack.c.l.b16 %v1904
  %v1913 = vunpack.c.l.b16 %v1905
  %v1914 = vunpack.c.l.b16 %v1906
  %v1915 = vpack.c.b16 %v1912, %v1911
  %v1916 = vpack.c.b16 %v1914, %v1913
  %v1920 = vsel %vm1452, %v1895, 0
  %v1923 = vsel %vm1452, %v1896, 0
  %v1926 = vsel %vm1452, %v1897, 0
  %v1929 = vsel %vm1452, %v1898, 0
  %v1932 = vsel %vm1452, %v1899, 0
  %v1935 = vsel %vm1452, %v1900, 0
  %v1938 = vsel %vm1452, %v1901, 0
  %v1941 = vsel %vm1452, %v1902, 0
  %1943 = vmatpush.bf16.msra.mxu0 0
  %1944 = vmatpush.bf16.msra.mxu0 0
  %1945 = vmatpush.bf16.msra.mxu0 0
  %1946 = vmatpush.bf16.msra.mxu0 0
  %1947 = vmatpush.bf16.msra.mxu0 0
  %1948 = vmatpush.bf16.msra.mxu0 0
  %1949 = vmatpush.bf16.msra.mxu0 %v1916
  %1950 = vmatpush.bf16.msra.mxu0 %v1915
  %1951 = vmatmul.bf16.gmra.mxu0 %v1920
  %v1952 = vpop.f32.mrf.mxu0
  %v1953 = vadd.f32 0.0, %v1952
  %v1954 = vpop.f32.mrf.mxu0
  %v1955 = vadd.f32 0.0, %v1954
  %1956 = vmatmul.bf16.gmra.mxu0 %v1923
  %v1957 = vpop.f32.mrf.mxu0
  %v1958 = vadd.f32 0.0, %v1957
  %v1959 = vpop.f32.mrf.mxu0
  %v1960 = vadd.f32 0.0, %v1959
  %1961 = vmatmul.bf16.gmra.mxu0 %v1926
  %v1962 = vpop.f32.mrf.mxu0
  %v1963 = vadd.f32 0.0, %v1962
  %v1964 = vpop.f32.mrf.mxu0
  %v1965 = vadd.f32 0.0, %v1964
  %1966 = vmatmul.bf16.gmra.mxu0 %v1929
  %v1967 = vpop.f32.mrf.mxu0
  %v1968 = vadd.f32 0.0, %v1967
  %v1969 = vpop.f32.mrf.mxu0
  %v1970 = vadd.f32 0.0, %v1969
  %1971 = vmatmul.bf16.gmra.mxu0 %v1932
  %v1972 = vpop.f32.mrf.mxu0
  %v1973 = vadd.f32 0.0, %v1972
  %v1974 = vpop.f32.mrf.mxu0
  %v1975 = vadd.f32 0.0, %v1974
  %1976 = vmatmul.bf16.gmra.mxu0 %v1935
  %v1977 = vpop.f32.mrf.mxu0
  %v1978 = vadd.f32 0.0, %v1977
  %v1979 = vpop.f32.mrf.mxu0
  %v1980 = vadd.f32 0.0, %v1979
  %1981 = vmatmul.bf16.gmra.mxu0 %v1938
  %v1982 = vpop.f32.mrf.mxu0
  %v1983 = vadd.f32 0.0, %v1982
  %v1984 = vpop.f32.mrf.mxu0
  %v1985 = vadd.f32 0.0, %v1984
  %1986 = vmatmul.bf16.gmra.mxu0 %v1941
  %v1987 = vpop.f32.mrf.mxu0
  %v1988 = vadd.f32 0.0, %v1987
  %v1989 = vpop.f32.mrf.mxu0
  %v1990 = vadd.f32 0.0, %v1989
  %1991 = vdwg.mxu0
  %v1992 = vadd.f32 %v1839, %v1953
  %v1993 = vadd.f32 %v1841, %v1955
  %v1994 = vadd.f32 %v1844, %v1958
  %v1995 = vadd.f32 %v1846, %v1960
  %v1996 = vadd.f32 %v1849, %v1963
  %v1997 = vadd.f32 %v1851, %v1965
  %v1998 = vadd.f32 %v1854, %v1968
  %v1999 = vadd.f32 %v1856, %v1970
  %v2000 = vadd.f32 %v1859, %v1973
  %v2001 = vadd.f32 %v1861, %v1975
  %v2002 = vadd.f32 %v1864, %v1978
  %v2003 = vadd.f32 %v1866, %v1980
  %v2004 = vadd.f32 %v1869, %v1983
  %v2005 = vadd.f32 %v1871, %v1985
  %v2006 = vadd.f32 %v1874, %v1988
  %v2007 = vadd.f32 %v1876, %v1990
  %s2008 = scalar_lea.vmem [#allocation2], 400
  %v2009 = vld [vmem:[%s2008] sm:$0xff]
  %v2010 = vld [vmem:[%s2008 + $0x8] sm:$0xff]
  %v2011 = vld [vmem:[%s2008 + $0x10] sm:$0xff]
  %v2012 = vld [vmem:[%s2008 + $0x18] sm:$0xff]
  %v2013 = vld [vmem:[%s2008 + $0x50] sm:$0xff]
  %v2014 = vld [vmem:[%s2008 + $0x58] sm:$0xff]
  %v2015 = vld [vmem:[%s2008 + $0x60] sm:$0xff]
  %v2016 = vld [vmem:[%s2008 + $0x68] sm:$0xff]
  %v2017 = vld [vmem:[%s2008 + $0xa0] sm:$0xff]
  %v2018 = vld [vmem:[%s2008 + $0xa8] sm:$0xff]
  %v2019 = vld [vmem:[%s2008 + $0xb0] sm:$0xff]
  %v2020 = vld [vmem:[%s2008 + $0xb8] sm:$0xff]
  %v2021 = vld [vmem:[%s2008 + $0xf0] sm:$0xff]
  %v2022 = vld [vmem:[%s2008 + $0xf8] sm:$0xff]
  %v2023 = vld [vmem:[%s2008 + $0x100] sm:$0xff]
  %v2024 = vld [vmem:[%s2008 + $0x108] sm:$0xff]
  %v2025 = vpack.c.bf16 %v2010, %v2009
  %v2026 = vpack.c.bf16 %v2012, %v2011
  %v2027 = vpack.c.bf16 %v2014, %v2013
  %v2028 = vpack.c.bf16 %v2016, %v2015
  %v2029 = vpack.c.bf16 %v2018, %v2017
  %v2030 = vpack.c.bf16 %v2020, %v2019
  %v2031 = vpack.c.bf16 %v2022, %v2021
  %v2032 = vpack.c.bf16 %v2024, %v2023
  %v2033 = vld [vmem:[%s6 + $0x30] sm:$0xf]
  %v2034 = vld [vmem:[%s6 + $0x34] sm:$0xf]
  %v2035 = vld [vmem:[%s6 + $0x38] sm:$0xf]
  %v2036 = vld [vmem:[%s6 + $0x3c] sm:$0xf]
  %v2041 = vunpack.c.l.b16 %v2033
  %v2042 = vunpack.c.l.b16 %v2034
  %v2043 = vunpack.c.l.b16 %v2035
  %v2044 = vunpack.c.l.b16 %v2036
  %v2045 = vpack.c.b16 %v2042, %v2041
  %v2046 = vpack.c.b16 %v2044, %v2043
  %v2050 = vsel %vm1452, %v2025, 0
  %v2053 = vsel %vm1452, %v2026, 0
  %v2056 = vsel %vm1452, %v2027, 0
  %v2059 = vsel %vm1452, %v2028, 0
  %v2062 = vsel %vm1452, %v2029, 0
  %v2065 = vsel %vm1452, %v2030, 0
  %v2068 = vsel %vm1452, %v2031, 0
  %v2071 = vsel %vm1452, %v2032, 0
  %2073 = vmatpush.bf16.msra.mxu0 0
  %2074 = vmatpush.bf16.msra.mxu0 0
  %2075 = vmatpush.bf16.msra.mxu0 0
  %2076 = vmatpush.bf16.msra.mxu0 0
  %2077 = vmatpush.bf16.msra.mxu0 0
  %2078 = vmatpush.bf16.msra.mxu0 0
  %2079 = vmatpush.bf16.msra.mxu0 %v2046
  %2080 = vmatpush.bf16.msra.mxu0 %v2045
  %2081 = vmatmul.bf16.gmra.mxu0 %v2050
  %v2082 = vpop.f32.mrf.mxu0
  %v2083 = vadd.f32 0.0, %v2082
  %v2084 = vpop.f32.mrf.mxu0
  %v2085 = vadd.f32 0.0, %v2084
  %2086 = vmatmul.bf16.gmra.mxu0 %v2053
  %v2087 = vpop.f32.mrf.mxu0
  %v2088 = vadd.f32 0.0, %v2087
  %v2089 = vpop.f32.mrf.mxu0
  %v2090 = vadd.f32 0.0, %v2089
  %2091 = vmatmul.bf16.gmra.mxu0 %v2056
  %v2092 = vpop.f32.mrf.mxu0
  %v2093 = vadd.f32 0.0, %v2092
  %v2094 = vpop.f32.mrf.mxu0
  %v2095 = vadd.f32 0.0, %v2094
  %2096 = vmatmul.bf16.gmra.mxu0 %v2059
  %v2097 = vpop.f32.mrf.mxu0
  %v2098 = vadd.f32 0.0, %v2097
  %v2099 = vpop.f32.mrf.mxu0
  %v2100 = vadd.f32 0.0, %v2099
  %2101 = vmatmul.bf16.gmra.mxu0 %v2062
  %v2102 = vpop.f32.mrf.mxu0
  %v2103 = vadd.f32 0.0, %v2102
  %v2104 = vpop.f32.mrf.mxu0
  %v2105 = vadd.f32 0.0, %v2104
  %2106 = vmatmul.bf16.gmra.mxu0 %v2065
  %v2107 = vpop.f32.mrf.mxu0
  %v2108 = vadd.f32 0.0, %v2107
  %v2109 = vpop.f32.mrf.mxu0
  %v2110 = vadd.f32 0.0, %v2109
  %2111 = vmatmul.bf16.gmra.mxu0 %v2068
  %v2112 = vpop.f32.mrf.mxu0
  %v2113 = vadd.f32 0.0, %v2112
  %v2114 = vpop.f32.mrf.mxu0
  %v2115 = vadd.f32 0.0, %v2114
  %2116 = vmatmul.bf16.gmra.mxu0 %v2071
  %v2117 = vpop.f32.mrf.mxu0
  %v2118 = vadd.f32 0.0, %v2117
  %v2119 = vpop.f32.mrf.mxu0
  %v2120 = vadd.f32 0.0, %v2119
  %2121 = vdwg.mxu0
  %v2122 = vadd.f32 %v1992, %v2083
  %v2123 = vadd.f32 %v1993, %v2085
  %v2124 = vadd.f32 %v1994, %v2088
  %v2125 = vadd.f32 %v1995, %v2090
  %v2126 = vadd.f32 %v1996, %v2093
  %v2127 = vadd.f32 %v1997, %v2095
  %v2128 = vadd.f32 %v1998, %v2098
  %v2129 = vadd.f32 %v1999, %v2100
  %v2130 = vadd.f32 %v2000, %v2103
  %v2131 = vadd.f32 %v2001, %v2105
  %v2132 = vadd.f32 %v2002, %v2108
  %v2133 = vadd.f32 %v2003, %v2110
  %v2134 = vadd.f32 %v2004, %v2113
  %v2135 = vadd.f32 %v2005, %v2115
  %v2136 = vadd.f32 %v2006, %v2118
  %v2137 = vadd.f32 %v2007, %v2120
  %v2138 = vld [vmem:[%s1553] sm:$0xff]
  %v2139 = vld [vmem:[%s1553 + $0x8] sm:$0xff]
  %v2140 = vld [vmem:[%s1553 + $0x10] sm:$0xff]
  %v2141 = vld [vmem:[%s1553 + $0x18] sm:$0xff]
  %v2142 = vld [vmem:[%s1553 + $0x50] sm:$0xff]
  %v2143 = vld [vmem:[%s1553 + $0x58] sm:$0xff]
  %v2144 = vld [vmem:[%s1553 + $0x60] sm:$0xff]
  %v2145 = vld [vmem:[%s1553 + $0x68] sm:$0xff]
  %v2146 = vld [vmem:[%s1553 + $0xa0] sm:$0xff]
  %v2147 = vld [vmem:[%s1553 + $0xa8] sm:$0xff]
  %v2148 = vld [vmem:[%s1553 + $0xb0] sm:$0xff]
  %v2149 = vld [vmem:[%s1553 + $0xb8] sm:$0xff]
  %v2150 = vld [vmem:[%s1553 + $0xf0] sm:$0xff]
  %v2151 = vld [vmem:[%s1553 + $0xf8] sm:$0xff]
  %v2152 = vld [vmem:[%s1553 + $0x100] sm:$0xff]
  %v2153 = vld [vmem:[%s1553 + $0x108] sm:$0xff]
  %v2154 = vpack.c.bf16 %v2139, %v2138
  %v2155 = vpack.c.bf16 %v2141, %v2140
  %v2156 = vpack.c.bf16 %v2143, %v2142
  %v2157 = vpack.c.bf16 %v2145, %v2144
  %v2158 = vpack.c.bf16 %v2147, %v2146
  %v2159 = vpack.c.bf16 %v2149, %v2148
  %v2160 = vpack.c.bf16 %v2151, %v2150
  %v2161 = vpack.c.bf16 %v2153, %v2152
  %v2162 = vld [vmem:[%s6 + $0x40] sm:$0xf]
  %v2163 = vld [vmem:[%s6 + $0x44] sm:$0xf]
  %v2164 = vld [vmem:[%s6 + $0x48] sm:$0xf]
  %v2165 = vld [vmem:[%s6 + $0x4c] sm:$0xf]
  %v2170 = vunpack.c.l.b16 %v2162
  %v2171 = vunpack.c.l.b16 %v2163
  %v2172 = vunpack.c.l.b16 %v2164
  %v2173 = vunpack.c.l.b16 %v2165
  %v2174 = vpack.c.b16 %v2171, %v2170
  %v2175 = vpack.c.b16 %v2173, %v2172
  %v2179 = vsel %vm1452, %v2154, 0
  %v2182 = vsel %vm1452, %v2155, 0
  %v2185 = vsel %vm1452, %v2156, 0
  %v2188 = vsel %vm1452, %v2157, 0
  %v2191 = vsel %vm1452, %v2158, 0
  %v2194 = vsel %vm1452, %v2159, 0
  %v2197 = vsel %vm1452, %v2160, 0
  %v2200 = vsel %vm1452, %v2161, 0
  %2202 = vmatpush.bf16.msra.mxu0 0
  %2203 = vmatpush.bf16.msra.mxu0 0
  %2204 = vmatpush.bf16.msra.mxu0 0
  %2205 = vmatpush.bf16.msra.mxu0 0
  %2206 = vmatpush.bf16.msra.mxu0 0
  %2207 = vmatpush.bf16.msra.mxu0 0
  %2208 = vmatpush.bf16.msra.mxu0 %v2175
  %2209 = vmatpush.bf16.msra.mxu0 %v2174
  %2210 = vmatmul.bf16.gmra.mxu0 %v2179
  %v2211 = vpop.f32.mrf.mxu0
  %v2212 = vadd.f32 0.0, %v2211
  %v2213 = vpop.f32.mrf.mxu0
  %v2214 = vadd.f32 0.0, %v2213
  %2215 = vmatmul.bf16.gmra.mxu0 %v2182
  %v2216 = vpop.f32.mrf.mxu0
  %v2217 = vadd.f32 0.0, %v2216
  %v2218 = vpop.f32.mrf.mxu0
  %v2219 = vadd.f32 0.0, %v2218
  %2220 = vmatmul.bf16.gmra.mxu0 %v2185
  %v2221 = vpop.f32.mrf.mxu0
  %v2222 = vadd.f32 0.0, %v2221
  %v2223 = vpop.f32.mrf.mxu0
  %v2224 = vadd.f32 0.0, %v2223
  %2225 = vmatmul.bf16.gmra.mxu0 %v2188
  %v2226 = vpop.f32.mrf.mxu0
  %v2227 = vadd.f32 0.0, %v2226
  %v2228 = vpop.f32.mrf.mxu0
  %v2229 = vadd.f32 0.0, %v2228
  %2230 = vmatmul.bf16.gmra.mxu0 %v2191
  %v2231 = vpop.f32.mrf.mxu0
  %v2232 = vadd.f32 0.0, %v2231
  %v2233 = vpop.f32.mrf.mxu0
  %v2234 = vadd.f32 0.0, %v2233
  %2235 = vmatmul.bf16.gmra.mxu0 %v2194
  %v2236 = vpop.f32.mrf.mxu0
  %v2237 = vadd.f32 0.0, %v2236
  %v2238 = vpop.f32.mrf.mxu0
  %v2239 = vadd.f32 0.0, %v2238
  %2240 = vmatmul.bf16.gmra.mxu0 %v2197
  %v2241 = vpop.f32.mrf.mxu0
  %v2242 = vadd.f32 0.0, %v2241
  %v2243 = vpop.f32.mrf.mxu0
  %v2244 = vadd.f32 0.0, %v2243
  %2245 = vmatmul.bf16.gmra.mxu0 %v2200
  %v2246 = vpop.f32.mrf.mxu0
  %v2247 = vadd.f32 0.0, %v2246
  %v2248 = vpop.f32.mrf.mxu0
  %v2249 = vadd.f32 0.0, %v2248
  %2250 = vdwg.mxu0
  %v2251 = vadd.f32 %v2122, %v2212
  %v2252 = vadd.f32 %v2123, %v2214
  %v2253 = vadd.f32 %v2124, %v2217
  %v2254 = vadd.f32 %v2125, %v2219
  %v2255 = vadd.f32 %v2126, %v2222
  %v2256 = vadd.f32 %v2127, %v2224
  %v2257 = vadd.f32 %v2128, %v2227
  %v2258 = vadd.f32 %v2129, %v2229
  %v2259 = vadd.f32 %v2130, %v2232
  %v2260 = vadd.f32 %v2131, %v2234
  %v2261 = vadd.f32 %v2132, %v2237
  %v2262 = vadd.f32 %v2133, %v2239
  %v2263 = vadd.f32 %v2134, %v2242
  %v2264 = vadd.f32 %v2135, %v2244
  %v2265 = vadd.f32 %v2136, %v2247
  %v2266 = vadd.f32 %v2137, %v2249
  %v2267 = vld [vmem:[%s1555] sm:$0xff]
  %v2268 = vld [vmem:[%s1555 + $0x8] sm:$0xff]
  %v2269 = vld [vmem:[%s1555 + $0x10] sm:$0xff]
  %v2270 = vld [vmem:[%s1555 + $0x18] sm:$0xff]
  %v2271 = vld [vmem:[%s1555 + $0x50] sm:$0xff]
  %v2272 = vld [vmem:[%s1555 + $0x58] sm:$0xff]
  %v2273 = vld [vmem:[%s1555 + $0x60] sm:$0xff]
  %v2274 = vld [vmem:[%s1555 + $0x68] sm:$0xff]
  %v2275 = vld [vmem:[%s1555 + $0xa0] sm:$0xff]
  %v2276 = vld [vmem:[%s1555 + $0xa8] sm:$0xff]
  %v2277 = vld [vmem:[%s1555 + $0xb0] sm:$0xff]
  %v2278 = vld [vmem:[%s1555 + $0xb8] sm:$0xff]
  %v2279 = vld [vmem:[%s1555 + $0xf0] sm:$0xff]
  %v2280 = vld [vmem:[%s1555 + $0xf8] sm:$0xff]
  %v2281 = vld [vmem:[%s1555 + $0x100] sm:$0xff]
  %v2282 = vld [vmem:[%s1555 + $0x108] sm:$0xff]
  %v2283 = vpack.c.bf16 %v2268, %v2267
  %v2284 = vpack.c.bf16 %v2270, %v2269
  %v2285 = vpack.c.bf16 %v2272, %v2271
  %v2286 = vpack.c.bf16 %v2274, %v2273
  %v2287 = vpack.c.bf16 %v2276, %v2275
  %v2288 = vpack.c.bf16 %v2278, %v2277
  %v2289 = vpack.c.bf16 %v2280, %v2279
  %v2290 = vpack.c.bf16 %v2282, %v2281
  %v2291 = vld [vmem:[%s6 + $0x50] sm:$0xf]
  %v2292 = vld [vmem:[%s6 + $0x54] sm:$0xf]
  %v2293 = vld [vmem:[%s6 + $0x58] sm:$0xf]
  %v2294 = vld [vmem:[%s6 + $0x5c] sm:$0xf]
  %v2299 = vunpack.c.l.b16 %v2291
  %v2300 = vunpack.c.l.b16 %v2292
  %v2301 = vunpack.c.l.b16 %v2293
  %v2302 = vunpack.c.l.b16 %v2294
  %v2303 = vpack.c.b16 %v2300, %v2299
  %v2304 = vpack.c.b16 %v2302, %v2301
  %v2308 = vsel %vm1452, %v2283, 0
  %v2311 = vsel %vm1452, %v2284, 0
  %v2314 = vsel %vm1452, %v2285, 0
  %v2317 = vsel %vm1452, %v2286, 0
  %v2320 = vsel %vm1452, %v2287, 0
  %v2323 = vsel %vm1452, %v2288, 0
  %v2326 = vsel %vm1452, %v2289, 0
  %v2329 = vsel %vm1452, %v2290, 0
  %2331 = vmatpush.bf16.msra.mxu0 0
  %2332 = vmatpush.bf16.msra.mxu0 0
  %2333 = vmatpush.bf16.msra.mxu0 0
  %2334 = vmatpush.bf16.msra.mxu0 0
  %2335 = vmatpush.bf16.msra.mxu0 0
  %2336 = vmatpush.bf16.msra.mxu0 0
  %2337 = vmatpush.bf16.msra.mxu0 %v2304
  %2338 = vmatpush.bf16.msra.mxu0 %v2303
  %2339 = vmatmul.bf16.gmra.mxu0 %v2308
  %v2340 = vpop.f32.mrf.mxu0
  %v2341 = vadd.f32 0.0, %v2340
  %v2342 = vpop.f32.mrf.mxu0
  %v2343 = vadd.f32 0.0, %v2342
  %2344 = vmatmul.bf16.gmra.mxu0 %v2311
  %v2345 = vpop.f32.mrf.mxu0
  %v2346 = vadd.f32 0.0, %v2345
  %v2347 = vpop.f32.mrf.mxu0
  %v2348 = vadd.f32 0.0, %v2347
  %2349 = vmatmul.bf16.gmra.mxu0 %v2314
  %v2350 = vpop.f32.mrf.mxu0
  %v2351 = vadd.f32 0.0, %v2350
  %v2352 = vpop.f32.mrf.mxu0
  %v2353 = vadd.f32 0.0, %v2352
  %2354 = vmatmul.bf16.gmra.mxu0 %v2317
  %v2355 = vpop.f32.mrf.mxu0
  %v2356 = vadd.f32 0.0, %v2355
  %v2357 = vpop.f32.mrf.mxu0
  %v2358 = vadd.f32 0.0, %v2357
  %2359 = vmatmul.bf16.gmra.mxu0 %v2320
  %v2360 = vpop.f32.mrf.mxu0
  %v2361 = vadd.f32 0.0, %v2360
  %v2362 = vpop.f32.mrf.mxu0
  %v2363 = vadd.f32 0.0, %v2362
  %2364 = vmatmul.bf16.gmra.mxu0 %v2323
  %v2365 = vpop.f32.mrf.mxu0
  %v2366 = vadd.f32 0.0, %v2365
  %v2367 = vpop.f32.mrf.mxu0
  %v2368 = vadd.f32 0.0, %v2367
  %2369 = vmatmul.bf16.gmra.mxu0 %v2326
  %v2370 = vpop.f32.mrf.mxu0
  %v2371 = vadd.f32 0.0, %v2370
  %v2372 = vpop.f32.mrf.mxu0
  %v2373 = vadd.f32 0.0, %v2372
  %2374 = vmatmul.bf16.gmra.mxu0 %v2329
  %v2375 = vpop.f32.mrf.mxu0
  %v2376 = vadd.f32 0.0, %v2375
  %v2377 = vpop.f32.mrf.mxu0
  %v2378 = vadd.f32 0.0, %v2377
  %2379 = vdwg.mxu0
  %v2380 = vadd.f32 %v2251, %v2341
  %v2381 = vadd.f32 %v2252, %v2343
  %v2382 = vadd.f32 %v2253, %v2346
  %v2383 = vadd.f32 %v2254, %v2348
  %v2384 = vadd.f32 %v2255, %v2351
  %v2385 = vadd.f32 %v2256, %v2353
  %v2386 = vadd.f32 %v2257, %v2356
  %v2387 = vadd.f32 %v2258, %v2358
  %v2388 = vadd.f32 %v2259, %v2361
  %v2389 = vadd.f32 %v2260, %v2363
  %v2390 = vadd.f32 %v2261, %v2366
  %v2391 = vadd.f32 %v2262, %v2368
  %v2392 = vadd.f32 %v2263, %v2371
  %v2393 = vadd.f32 %v2264, %v2373
  %v2394 = vadd.f32 %v2265, %v2376
  %v2395 = vadd.f32 %v2266, %v2378
  %s2396 = scalar_lea.vmem [#allocation2], 80
  %v2397 = vld [vmem:[%s2396] sm:$0xff]
  %v2398 = vld [vmem:[%s2396 + $0x8] sm:$0xff]
  %v2399 = vld [vmem:[%s2396 + $0x10] sm:$0xff]
  %v2400 = vld [vmem:[%s2396 + $0x18] sm:$0xff]
  %v2401 = vld [vmem:[%s2396 + $0x50] sm:$0xff]
  %v2402 = vld [vmem:[%s2396 + $0x58] sm:$0xff]
  %v2403 = vld [vmem:[%s2396 + $0x60] sm:$0xff]
  %v2404 = vld [vmem:[%s2396 + $0x68] sm:$0xff]
  %v2405 = vld [vmem:[%s2396 + $0xa0] sm:$0xff]
  %v2406 = vld [vmem:[%s2396 + $0xa8] sm:$0xff]
  %v2407 = vld [vmem:[%s2396 + $0xb0] sm:$0xff]
  %v2408 = vld [vmem:[%s2396 + $0xb8] sm:$0xff]
  %v2409 = vld [vmem:[%s2396 + $0xf0] sm:$0xff]
  %v2410 = vld [vmem:[%s2396 + $0xf8] sm:$0xff]
  %v2411 = vld [vmem:[%s2396 + $0x100] sm:$0xff]
  %v2412 = vld [vmem:[%s2396 + $0x108] sm:$0xff]
  %v2413 = vpack.c.bf16 %v2398, %v2397
  %v2414 = vpack.c.bf16 %v2400, %v2399
  %v2415 = vpack.c.bf16 %v2402, %v2401
  %v2416 = vpack.c.bf16 %v2404, %v2403
  %v2417 = vpack.c.bf16 %v2406, %v2405
  %v2418 = vpack.c.bf16 %v2408, %v2407
  %v2419 = vpack.c.bf16 %v2410, %v2409
  %v2420 = vpack.c.bf16 %v2412, %v2411
  %v2421 = vld [vmem:[%s6 + $0x60] sm:$0xf]
  %v2422 = vld [vmem:[%s6 + $0x64] sm:$0xf]
  %v2423 = vld [vmem:[%s6 + $0x68] sm:$0xf]
  %v2424 = vld [vmem:[%s6 + $0x6c] sm:$0xf]
  %v2429 = vunpack.c.l.b16 %v2421
  %v2430 = vunpack.c.l.b16 %v2422
  %v2431 = vunpack.c.l.b16 %v2423
  %v2432 = vunpack.c.l.b16 %v2424
  %v2433 = vpack.c.b16 %v2430, %v2429
  %v2434 = vpack.c.b16 %v2432, %v2431
  %v2438 = vsel %vm1452, %v2413, 0
  %v2441 = vsel %vm1452, %v2414, 0
  %v2444 = vsel %vm1452, %v2415, 0
  %v2447 = vsel %vm1452, %v2416, 0
  %v2450 = vsel %vm1452, %v2417, 0
  %v2453 = vsel %vm1452, %v2418, 0
  %v2456 = vsel %vm1452, %v2419, 0
  %v2459 = vsel %vm1452, %v2420, 0
  %2461 = vmatpush.bf16.msra.mxu0 0
  %2462 = vmatpush.bf16.msra.mxu0 0
  %2463 = vmatpush.bf16.msra.mxu0 0
  %2464 = vmatpush.bf16.msra.mxu0 0
  %2465 = vmatpush.bf16.msra.mxu0 0
  %2466 = vmatpush.bf16.msra.mxu0 0
  %2467 = vmatpush.bf16.msra.mxu0 %v2434
  %2468 = vmatpush.bf16.msra.mxu0 %v2433
  %2469 = vmatmul.bf16.gmra.mxu0 %v2438
  %v2470 = vpop.f32.mrf.mxu0
  %v2471 = vadd.f32 0.0, %v2470
  %v2472 = vpop.f32.mrf.mxu0
  %v2473 = vadd.f32 0.0, %v2472
  %2474 = vmatmul.bf16.gmra.mxu0 %v2441
  %v2475 = vpop.f32.mrf.mxu0
  %v2476 = vadd.f32 0.0, %v2475
  %v2477 = vpop.f32.mrf.mxu0
  %v2478 = vadd.f32 0.0, %v2477
  %2479 = vmatmul.bf16.gmra.mxu0 %v2444
  %v2480 = vpop.f32.mrf.mxu0
  %v2481 = vadd.f32 0.0, %v2480
  %v2482 = vpop.f32.mrf.mxu0
  %v2483 = vadd.f32 0.0, %v2482
  %2484 = vmatmul.bf16.gmra.mxu0 %v2447
  %v2485 = vpop.f32.mrf.mxu0
  %v2486 = vadd.f32 0.0, %v2485
  %v2487 = vpop.f32.mrf.mxu0
  %v2488 = vadd.f32 0.0, %v2487
  %2489 = vmatmul.bf16.gmra.mxu0 %v2450
  %v2490 = vpop.f32.mrf.mxu0
  %v2491 = vadd.f32 0.0, %v2490
  %v2492 = vpop.f32.mrf.mxu0
  %v2493 = vadd.f32 0.0, %v2492
  %2494 = vmatmul.bf16.gmra.mxu0 %v2453
  %v2495 = vpop.f32.mrf.mxu0
  %v2496 = vadd.f32 0.0, %v2495
  %v2497 = vpop.f32.mrf.mxu0
  %v2498 = vadd.f32 0.0, %v2497
  %2499 = vmatmul.bf16.gmra.mxu0 %v2456
  %v2500 = vpop.f32.mrf.mxu0
  %v2501 = vadd.f32 0.0, %v2500
  %v2502 = vpop.f32.mrf.mxu0
  %v2503 = vadd.f32 0.0, %v2502
  %2504 = vmatmul.bf16.gmra.mxu0 %v2459
  %v2505 = vpop.f32.mrf.mxu0
  %v2506 = vadd.f32 0.0, %v2505
  %v2507 = vpop.f32.mrf.mxu0
  %v2508 = vadd.f32 0.0, %v2507
  %2509 = vdwg.mxu0
  %v2510 = vadd.f32 %v2380, %v2471
  %v2511 = vadd.f32 %v2381, %v2473
  %v2512 = vadd.f32 %v2382, %v2476
  %v2513 = vadd.f32 %v2383, %v2478
  %v2514 = vadd.f32 %v2384, %v2481
  %v2515 = vadd.f32 %v2385, %v2483
  %v2516 = vadd.f32 %v2386, %v2486
  %v2517 = vadd.f32 %v2387, %v2488
  %v2518 = vadd.f32 %v2388, %v2491
  %v2519 = vadd.f32 %v2389, %v2493
  %v2520 = vadd.f32 %v2390, %v2496
  %v2521 = vadd.f32 %v2391, %v2498
  %v2522 = vadd.f32 %v2392, %v2501
  %v2523 = vadd.f32 %v2393, %v2503
  %v2524 = vadd.f32 %v2394, %v2506
  %v2525 = vadd.f32 %v2395, %v2508
  %v2526 = vld [vmem:[%s1567] sm:$0xff]
  %v2527 = vld [vmem:[%s1567 + $0x8] sm:$0xff]
  %v2528 = vld [vmem:[%s1567 + $0x10] sm:$0xff]
  %v2529 = vld [vmem:[%s1567 + $0x18] sm:$0xff]
  %v2530 = vld [vmem:[%s1567 + $0x50] sm:$0xff]
  %v2531 = vld [vmem:[%s1567 + $0x58] sm:$0xff]
  %v2532 = vld [vmem:[%s1567 + $0x60] sm:$0xff]
  %v2533 = vld [vmem:[%s1567 + $0x68] sm:$0xff]
  %v2534 = vld [vmem:[%s1567 + $0xa0] sm:$0xff]
  %v2535 = vld [vmem:[%s1567 + $0xa8] sm:$0xff]
  %v2536 = vld [vmem:[%s1567 + $0xb0] sm:$0xff]
  %v2537 = vld [vmem:[%s1567 + $0xb8] sm:$0xff]
  %v2538 = vld [vmem:[%s1567 + $0xf0] sm:$0xff]
  %v2539 = vld [vmem:[%s1567 + $0xf8] sm:$0xff]
  %v2540 = vld [vmem:[%s1567 + $0x100] sm:$0xff]
  %v2541 = vld [vmem:[%s1567 + $0x108] sm:$0xff]
  %v2542 = vpack.c.bf16 %v2527, %v2526
  %v2543 = vpack.c.bf16 %v2529, %v2528
  %v2544 = vpack.c.bf16 %v2531, %v2530
  %v2545 = vpack.c.bf16 %v2533, %v2532
  %v2546 = vpack.c.bf16 %v2535, %v2534
  %v2547 = vpack.c.bf16 %v2537, %v2536
  %v2548 = vpack.c.bf16 %v2539, %v2538
  %v2549 = vpack.c.bf16 %v2541, %v2540
  %v2550 = vld [vmem:[%s6 + $0x70] sm:$0xf]
  %v2551 = vld [vmem:[%s6 + $0x74] sm:$0xf]
  %v2552 = vld [vmem:[%s6 + $0x78] sm:$0xf]
  %v2553 = vld [vmem:[%s6 + $0x7c] sm:$0xf]
  %v2558 = vunpack.c.l.b16 %v2550
  %v2559 = vunpack.c.l.b16 %v2551
  %v2560 = vunpack.c.l.b16 %v2552
  %v2561 = vunpack.c.l.b16 %v2553
  %v2562 = vpack.c.b16 %v2559, %v2558
  %v2563 = vpack.c.b16 %v2561, %v2560
  %v2567 = vsel %vm1452, %v2542, 0
  %v2570 = vsel %vm1452, %v2543, 0
  %v2573 = vsel %vm1452, %v2544, 0
  %v2576 = vsel %vm1452, %v2545, 0
  %v2579 = vsel %vm1452, %v2546, 0
  %v2582 = vsel %vm1452, %v2547, 0
  %v2585 = vsel %vm1452, %v2548, 0
  %v2588 = vsel %vm1452, %v2549, 0
  %2590 = vmatpush.bf16.msra.mxu0 0
  %2591 = vmatpush.bf16.msra.mxu0 0
  %2592 = vmatpush.bf16.msra.mxu0 0
  %2593 = vmatpush.bf16.msra.mxu0 0
  %2594 = vmatpush.bf16.msra.mxu0 0
  %2595 = vmatpush.bf16.msra.mxu0 0
  %2596 = vmatpush.bf16.msra.mxu0 %v2563
  %2597 = vmatpush.bf16.msra.mxu0 %v2562
  %2598 = vmatmul.bf16.gmra.mxu0 %v2567
  %v2599 = vpop.f32.mrf.mxu0
  %v2600 = vadd.f32 0.0, %v2599
  %v2601 = vpop.f32.mrf.mxu0
  %v2602 = vadd.f32 0.0, %v2601
  %2603 = vmatmul.bf16.gmra.mxu0 %v2570
  %v2604 = vpop.f32.mrf.mxu0
  %v2605 = vadd.f32 0.0, %v2604
  %v2606 = vpop.f32.mrf.mxu0
  %v2607 = vadd.f32 0.0, %v2606
  %2608 = vmatmul.bf16.gmra.mxu0 %v2573
  %v2609 = vpop.f32.mrf.mxu0
  %v2610 = vadd.f32 0.0, %v2609
  %v2611 = vpop.f32.mrf.mxu0
  %v2612 = vadd.f32 0.0, %v2611
  %2613 = vmatmul.bf16.gmra.mxu0 %v2576
  %v2614 = vpop.f32.mrf.mxu0
  %v2615 = vadd.f32 0.0, %v2614
  %v2616 = vpop.f32.mrf.mxu0
  %v2617 = vadd.f32 0.0, %v2616
  %2618 = vmatmul.bf16.gmra.mxu0 %v2579
  %v2619 = vpop.f32.mrf.mxu0
  %v2620 = vadd.f32 0.0, %v2619
  %v2621 = vpop.f32.mrf.mxu0
  %v2622 = vadd.f32 0.0, %v2621
  %2623 = vmatmul.bf16.gmra.mxu0 %v2582
  %v2624 = vpop.f32.mrf.mxu0
  %v2625 = vadd.f32 0.0, %v2624
  %v2626 = vpop.f32.mrf.mxu0
  %v2627 = vadd.f32 0.0, %v2626
  %2628 = vmatmul.bf16.gmra.mxu0 %v2585
  %v2629 = vpop.f32.mrf.mxu0
  %v2630 = vadd.f32 0.0, %v2629
  %v2631 = vpop.f32.mrf.mxu0
  %v2632 = vadd.f32 0.0, %v2631
  %2633 = vmatmul.bf16.gmra.mxu0 %v2588
  %v2634 = vpop.f32.mrf.mxu0
  %v2635 = vadd.f32 0.0, %v2634
  %v2636 = vpop.f32.mrf.mxu0
  %v2637 = vadd.f32 0.0, %v2636
  %2638 = vdwg.mxu0
  %v2639 = vadd.f32 %v2510, %v2600
  %v2640 = vadd.f32 %v2511, %v2602
  %v2641 = vadd.f32 %v2512, %v2605
  %v2642 = vadd.f32 %v2513, %v2607
  %v2643 = vadd.f32 %v2514, %v2610
  %v2644 = vadd.f32 %v2515, %v2612
  %v2645 = vadd.f32 %v2516, %v2615
  %v2646 = vadd.f32 %v2517, %v2617
  %v2647 = vadd.f32 %v2518, %v2620
  %v2648 = vadd.f32 %v2519, %v2622
  %v2649 = vadd.f32 %v2520, %v2625
  %v2650 = vadd.f32 %v2521, %v2627
  %v2651 = vadd.f32 %v2522, %v2630
  %v2652 = vadd.f32 %v2523, %v2632
  %v2653 = vadd.f32 %v2524, %v2635
  %v2654 = vadd.f32 %v2525, %v2637
  %v2655 = vld [vmem:[%s1569] sm:$0xff]
  %v2656 = vld [vmem:[%s1569 + $0x8] sm:$0xff]
  %v2657 = vld [vmem:[%s1569 + $0x10] sm:$0xff]
  %v2658 = vld [vmem:[%s1569 + $0x18] sm:$0xff]
  %v2659 = vld [vmem:[%s1569 + $0x50] sm:$0xff]
  %v2660 = vld [vmem:[%s1569 + $0x58] sm:$0xff]
  %v2661 = vld [vmem:[%s1569 + $0x60] sm:$0xff]
  %v2662 = vld [vmem:[%s1569 + $0x68] sm:$0xff]
  %v2663 = vld [vmem:[%s1569 + $0xa0] sm:$0xff]
  %v2664 = vld [vmem:[%s1569 + $0xa8] sm:$0xff]
  %v2665 = vld [vmem:[%s1569 + $0xb0] sm:$0xff]
  %v2666 = vld [vmem:[%s1569 + $0xb8] sm:$0xff]
  %v2667 = vld [vmem:[%s1569 + $0xf0] sm:$0xff]
  %v2668 = vld [vmem:[%s1569 + $0xf8] sm:$0xff]
  %v2669 = vld [vmem:[%s1569 + $0x100] sm:$0xff]
  %v2670 = vld [vmem:[%s1569 + $0x108] sm:$0xff]
  %v2671 = vpack.c.bf16 %v2656, %v2655
  %v2672 = vpack.c.bf16 %v2658, %v2657
  %v2673 = vpack.c.bf16 %v2660, %v2659
  %v2674 = vpack.c.bf16 %v2662, %v2661
  %v2675 = vpack.c.bf16 %v2664, %v2663
  %v2676 = vpack.c.bf16 %v2666, %v2665
  %v2677 = vpack.c.bf16 %v2668, %v2667
  %v2678 = vpack.c.bf16 %v2670, %v2669
  %v2679 = vld [vmem:[%s6 + $0x80] sm:$0xf]
  %v2680 = vld [vmem:[%s6 + $0x84] sm:$0xf]
  %v2681 = vld [vmem:[%s6 + $0x88] sm:$0xf]
  %v2682 = vld [vmem:[%s6 + $0x8c] sm:$0xf]
  %v2687 = vunpack.c.l.b16 %v2679
  %v2688 = vunpack.c.l.b16 %v2680
  %v2689 = vunpack.c.l.b16 %v2681
  %v2690 = vunpack.c.l.b16 %v2682
  %v2691 = vpack.c.b16 %v2688, %v2687
  %v2692 = vpack.c.b16 %v2690, %v2689
  %v2696 = vsel %vm1452, %v2671, 0
  %v2699 = vsel %vm1452, %v2672, 0
  %v2702 = vsel %vm1452, %v2673, 0
  %v2705 = vsel %vm1452, %v2674, 0
  %v2708 = vsel %vm1452, %v2675, 0
  %v2711 = vsel %vm1452, %v2676, 0
  %v2714 = vsel %vm1452, %v2677, 0
  %v2717 = vsel %vm1452, %v2678, 0
  %2719 = vmatpush.bf16.msra.mxu0 0
  %2720 = vmatpush.bf16.msra.mxu0 0
  %2721 = vmatpush.bf16.msra.mxu0 0
  %2722 = vmatpush.bf16.msra.mxu0 0
  %2723 = vmatpush.bf16.msra.mxu0 0
  %2724 = vmatpush.bf16.msra.mxu0 0
  %2725 = vmatpush.bf16.msra.mxu0 %v2692
  %2726 = vmatpush.bf16.msra.mxu0 %v2691
  %2727 = vmatmul.bf16.gmra.mxu0 %v2696
  %v2728 = vpop.f32.mrf.mxu0
  %v2729 = vadd.f32 0.0, %v2728
  %v2730 = vpop.f32.mrf.mxu0
  %v2731 = vadd.f32 0.0, %v2730
  %2732 = vmatmul.bf16.gmra.mxu0 %v2699
  %v2733 = vpop.f32.mrf.mxu0
  %v2734 = vadd.f32 0.0, %v2733
  %v2735 = vpop.f32.mrf.mxu0
  %v2736 = vadd.f32 0.0, %v2735
  %2737 = vmatmul.bf16.gmra.mxu0 %v2702
  %v2738 = vpop.f32.mrf.mxu0
  %v2739 = vadd.f32 0.0, %v2738
  %v2740 = vpop.f32.mrf.mxu0
  %v2741 = vadd.f32 0.0, %v2740
  %2742 = vmatmul.bf16.gmra.mxu0 %v2705
  %v2743 = vpop.f32.mrf.mxu0
  %v2744 = vadd.f32 0.0, %v2743
  %v2745 = vpop.f32.mrf.mxu0
  %v2746 = vadd.f32 0.0, %v2745
  %2747 = vmatmul.bf16.gmra.mxu0 %v2708
  %v2748 = vpop.f32.mrf.mxu0
  %v2749 = vadd.f32 0.0, %v2748
  %v2750 = vpop.f32.mrf.mxu0
  %v2751 = vadd.f32 0.0, %v2750
  %2752 = vmatmul.bf16.gmra.mxu0 %v2711
  %v2753 = vpop.f32.mrf.mxu0
  %v2754 = vadd.f32 0.0, %v2753
  %v2755 = vpop.f32.mrf.mxu0
  %v2756 = vadd.f32 0.0, %v2755
  %2757 = vmatmul.bf16.gmra.mxu0 %v2714
  %v2758 = vpop.f32.mrf.mxu0
  %v2759 = vadd.f32 0.0, %v2758
  %v2760 = vpop.f32.mrf.mxu0
  %v2761 = vadd.f32 0.0, %v2760
  %2762 = vmatmul.bf16.gmra.mxu0 %v2717
  %v2763 = vpop.f32.mrf.mxu0
  %v2764 = vadd.f32 0.0, %v2763
  %v2765 = vpop.f32.mrf.mxu0
  %v2766 = vadd.f32 0.0, %v2765
  %2767 = vdwg.mxu0
  %v2768 = vadd.f32 %v2639, %v2729
  %v2769 = vadd.f32 %v2640, %v2731
  %v2770 = vadd.f32 %v2641, %v2734
  %v2771 = vadd.f32 %v2642, %v2736
  %v2772 = vadd.f32 %v2643, %v2739
  %v2773 = vadd.f32 %v2644, %v2741
  %v2774 = vadd.f32 %v2645, %v2744
  %v2775 = vadd.f32 %v2646, %v2746
  %v2776 = vadd.f32 %v2647, %v2749
  %v2777 = vadd.f32 %v2648, %v2751
  %v2778 = vadd.f32 %v2649, %v2754
  %v2779 = vadd.f32 %v2650, %v2756
  %v2780 = vadd.f32 %v2651, %v2759
  %v2781 = vadd.f32 %v2652, %v2761
  %v2782 = vadd.f32 %v2653, %v2764
  %v2783 = vadd.f32 %v2654, %v2766
  %v2784 = vld [vmem:[%s7] sm:$0x1]
  %v2786 = vperm.slane %v2784, 0
  %v2788 = vadd.f32 %v2768, %v2786
  %v2789 = vadd.f32 %v2769, %v2786
  %v2790 = vadd.f32 %v2770, %v2786
  %v2791 = vadd.f32 %v2771, %v2786
  %v2792 = vadd.f32 %v2772, %v2786
  %v2793 = vadd.f32 %v2773, %v2786
  %v2794 = vadd.f32 %v2774, %v2786
  %v2795 = vadd.f32 %v2775, %v2786
  %v2796 = vadd.f32 %v2776, %v2786
  %v2797 = vadd.f32 %v2777, %v2786
  %v2798 = vadd.f32 %v2778, %v2786
  %v2799 = vadd.f32 %v2779, %v2786
  %v2800 = vadd.f32 %v2780, %v2786
  %v2801 = vadd.f32 %v2781, %v2786
  %v2802 = vadd.f32 %v2782, %v2786
  %v2803 = vadd.f32 %v2783, %v2786
  %v2804 = vmax.f32 %v2788, 0.0
  %v2805 = vmax.f32 %v2789, 0.0
  %v2806 = vmax.f32 %v2790, 0.0
  %v2807 = vmax.f32 %v2791, 0.0
  %v2808 = vmax.f32 %v2792, 0.0
  %v2809 = vmax.f32 %v2793, 0.0
  %v2810 = vmax.f32 %v2794, 0.0
  %v2811 = vmax.f32 %v2795, 0.0
  %v2812 = vmax.f32 %v2796, 0.0
  %v2813 = vmax.f32 %v2797, 0.0
  %v2814 = vmax.f32 %v2798, 0.0
  %v2815 = vmax.f32 %v2799, 0.0
  %v2816 = vmax.f32 %v2800, 0.0
  %v2817 = vmax.f32 %v2801, 0.0
  %v2818 = vmax.f32 %v2802, 0.0
  %v2819 = vmax.f32 %v2803, 0.0
  %vm2820 = vcmask 523264
  %2821 = vst.msk [vmem:[#allocation3] sm:$0xff] %vm2820, %v2804
  %2823 = vrot.lane.b32.xlu0 %v2805, 64
  %v2824 = vpop.permute.xlu0 %2823
  %vm2826 = vcmask 1048064
  %2827 = vst.msk [vmem:[#allocation3] sm:$0xff] %vm2826, %v2824
  %2828 = vst.msk [vmem:[#allocation3 + $0x8] sm:$0xff] %vm2820, %v2806
  %2830 = vrot.lane.b32.xlu0 %v2807, 64
  %v2831 = vpop.permute.xlu0 %2830
  %2833 = vst.msk [vmem:[#allocation3 + $0x8] sm:$0xff] %vm2826, %v2831
  %2834 = vst.msk [vmem:[#allocation3 + $0x10] sm:$0xff] %vm2820, %v2808
  %2836 = vrot.lane.b32.xlu0 %v2809, 64
  %v2837 = vpop.permute.xlu0 %2836
  %2839 = vst.msk [vmem:[#allocation3 + $0x10] sm:$0xff] %vm2826, %v2837
  %2840 = vst.msk [vmem:[#allocation3 + $0x18] sm:$0xff] %vm2820, %v2810
  %2842 = vrot.lane.b32.xlu0 %v2811, 64
  %v2843 = vpop.permute.xlu0 %2842
  %2845 = vst.msk [vmem:[#allocation3 + $0x18] sm:$0xff] %vm2826, %v2843
  %2846 = vst.msk [vmem:[#allocation3 + $0x20] sm:$0xff] %vm2820, %v2812
  %2848 = vrot.lane.b32.xlu0 %v2813, 64
  %v2849 = vpop.permute.xlu0 %2848
  %2851 = vst.msk [vmem:[#allocation3 + $0x20] sm:$0xff] %vm2826, %v2849
  %2852 = vst.msk [vmem:[#allocation3 + $0x28] sm:$0xff] %vm2820, %v2814
  %2854 = vrot.lane.b32.xlu0 %v2815, 64
  %v2855 = vpop.permute.xlu0 %2854
  %2857 = vst.msk [vmem:[#allocation3 + $0x28] sm:$0xff] %vm2826, %v2855
  %2858 = vst.msk [vmem:[#allocation3 + $0x30] sm:$0xff] %vm2820, %v2816
  %2860 = vrot.lane.b32.xlu0 %v2817, 64
  %v2861 = vpop.permute.xlu0 %2860
  %2863 = vst.msk [vmem:[#allocation3 + $0x30] sm:$0xff] %vm2826, %v2861
  %2864 = vst.msk [vmem:[#allocation3 + $0x38] sm:$0xff] %vm2820, %v2818
  %2866 = vrot.lane.b32.xlu0 %v2819, 64
  %v2867 = vpop.permute.xlu0 %2866
  %2869 = vst.msk [vmem:[#allocation3 + $0x38] sm:$0xff] %vm2826, %v2867
  %v2870 = vld [vmem:[#allocation3] sm:$0xff]
  %v2871 = vld [vmem:[#allocation3 + $0x8] sm:$0xff]
  %v2872 = vld [vmem:[#allocation3 + $0x10] sm:$0xff]
  %v2873 = vld [vmem:[#allocation3 + $0x18] sm:$0xff]
  %v2874 = vld [vmem:[#allocation3 + $0x20] sm:$0xff]
  %v2875 = vld [vmem:[#allocation3 + $0x28] sm:$0xff]
  %v2876 = vld [vmem:[#allocation3 + $0x30] sm:$0xff]
  %v2877 = vld [vmem:[#allocation3 + $0x38] sm:$0xff]
  %v2878 = vpack.c.bf16 %v2870, %v2870
  %v2879 = vpack.c.bf16 %v2871, %v2871
  %v2880 = vpack.c.bf16 %v2872, %v2872
  %v2881 = vpack.c.bf16 %v2873, %v2873
  %v2882 = vpack.c.bf16 %v2874, %v2874
  %v2883 = vpack.c.bf16 %v2875, %v2875
  %v2884 = vpack.c.bf16 %v2876, %v2876
  %v2885 = vpack.c.bf16 %v2877, %v2877
  %v2886 = vld [vmem:[%s8] sm:$0xff]
  %v2887 = vld [vmem:[%s8 + $0x8] sm:$0xff]
  %v2888 = vld [vmem:[%s8 + $0x10] sm:$0xff]
  %v2889 = vld [vmem:[%s8 + $0x18] sm:$0xff]
  %v2890 = vld [vmem:[%s8 + $0x20] sm:$0xff]
  %v2891 = vld [vmem:[%s8 + $0x28] sm:$0xff]
  %v2892 = vld [vmem:[%s8 + $0x30] sm:$0xff]
  %v2893 = vld [vmem:[%s8 + $0x38] sm:$0xff]
  %v2894 = vld [vmem:[%s8 + $0x40] sm:$0xff]
  %v2895 = vld [vmem:[%s8 + $0x48] sm:$0xff]
  %v2896 = vld [vmem:[%s8 + $0x50] sm:$0xff]
  %v2897 = vld [vmem:[%s8 + $0x58] sm:$0xff]
  %v2898 = vld [vmem:[%s8 + $0x60] sm:$0xff]
  %v2899 = vld [vmem:[%s8 + $0x68] sm:$0xff]
  %v2900 = vld [vmem:[%s8 + $0x70] sm:$0xff]
  %v2901 = vld [vmem:[%s8 + $0x78] sm:$0xff]
  %v2902 = vld [vmem:[%s8 + $0x80] sm:$0xff]
  %v2903 = vld [vmem:[%s8 + $0x88] sm:$0xff]
  %v2904 = vld [vmem:[%s8 + $0x90] sm:$0xff]
  %v2905 = vld [vmem:[%s8 + $0x98] sm:$0xff]
  %v2906 = vld [vmem:[%s8 + $0xa0] sm:$0xff]
  %v2907 = vld [vmem:[%s8 + $0xa8] sm:$0xff]
  %v2908 = vld [vmem:[%s8 + $0xb0] sm:$0xff]
  %v2909 = vld [vmem:[%s8 + $0xb8] sm:$0xff]
  %v2910 = vld [vmem:[%s8 + $0xc0] sm:$0xff]
  %v2911 = vld [vmem:[%s8 + $0xc8] sm:$0xff]
  %v2912 = vld [vmem:[%s8 + $0xd0] sm:$0xff]
  %v2913 = vld [vmem:[%s8 + $0xd8] sm:$0xff]
  %v2914 = vld [vmem:[%s8 + $0xe0] sm:$0xff]
  %v2915 = vld [vmem:[%s8 + $0xe8] sm:$0xff]
  %v2916 = vld [vmem:[%s8 + $0xf0] sm:$0xff]
  %v2917 = vld [vmem:[%s8 + $0xf8] sm:$0xff]
  %v2918 = vld [vmem:[%s8 + $0x100] sm:$0xff]
  %v2919 = vld [vmem:[%s8 + $0x108] sm:$0xff]
  %v2920 = vld [vmem:[%s8 + $0x110] sm:$0xff]
  %v2921 = vld [vmem:[%s8 + $0x118] sm:$0xff]
  %v2922 = vld [vmem:[%s8 + $0x120] sm:$0xff]
  %v2923 = vld [vmem:[%s8 + $0x128] sm:$0xff]
  %v2924 = vld [vmem:[%s8 + $0x130] sm:$0xff]
  %v2925 = vld [vmem:[%s8 + $0x138] sm:$0xff]
  %v2926 = vld [vmem:[%s8 + $0x140] sm:$0xff]
  %v2927 = vld [vmem:[%s8 + $0x148] sm:$0xff]
  %v2928 = vld [vmem:[%s8 + $0x150] sm:$0xff]
  %v2929 = vld [vmem:[%s8 + $0x158] sm:$0xff]
  %v2930 = vld [vmem:[%s8 + $0x160] sm:$0xff]
  %v2931 = vld [vmem:[%s8 + $0x168] sm:$0xff]
  %v2932 = vld [vmem:[%s8 + $0x170] sm:$0xff]
  %v2933 = vld [vmem:[%s8 + $0x178] sm:$0xff]
  %v2934 = vld [vmem:[%s8 + $0x180] sm:$0xff]
  %v2935 = vld [vmem:[%s8 + $0x188] sm:$0xff]
  %v2936 = vld [vmem:[%s8 + $0x190] sm:$0xff]
  %v2937 = vld [vmem:[%s8 + $0x198] sm:$0xff]
  %v2938 = vld [vmem:[%s8 + $0x1a0] sm:$0xff]
  %v2939 = vld [vmem:[%s8 + $0x1a8] sm:$0xff]
  %v2940 = vld [vmem:[%s8 + $0x1b0] sm:$0xff]
  %v2941 = vld [vmem:[%s8 + $0x1b8] sm:$0xff]
  %v2942 = vld [vmem:[%s8 + $0x1c0] sm:$0xff]
  %v2943 = vld [vmem:[%s8 + $0x1c8] sm:$0xff]
  %v2944 = vld [vmem:[%s8 + $0x1d0] sm:$0xff]
  %v2945 = vld [vmem:[%s8 + $0x1d8] sm:$0xff]
  %v2946 = vld [vmem:[%s8 + $0x1e0] sm:$0xff]
  %v2947 = vld [vmem:[%s8 + $0x1e8] sm:$0xff]
  %v2948 = vld [vmem:[%s8 + $0x1f0] sm:$0xff]
  %v2949 = vld [vmem:[%s8 + $0x1f8] sm:$0xff]
  %v2950 = vld [vmem:[%s8 + $0x200] sm:$0xff]
  %v2951 = vld [vmem:[%s8 + $0x208] sm:$0xff]
  %v2952 = vld [vmem:[%s8 + $0x210] sm:$0xff]
  %v2953 = vld [vmem:[%s8 + $0x218] sm:$0xff]
  %v2954 = vld [vmem:[%s8 + $0x220] sm:$0xff]
  %v2955 = vld [vmem:[%s8 + $0x228] sm:$0xff]
  %v2956 = vld [vmem:[%s8 + $0x230] sm:$0xff]
  %v2957 = vld [vmem:[%s8 + $0x238] sm:$0xff]
  %v2958 = vld [vmem:[%s8 + $0x240] sm:$0xff]
  %v2959 = vld [vmem:[%s8 + $0x248] sm:$0xff]
  %v2960 = vld [vmem:[%s8 + $0x250] sm:$0xff]
  %v2961 = vld [vmem:[%s8 + $0x258] sm:$0xff]
  %v2962 = vld [vmem:[%s8 + $0x260] sm:$0xff]
  %v2963 = vld [vmem:[%s8 + $0x268] sm:$0xff]
  %v2964 = vld [vmem:[%s8 + $0x270] sm:$0xff]
  %v2965 = vld [vmem:[%s8 + $0x278] sm:$0xff]
  %v2966 = vld [vmem:[%s8 + $0x280] sm:$0xff]
  %v2967 = vld [vmem:[%s8 + $0x288] sm:$0xff]
  %v2968 = vld [vmem:[%s8 + $0x290] sm:$0xff]
  %v2969 = vld [vmem:[%s8 + $0x298] sm:$0xff]
  %v2970 = vld [vmem:[%s8 + $0x2a0] sm:$0xff]
  %v2971 = vld [vmem:[%s8 + $0x2a8] sm:$0xff]
  %v2972 = vld [vmem:[%s8 + $0x2b0] sm:$0xff]
  %v2973 = vld [vmem:[%s8 + $0x2b8] sm:$0xff]
  %v2974 = vld [vmem:[%s8 + $0x2c0] sm:$0xff]
  %v2975 = vld [vmem:[%s8 + $0x2c8] sm:$0xff]
  %v2976 = vld [vmem:[%s8 + $0x2d0] sm:$0xff]
  %v2977 = vld [vmem:[%s8 + $0x2d8] sm:$0xff]
  %v2978 = vld [vmem:[%s8 + $0x2e0] sm:$0xff]
  %v2979 = vld [vmem:[%s8 + $0x2e8] sm:$0xff]
  %v2980 = vld [vmem:[%s8 + $0x2f0] sm:$0xff]
  %v2981 = vld [vmem:[%s8 + $0x2f8] sm:$0xff]
  %v2982 = vld [vmem:[%s8 + $0x300] sm:$0xff]
  %v2983 = vld [vmem:[%s8 + $0x308] sm:$0xff]
  %v2984 = vld [vmem:[%s8 + $0x310] sm:$0xff]
  %v2985 = vld [vmem:[%s8 + $0x318] sm:$0xff]
  %v2986 = vld [vmem:[%s8 + $0x320] sm:$0xff]
  %v2987 = vld [vmem:[%s8 + $0x328] sm:$0xff]
  %v2988 = vld [vmem:[%s8 + $0x330] sm:$0xff]
  %v2989 = vld [vmem:[%s8 + $0x338] sm:$0xff]
  %v2990 = vld [vmem:[%s8 + $0x340] sm:$0xff]
  %v2991 = vld [vmem:[%s8 + $0x348] sm:$0xff]
  %v2992 = vld [vmem:[%s8 + $0x350] sm:$0xff]
  %v2993 = vld [vmem:[%s8 + $0x358] sm:$0xff]
  %v2994 = vld [vmem:[%s8 + $0x360] sm:$0xff]
  %v2995 = vld [vmem:[%s8 + $0x368] sm:$0xff]
  %v2996 = vld [vmem:[%s8 + $0x370] sm:$0xff]
  %v2997 = vld [vmem:[%s8 + $0x378] sm:$0xff]
  %v2998 = vld [vmem:[%s8 + $0x380] sm:$0xff]
  %v2999 = vld [vmem:[%s8 + $0x388] sm:$0xff]
  %v3000 = vld [vmem:[%s8 + $0x390] sm:$0xff]
  %v3001 = vld [vmem:[%s8 + $0x398] sm:$0xff]
  %v3002 = vld [vmem:[%s8 + $0x3a0] sm:$0xff]
  %v3003 = vld [vmem:[%s8 + $0x3a8] sm:$0xff]
  %v3004 = vld [vmem:[%s8 + $0x3b0] sm:$0xff]
  %v3005 = vld [vmem:[%s8 + $0x3b8] sm:$0xff]
  %v3006 = vld [vmem:[%s8 + $0x3c0] sm:$0xff]
  %v3007 = vld [vmem:[%s8 + $0x3c8] sm:$0xff]
  %v3008 = vld [vmem:[%s8 + $0x3d0] sm:$0xff]
  %v3009 = vld [vmem:[%s8 + $0x3d8] sm:$0xff]
  %v3010 = vld [vmem:[%s8 + $0x3e0] sm:$0xff]
  %v3011 = vld [vmem:[%s8 + $0x3e8] sm:$0xff]
  %v3012 = vld [vmem:[%s8 + $0x3f0] sm:$0xff]
  %v3013 = vld [vmem:[%s8 + $0x3f8] sm:$0xff]
  %v3014 = vld [vmem:[%s8 + $0x400] sm:$0xff]
  %v3015 = vld [vmem:[%s8 + $0x408] sm:$0xff]
  %v3016 = vld [vmem:[%s8 + $0x410] sm:$0xff]
  %v3017 = vld [vmem:[%s8 + $0x418] sm:$0xff]
  %v3018 = vld [vmem:[%s8 + $0x420] sm:$0xff]
  %v3019 = vld [vmem:[%s8 + $0x428] sm:$0xff]
  %v3020 = vld [vmem:[%s8 + $0x430] sm:$0xff]
  %v3021 = vld [vmem:[%s8 + $0x438] sm:$0xff]
  %v3022 = vld [vmem:[%s8 + $0x440] sm:$0xff]
  %v3023 = vld [vmem:[%s8 + $0x448] sm:$0xff]
  %v3024 = vld [vmem:[%s8 + $0x450] sm:$0xff]
  %v3025 = vld [vmem:[%s8 + $0x458] sm:$0xff]
  %v3026 = vld [vmem:[%s8 + $0x460] sm:$0xff]
  %v3027 = vld [vmem:[%s8 + $0x468] sm:$0xff]
  %v3028 = vld [vmem:[%s8 + $0x470] sm:$0xff]
  %v3029 = vld [vmem:[%s8 + $0x478] sm:$0xff]
  %v3030 = vld [vmem:[%s8 + $0x480] sm:$0xff]
  %v3031 = vld [vmem:[%s8 + $0x488] sm:$0xff]
  %v3032 = vld [vmem:[%s8 + $0x490] sm:$0xff]
  %v3033 = vld [vmem:[%s8 + $0x498] sm:$0xff]
  %v3034 = vld [vmem:[%s8 + $0x4a0] sm:$0xff]
  %v3035 = vld [vmem:[%s8 + $0x4a8] sm:$0xff]
  %v3036 = vld [vmem:[%s8 + $0x4b0] sm:$0xff]
  %v3037 = vld [vmem:[%s8 + $0x4b8] sm:$0xff]
  %v3038 = vld [vmem:[%s8 + $0x4c0] sm:$0xff]
  %v3039 = vld [vmem:[%s8 + $0x4c8] sm:$0xff]
  %v3040 = vld [vmem:[%s8 + $0x4d0] sm:$0xff]
  %v3041 = vld [vmem:[%s8 + $0x4d8] sm:$0xff]
  %v3042 = vld [vmem:[%s8 + $0x4e0] sm:$0xff]
  %v3043 = vld [vmem:[%s8 + $0x4e8] sm:$0xff]
  %v3044 = vld [vmem:[%s8 + $0x4f0] sm:$0xff]
  %v3045 = vld [vmem:[%s8 + $0x4f8] sm:$0xff]
  %v3046 = vld [vmem:[%s8 + $0x500] sm:$0xff]
  %v3047 = vld [vmem:[%s8 + $0x508] sm:$0xff]
  %v3048 = vld [vmem:[%s8 + $0x510] sm:$0xff]
  %v3049 = vld [vmem:[%s8 + $0x518] sm:$0xff]
  %v3050 = vld [vmem:[%s8 + $0x520] sm:$0xff]
  %v3051 = vld [vmem:[%s8 + $0x528] sm:$0xff]
  %v3052 = vld [vmem:[%s8 + $0x530] sm:$0xff]
  %v3053 = vld [vmem:[%s8 + $0x538] sm:$0xff]
  %v3054 = vld [vmem:[%s8 + $0x540] sm:$0xff]
  %v3055 = vld [vmem:[%s8 + $0x548] sm:$0xff]
  %v3056 = vld [vmem:[%s8 + $0x550] sm:$0xff]
  %v3057 = vld [vmem:[%s8 + $0x558] sm:$0xff]
  %v3058 = vld [vmem:[%s8 + $0x560] sm:$0xff]
  %v3059 = vld [vmem:[%s8 + $0x568] sm:$0xff]
  %v3060 = vld [vmem:[%s8 + $0x570] sm:$0xff]
  %v3061 = vld [vmem:[%s8 + $0x578] sm:$0xff]
  %v3062 = vld [vmem:[%s8 + $0x580] sm:$0xff]
  %v3063 = vld [vmem:[%s8 + $0x588] sm:$0xff]
  %v3064 = vld [vmem:[%s8 + $0x590] sm:$0xff]
  %v3065 = vld [vmem:[%s8 + $0x598] sm:$0xff]
  %v3066 = vld [vmem:[%s8 + $0x5a0] sm:$0xff]
  %v3067 = vld [vmem:[%s8 + $0x5a8] sm:$0xff]
  %v3068 = vld [vmem:[%s8 + $0x5b0] sm:$0xff]
  %v3069 = vld [vmem:[%s8 + $0x5b8] sm:$0xff]
  %v3070 = vld [vmem:[%s8 + $0x5c0] sm:$0xff]
  %v3071 = vld [vmem:[%s8 + $0x5c8] sm:$0xff]
  %v3072 = vld [vmem:[%s8 + $0x5d0] sm:$0xff]
  %v3073 = vld [vmem:[%s8 + $0x5d8] sm:$0xff]
  %v3074 = vld [vmem:[%s8 + $0x5e0] sm:$0xff]
  %v3075 = vld [vmem:[%s8 + $0x5e8] sm:$0xff]
  %v3076 = vld [vmem:[%s8 + $0x5f0] sm:$0xff]
  %v3077 = vld [vmem:[%s8 + $0x5f8] sm:$0xff]
  %v3078 = vld [vmem:[%s8 + $0x600] sm:$0xff]
  %v3079 = vld [vmem:[%s8 + $0x608] sm:$0xff]
  %v3080 = vld [vmem:[%s8 + $0x610] sm:$0xff]
  %v3081 = vld [vmem:[%s8 + $0x618] sm:$0xff]
  %v3082 = vld [vmem:[%s8 + $0x620] sm:$0xff]
  %v3083 = vld [vmem:[%s8 + $0x628] sm:$0xff]
  %v3084 = vld [vmem:[%s8 + $0x630] sm:$0xff]
  %v3085 = vld [vmem:[%s8 + $0x638] sm:$0xff]
  %v3086 = vld [vmem:[%s8 + $0x640] sm:$0xff]
  %v3087 = vld [vmem:[%s8 + $0x648] sm:$0xff]
  %v3088 = vld [vmem:[%s8 + $0x650] sm:$0xff]
  %v3089 = vld [vmem:[%s8 + $0x658] sm:$0xff]
  %v3090 = vld [vmem:[%s8 + $0x660] sm:$0xff]
  %v3091 = vld [vmem:[%s8 + $0x668] sm:$0xff]
  %v3092 = vld [vmem:[%s8 + $0x670] sm:$0xff]
  %v3093 = vld [vmem:[%s8 + $0x678] sm:$0xff]
  %v3094 = vld [vmem:[%s8 + $0x680] sm:$0xff]
  %v3095 = vld [vmem:[%s8 + $0x688] sm:$0xff]
  %v3096 = vld [vmem:[%s8 + $0x690] sm:$0xff]
  %v3097 = vld [vmem:[%s8 + $0x698] sm:$0xff]
  %v3098 = vld [vmem:[%s8 + $0x6a0] sm:$0xff]
  %v3099 = vld [vmem:[%s8 + $0x6a8] sm:$0xff]
  %v3100 = vld [vmem:[%s8 + $0x6b0] sm:$0xff]
  %v3101 = vld [vmem:[%s8 + $0x6b8] sm:$0xff]
  %v3102 = vld [vmem:[%s8 + $0x6c0] sm:$0xff]
  %v3103 = vld [vmem:[%s8 + $0x6c8] sm:$0xff]
  %v3104 = vld [vmem:[%s8 + $0x6d0] sm:$0xff]
  %v3105 = vld [vmem:[%s8 + $0x6d8] sm:$0xff]
  %v3106 = vld [vmem:[%s8 + $0x6e0] sm:$0xff]
  %v3107 = vld [vmem:[%s8 + $0x6e8] sm:$0xff]
  %v3108 = vld [vmem:[%s8 + $0x6f0] sm:$0xff]
  %v3109 = vld [vmem:[%s8 + $0x6f8] sm:$0xff]
  %v3110 = vld [vmem:[%s8 + $0x700] sm:$0xff]
  %v3111 = vld [vmem:[%s8 + $0x708] sm:$0xff]
  %v3112 = vld [vmem:[%s8 + $0x710] sm:$0xff]
  %v3113 = vld [vmem:[%s8 + $0x718] sm:$0xff]
  %v3114 = vld [vmem:[%s8 + $0x720] sm:$0xff]
  %v3115 = vld [vmem:[%s8 + $0x728] sm:$0xff]
  %v3116 = vld [vmem:[%s8 + $0x730] sm:$0xff]
  %v3117 = vld [vmem:[%s8 + $0x738] sm:$0xff]
  %v3118 = vld [vmem:[%s8 + $0x740] sm:$0xff]
  %v3119 = vld [vmem:[%s8 + $0x748] sm:$0xff]
  %v3120 = vld [vmem:[%s8 + $0x750] sm:$0xff]
  %v3121 = vld [vmem:[%s8 + $0x758] sm:$0xff]
  %v3122 = vld [vmem:[%s8 + $0x760] sm:$0xff]
  %v3123 = vld [vmem:[%s8 + $0x768] sm:$0xff]
  %v3124 = vld [vmem:[%s8 + $0x770] sm:$0xff]
  %v3125 = vld [vmem:[%s8 + $0x778] sm:$0xff]
  %v3126 = vld [vmem:[%s8 + $0x780] sm:$0xff]
  %v3127 = vld [vmem:[%s8 + $0x788] sm:$0xff]
  %v3128 = vld [vmem:[%s8 + $0x790] sm:$0xff]
  %v3129 = vld [vmem:[%s8 + $0x798] sm:$0xff]
  %v3130 = vld [vmem:[%s8 + $0x7a0] sm:$0xff]
  %v3131 = vld [vmem:[%s8 + $0x7a8] sm:$0xff]
  %v3132 = vld [vmem:[%s8 + $0x7b0] sm:$0xff]
  %v3133 = vld [vmem:[%s8 + $0x7b8] sm:$0xff]
  %v3134 = vld [vmem:[%s8 + $0x7c0] sm:$0xff]
  %v3135 = vld [vmem:[%s8 + $0x7c8] sm:$0xff]
  %v3136 = vld [vmem:[%s8 + $0x7d0] sm:$0xff]
  %v3137 = vld [vmem:[%s8 + $0x7d8] sm:$0xff]
  %v3138 = vld [vmem:[%s8 + $0x7e0] sm:$0xff]
  %v3139 = vld [vmem:[%s8 + $0x7e8] sm:$0xff]
  %v3140 = vld [vmem:[%s8 + $0x7f0] sm:$0xff]
  %v3141 = vld [vmem:[%s8 + $0x7f8] sm:$0xff]
  %v3142 = vld [vmem:[%s9] sm:$0xf]
  %v3144 = vperm.slane %v3142, 0
  %v3145 = vperm.slane %v3142, 1
  %v3146 = vperm.slane %v3142, 2
  %v3147 = vperm.slane %v3142, 3
  %v3408 = vunpack.c.l.b16 %v2886
  %v3409 = vunpack.c.h.b16 %v2886
  %v3410 = vunpack.c.l.b16 %v2887
  %v3411 = vunpack.c.h.b16 %v2887
  %v3412 = vunpack.c.l.b16 %v2888
  %v3413 = vunpack.c.h.b16 %v2888
  %v3414 = vunpack.c.l.b16 %v2889
  %v3415 = vunpack.c.h.b16 %v2889
  %v3416 = vunpack.c.l.b16 %v2890
  %v3417 = vunpack.c.h.b16 %v2890
  %v3418 = vunpack.c.l.b16 %v2891
  %v3419 = vunpack.c.h.b16 %v2891
  %v3420 = vunpack.c.l.b16 %v2892
  %v3421 = vunpack.c.h.b16 %v2892
  %v3422 = vunpack.c.l.b16 %v2893
  %v3423 = vunpack.c.h.b16 %v2893
  %v3424 = vunpack.c.l.b16 %v2894
  %v3425 = vunpack.c.h.b16 %v2894
  %v3426 = vunpack.c.l.b16 %v2895
  %v3427 = vunpack.c.h.b16 %v2895
  %v3428 = vunpack.c.l.b16 %v2896
  %v3429 = vunpack.c.h.b16 %v2896
  %v3430 = vunpack.c.l.b16 %v2897
  %v3431 = vunpack.c.h.b16 %v2897
  %v3432 = vunpack.c.l.b16 %v2898
  %v3433 = vunpack.c.h.b16 %v2898
  %v3434 = vunpack.c.l.b16 %v2899
  %v3435 = vunpack.c.h.b16 %v2899
  %v3436 = vunpack.c.l.b16 %v2900
  %v3437 = vunpack.c.h.b16 %v2900
  %v3438 = vunpack.c.l.b16 %v2901
  %v3439 = vunpack.c.h.b16 %v2901
  %v3440 = vunpack.c.l.b16 %v2902
  %v3441 = vunpack.c.h.b16 %v2902
  %v3442 = vunpack.c.l.b16 %v2903
  %v3443 = vunpack.c.h.b16 %v2903
  %v3444 = vunpack.c.l.b16 %v2904
  %v3445 = vunpack.c.h.b16 %v2904
  %v3446 = vunpack.c.l.b16 %v2905
  %v3447 = vunpack.c.h.b16 %v2905
  %v3448 = vunpack.c.l.b16 %v2906
  %v3449 = vunpack.c.h.b16 %v2906
  %v3450 = vunpack.c.l.b16 %v2907
  %v3451 = vunpack.c.h.b16 %v2907
  %v3452 = vunpack.c.l.b16 %v2908
  %v3453 = vunpack.c.h.b16 %v2908
  %v3454 = vunpack.c.l.b16 %v2909
  %v3455 = vunpack.c.h.b16 %v2909
  %v3456 = vunpack.c.l.b16 %v2910
  %v3457 = vunpack.c.h.b16 %v2910
  %v3458 = vunpack.c.l.b16 %v2911
  %v3459 = vunpack.c.h.b16 %v2911
  %v3460 = vunpack.c.l.b16 %v2912
  %v3461 = vunpack.c.h.b16 %v2912
  %v3462 = vunpack.c.l.b16 %v2913
  %v3463 = vunpack.c.h.b16 %v2913
  %v3464 = vunpack.c.l.b16 %v2914
  %v3465 = vunpack.c.h.b16 %v2914
  %v3466 = vunpack.c.l.b16 %v2915
  %v3467 = vunpack.c.h.b16 %v2915
  %v3468 = vunpack.c.l.b16 %v2916
  %v3469 = vunpack.c.h.b16 %v2916
  %v3470 = vunpack.c.l.b16 %v2917
  %v3471 = vunpack.c.h.b16 %v2917
  %v3472 = vunpack.c.l.b16 %v2918
  %v3473 = vunpack.c.h.b16 %v2918
  %v3474 = vunpack.c.l.b16 %v2919
  %v3475 = vunpack.c.h.b16 %v2919
  %v3476 = vunpack.c.l.b16 %v2920
  %v3477 = vunpack.c.h.b16 %v2920
  %v3478 = vunpack.c.l.b16 %v2921
  %v3479 = vunpack.c.h.b16 %v2921
  %v3480 = vunpack.c.l.b16 %v2922
  %v3481 = vunpack.c.h.b16 %v2922
  %v3482 = vunpack.c.l.b16 %v2923
  %v3483 = vunpack.c.h.b16 %v2923
  %v3484 = vunpack.c.l.b16 %v2924
  %v3485 = vunpack.c.h.b16 %v2924
  %v3486 = vunpack.c.l.b16 %v2925
  %v3487 = vunpack.c.h.b16 %v2925
  %v3488 = vunpack.c.l.b16 %v2926
  %v3489 = vunpack.c.h.b16 %v2926
  %v3490 = vunpack.c.l.b16 %v2927
  %v3491 = vunpack.c.h.b16 %v2927
  %v3492 = vunpack.c.l.b16 %v2928
  %v3493 = vunpack.c.h.b16 %v2928
  %v3494 = vunpack.c.l.b16 %v2929
  %v3495 = vunpack.c.h.b16 %v2929
  %v3496 = vunpack.c.l.b16 %v2930
  %v3497 = vunpack.c.h.b16 %v2930
  %v3498 = vunpack.c.l.b16 %v2931
  %v3499 = vunpack.c.h.b16 %v2931
  %v3500 = vunpack.c.l.b16 %v2932
  %v3501 = vunpack.c.h.b16 %v2932
  %v3502 = vunpack.c.l.b16 %v2933
  %v3503 = vunpack.c.h.b16 %v2933
  %v3504 = vunpack.c.l.b16 %v2934
  %v3505 = vunpack.c.h.b16 %v2934
  %v3506 = vunpack.c.l.b16 %v2935
  %v3507 = vunpack.c.h.b16 %v2935
  %v3508 = vunpack.c.l.b16 %v2936
  %v3509 = vunpack.c.h.b16 %v2936
  %v3510 = vunpack.c.l.b16 %v2937
  %v3511 = vunpack.c.h.b16 %v2937
  %v3512 = vunpack.c.l.b16 %v2938
  %v3513 = vunpack.c.h.b16 %v2938
  %v3514 = vunpack.c.l.b16 %v2939
  %v3515 = vunpack.c.h.b16 %v2939
  %v3516 = vunpack.c.l.b16 %v2940
  %v3517 = vunpack.c.h.b16 %v2940
  %v3518 = vunpack.c.l.b16 %v2941
  %v3519 = vunpack.c.h.b16 %v2941
  %v3520 = vunpack.c.l.b16 %v2942
  %v3521 = vunpack.c.h.b16 %v2942
  %v3522 = vunpack.c.l.b16 %v2943
  %v3523 = vunpack.c.h.b16 %v2943
  %v3524 = vunpack.c.l.b16 %v2944
  %v3525 = vunpack.c.h.b16 %v2944
  %v3526 = vunpack.c.l.b16 %v2945
  %v3527 = vunpack.c.h.b16 %v2945
  %v3528 = vunpack.c.l.b16 %v2946
  %v3529 = vunpack.c.h.b16 %v2946
  %v3530 = vunpack.c.l.b16 %v2947
  %v3531 = vunpack.c.h.b16 %v2947
  %v3532 = vunpack.c.l.b16 %v2948
  %v3533 = vunpack.c.h.b16 %v2948
  %v3534 = vunpack.c.l.b16 %v2949
  %v3535 = vunpack.c.h.b16 %v2949
  %v3536 = vunpack.c.l.b16 %v2950
  %v3537 = vunpack.c.h.b16 %v2950
  %v3538 = vunpack.c.l.b16 %v2951
  %v3539 = vunpack.c.h.b16 %v2951
  %v3540 = vunpack.c.l.b16 %v2952
  %v3541 = vunpack.c.h.b16 %v2952
  %v3542 = vunpack.c.l.b16 %v2953
  %v3543 = vunpack.c.h.b16 %v2953
  %v3544 = vunpack.c.l.b16 %v2954
  %v3545 = vunpack.c.h.b16 %v2954
  %v3546 = vunpack.c.l.b16 %v2955
  %v3547 = vunpack.c.h.b16 %v2955
  %v3548 = vunpack.c.l.b16 %v2956
  %v3549 = vunpack.c.h.b16 %v2956
  %v3550 = vunpack.c.l.b16 %v2957
  %v3551 = vunpack.c.h.b16 %v2957
  %v3552 = vunpack.c.l.b16 %v2958
  %v3553 = vunpack.c.h.b16 %v2958
  %v3554 = vunpack.c.l.b16 %v2959
  %v3555 = vunpack.c.h.b16 %v2959
  %v3556 = vunpack.c.l.b16 %v2960
  %v3557 = vunpack.c.h.b16 %v2960
  %v3558 = vunpack.c.l.b16 %v2961
  %v3559 = vunpack.c.h.b16 %v2961
  %v3560 = vunpack.c.l.b16 %v2962
  %v3561 = vunpack.c.h.b16 %v2962
  %v3562 = vunpack.c.l.b16 %v2963
  %v3563 = vunpack.c.h.b16 %v2963
  %v3564 = vunpack.c.l.b16 %v2964
  %v3565 = vunpack.c.h.b16 %v2964
  %v3566 = vunpack.c.l.b16 %v2965
  %v3567 = vunpack.c.h.b16 %v2965
  %v3568 = vunpack.c.l.b16 %v2966
  %v3569 = vunpack.c.h.b16 %v2966
  %v3570 = vunpack.c.l.b16 %v2967
  %v3571 = vunpack.c.h.b16 %v2967
  %v3572 = vunpack.c.l.b16 %v2968
  %v3573 = vunpack.c.h.b16 %v2968
  %v3574 = vunpack.c.l.b16 %v2969
  %v3575 = vunpack.c.h.b16 %v2969
  %v3576 = vunpack.c.l.b16 %v2970
  %v3577 = vunpack.c.h.b16 %v2970
  %v3578 = vunpack.c.l.b16 %v2971
  %v3579 = vunpack.c.h.b16 %v2971
  %v3580 = vunpack.c.l.b16 %v2972
  %v3581 = vunpack.c.h.b16 %v2972
  %v3582 = vunpack.c.l.b16 %v2973
  %v3583 = vunpack.c.h.b16 %v2973
  %v3584 = vunpack.c.l.b16 %v2974
  %v3585 = vunpack.c.h.b16 %v2974
  %v3586 = vunpack.c.l.b16 %v2975
  %v3587 = vunpack.c.h.b16 %v2975
  %v3588 = vunpack.c.l.b16 %v2976
  %v3589 = vunpack.c.h.b16 %v2976
  %v3590 = vunpack.c.l.b16 %v2977
  %v3591 = vunpack.c.h.b16 %v2977
  %v3592 = vunpack.c.l.b16 %v2978
  %v3593 = vunpack.c.h.b16 %v2978
  %v3594 = vunpack.c.l.b16 %v2979
  %v3595 = vunpack.c.h.b16 %v2979
  %v3596 = vunpack.c.l.b16 %v2980
  %v3597 = vunpack.c.h.b16 %v2980
  %v3598 = vunpack.c.l.b16 %v2981
  %v3599 = vunpack.c.h.b16 %v2981
  %v3600 = vunpack.c.l.b16 %v2982
  %v3601 = vunpack.c.h.b16 %v2982
  %v3602 = vunpack.c.l.b16 %v2983
  %v3603 = vunpack.c.h.b16 %v2983
  %v3604 = vunpack.c.l.b16 %v2984
  %v3605 = vunpack.c.h.b16 %v2984
  %v3606 = vunpack.c.l.b16 %v2985
  %v3607 = vunpack.c.h.b16 %v2985
  %v3608 = vunpack.c.l.b16 %v2986
  %v3609 = vunpack.c.h.b16 %v2986
  %v3610 = vunpack.c.l.b16 %v2987
  %v3611 = vunpack.c.h.b16 %v2987
  %v3612 = vunpack.c.l.b16 %v2988
  %v3613 = vunpack.c.h.b16 %v2988
  %v3614 = vunpack.c.l.b16 %v2989
  %v3615 = vunpack.c.h.b16 %v2989
  %v3616 = vunpack.c.l.b16 %v2990
  %v3617 = vunpack.c.h.b16 %v2990
  %v3618 = vunpack.c.l.b16 %v2991
  %v3619 = vunpack.c.h.b16 %v2991
  %v3620 = vunpack.c.l.b16 %v2992
  %v3621 = vunpack.c.h.b16 %v2992
  %v3622 = vunpack.c.l.b16 %v2993
  %v3623 = vunpack.c.h.b16 %v2993
  %v3624 = vunpack.c.l.b16 %v2994
  %v3625 = vunpack.c.h.b16 %v2994
  %v3626 = vunpack.c.l.b16 %v2995
  %v3627 = vunpack.c.h.b16 %v2995
  %v3628 = vunpack.c.l.b16 %v2996
  %v3629 = vunpack.c.h.b16 %v2996
  %v3630 = vunpack.c.l.b16 %v2997
  %v3631 = vunpack.c.h.b16 %v2997
  %v3632 = vunpack.c.l.b16 %v2998
  %v3633 = vunpack.c.h.b16 %v2998
  %v3634 = vunpack.c.l.b16 %v2999
  %v3635 = vunpack.c.h.b16 %v2999
  %v3636 = vunpack.c.l.b16 %v3000
  %v3637 = vunpack.c.h.b16 %v3000
  %v3638 = vunpack.c.l.b16 %v3001
  %v3639 = vunpack.c.h.b16 %v3001
  %v3640 = vunpack.c.l.b16 %v3002
  %v3641 = vunpack.c.h.b16 %v3002
  %v3642 = vunpack.c.l.b16 %v3003
  %v3643 = vunpack.c.h.b16 %v3003
  %v3644 = vunpack.c.l.b16 %v3004
  %v3645 = vunpack.c.h.b16 %v3004
  %v3646 = vunpack.c.l.b16 %v3005
  %v3647 = vunpack.c.h.b16 %v3005
  %v3648 = vunpack.c.l.b16 %v3006
  %v3649 = vunpack.c.h.b16 %v3006
  %v3650 = vunpack.c.l.b16 %v3007
  %v3651 = vunpack.c.h.b16 %v3007
  %v3652 = vunpack.c.l.b16 %v3008
  %v3653 = vunpack.c.h.b16 %v3008
  %v3654 = vunpack.c.l.b16 %v3009
  %v3655 = vunpack.c.h.b16 %v3009
  %v3656 = vunpack.c.l.b16 %v3010
  %v3657 = vunpack.c.h.b16 %v3010
  %v3658 = vunpack.c.l.b16 %v3011
  %v3659 = vunpack.c.h.b16 %v3011
  %v3660 = vunpack.c.l.b16 %v3012
  %v3661 = vunpack.c.h.b16 %v3012
  %v3662 = vunpack.c.l.b16 %v3013
  %v3663 = vunpack.c.h.b16 %v3013
  %v3664 = vunpack.c.l.b16 %v3014
  %v3665 = vunpack.c.h.b16 %v3014
  %v3666 = vunpack.c.l.b16 %v3015
  %v3667 = vunpack.c.h.b16 %v3015
  %v3668 = vunpack.c.l.b16 %v3016
  %v3669 = vunpack.c.h.b16 %v3016
  %v3670 = vunpack.c.l.b16 %v3017
  %v3671 = vunpack.c.h.b16 %v3017
  %v3672 = vunpack.c.l.b16 %v3018
  %v3673 = vunpack.c.h.b16 %v3018
  %v3674 = vunpack.c.l.b16 %v3019
  %v3675 = vunpack.c.h.b16 %v3019
  %v3676 = vunpack.c.l.b16 %v3020
  %v3677 = vunpack.c.h.b16 %v3020
  %v3678 = vunpack.c.l.b16 %v3021
  %v3679 = vunpack.c.h.b16 %v3021
  %v3680 = vunpack.c.l.b16 %v3022
  %v3681 = vunpack.c.h.b16 %v3022
  %v3682 = vunpack.c.l.b16 %v3023
  %v3683 = vunpack.c.h.b16 %v3023
  %v3684 = vunpack.c.l.b16 %v3024
  %v3685 = vunpack.c.h.b16 %v3024
  %v3686 = vunpack.c.l.b16 %v3025
  %v3687 = vunpack.c.h.b16 %v3025
  %v3688 = vunpack.c.l.b16 %v3026
  %v3689 = vunpack.c.h.b16 %v3026
  %v3690 = vunpack.c.l.b16 %v3027
  %v3691 = vunpack.c.h.b16 %v3027
  %v3692 = vunpack.c.l.b16 %v3028
  %v3693 = vunpack.c.h.b16 %v3028
  %v3694 = vunpack.c.l.b16 %v3029
  %v3695 = vunpack.c.h.b16 %v3029
  %v3696 = vunpack.c.l.b16 %v3030
  %v3697 = vunpack.c.h.b16 %v3030
  %v3698 = vunpack.c.l.b16 %v3031
  %v3699 = vunpack.c.h.b16 %v3031
  %v3700 = vunpack.c.l.b16 %v3032
  %v3701 = vunpack.c.h.b16 %v3032
  %v3702 = vunpack.c.l.b16 %v3033
  %v3703 = vunpack.c.h.b16 %v3033
  %v3704 = vunpack.c.l.b16 %v3034
  %v3705 = vunpack.c.h.b16 %v3034
  %v3706 = vunpack.c.l.b16 %v3035
  %v3707 = vunpack.c.h.b16 %v3035
  %v3708 = vunpack.c.l.b16 %v3036
  %v3709 = vunpack.c.h.b16 %v3036
  %v3710 = vunpack.c.l.b16 %v3037
  %v3711 = vunpack.c.h.b16 %v3037
  %v3712 = vunpack.c.l.b16 %v3038
  %v3713 = vunpack.c.h.b16 %v3038
  %v3714 = vunpack.c.l.b16 %v3039
  %v3715 = vunpack.c.h.b16 %v3039
  %v3716 = vunpack.c.l.b16 %v3040
  %v3717 = vunpack.c.h.b16 %v3040
  %v3718 = vunpack.c.l.b16 %v3041
  %v3719 = vunpack.c.h.b16 %v3041
  %v3720 = vunpack.c.l.b16 %v3042
  %v3721 = vunpack.c.h.b16 %v3042
  %v3722 = vunpack.c.l.b16 %v3043
  %v3723 = vunpack.c.h.b16 %v3043
  %v3724 = vunpack.c.l.b16 %v3044
  %v3725 = vunpack.c.h.b16 %v3044
  %v3726 = vunpack.c.l.b16 %v3045
  %v3727 = vunpack.c.h.b16 %v3045
  %v3728 = vunpack.c.l.b16 %v3046
  %v3729 = vunpack.c.h.b16 %v3046
  %v3730 = vunpack.c.l.b16 %v3047
  %v3731 = vunpack.c.h.b16 %v3047
  %v3732 = vunpack.c.l.b16 %v3048
  %v3733 = vunpack.c.h.b16 %v3048
  %v3734 = vunpack.c.l.b16 %v3049
  %v3735 = vunpack.c.h.b16 %v3049
  %v3736 = vunpack.c.l.b16 %v3050
  %v3737 = vunpack.c.h.b16 %v3050
  %v3738 = vunpack.c.l.b16 %v3051
  %v3739 = vunpack.c.h.b16 %v3051
  %v3740 = vunpack.c.l.b16 %v3052
  %v3741 = vunpack.c.h.b16 %v3052
  %v3742 = vunpack.c.l.b16 %v3053
  %v3743 = vunpack.c.h.b16 %v3053
  %v3744 = vunpack.c.l.b16 %v3054
  %v3745 = vunpack.c.h.b16 %v3054
  %v3746 = vunpack.c.l.b16 %v3055
  %v3747 = vunpack.c.h.b16 %v3055
  %v3748 = vunpack.c.l.b16 %v3056
  %v3749 = vunpack.c.h.b16 %v3056
  %v3750 = vunpack.c.l.b16 %v3057
  %v3751 = vunpack.c.h.b16 %v3057
  %v3752 = vunpack.c.l.b16 %v3058
  %v3753 = vunpack.c.h.b16 %v3058
  %v3754 = vunpack.c.l.b16 %v3059
  %v3755 = vunpack.c.h.b16 %v3059
  %v3756 = vunpack.c.l.b16 %v3060
  %v3757 = vunpack.c.h.b16 %v3060
  %v3758 = vunpack.c.l.b16 %v3061
  %v3759 = vunpack.c.h.b16 %v3061
  %v3760 = vunpack.c.l.b16 %v3062
  %v3761 = vunpack.c.h.b16 %v3062
  %v3762 = vunpack.c.l.b16 %v3063
  %v3763 = vunpack.c.h.b16 %v3063
  %v3764 = vunpack.c.l.b16 %v3064
  %v3765 = vunpack.c.h.b16 %v3064
  %v3766 = vunpack.c.l.b16 %v3065
  %v3767 = vunpack.c.h.b16 %v3065
  %v3768 = vunpack.c.l.b16 %v3066
  %v3769 = vunpack.c.h.b16 %v3066
  %v3770 = vunpack.c.l.b16 %v3067
  %v3771 = vunpack.c.h.b16 %v3067
  %v3772 = vunpack.c.l.b16 %v3068
  %v3773 = vunpack.c.h.b16 %v3068
  %v3774 = vunpack.c.l.b16 %v3069
  %v3775 = vunpack.c.h.b16 %v3069
  %v3776 = vunpack.c.l.b16 %v3070
  %v3777 = vunpack.c.h.b16 %v3070
  %v3778 = vunpack.c.l.b16 %v3071
  %v3779 = vunpack.c.h.b16 %v3071
  %v3780 = vunpack.c.l.b16 %v3072
  %v3781 = vunpack.c.h.b16 %v3072
  %v3782 = vunpack.c.l.b16 %v3073
  %v3783 = vunpack.c.h.b16 %v3073
  %v3784 = vunpack.c.l.b16 %v3074
  %v3785 = vunpack.c.h.b16 %v3074
  %v3786 = vunpack.c.l.b16 %v3075
  %v3787 = vunpack.c.h.b16 %v3075
  %v3788 = vunpack.c.l.b16 %v3076
  %v3789 = vunpack.c.h.b16 %v3076
  %v3790 = vunpack.c.l.b16 %v3077
  %v3791 = vunpack.c.h.b16 %v3077
  %v3792 = vunpack.c.l.b16 %v3078
  %v3793 = vunpack.c.h.b16 %v3078
  %v3794 = vunpack.c.l.b16 %v3079
  %v3795 = vunpack.c.h.b16 %v3079
  %v3796 = vunpack.c.l.b16 %v3080
  %v3797 = vunpack.c.h.b16 %v3080
  %v3798 = vunpack.c.l.b16 %v3081
  %v3799 = vunpack.c.h.b16 %v3081
  %v3800 = vunpack.c.l.b16 %v3082
  %v3801 = vunpack.c.h.b16 %v3082
  %v3802 = vunpack.c.l.b16 %v3083
  %v3803 = vunpack.c.h.b16 %v3083
  %v3804 = vunpack.c.l.b16 %v3084
  %v3805 = vunpack.c.h.b16 %v3084
  %v3806 = vunpack.c.l.b16 %v3085
  %v3807 = vunpack.c.h.b16 %v3085
  %v3808 = vunpack.c.l.b16 %v3086
  %v3809 = vunpack.c.h.b16 %v3086
  %v3810 = vunpack.c.l.b16 %v3087
  %v3811 = vunpack.c.h.b16 %v3087
  %v3812 = vunpack.c.l.b16 %v3088
  %v3813 = vunpack.c.h.b16 %v3088
  %v3814 = vunpack.c.l.b16 %v3089
  %v3815 = vunpack.c.h.b16 %v3089
  %v3816 = vunpack.c.l.b16 %v3090
  %v3817 = vunpack.c.h.b16 %v3090
  %v3818 = vunpack.c.l.b16 %v3091
  %v3819 = vunpack.c.h.b16 %v3091
  %v3820 = vunpack.c.l.b16 %v3092
  %v3821 = vunpack.c.h.b16 %v3092
  %v3822 = vunpack.c.l.b16 %v3093
  %v3823 = vunpack.c.h.b16 %v3093
  %v3824 = vunpack.c.l.b16 %v3094
  %v3825 = vunpack.c.h.b16 %v3094
  %v3826 = vunpack.c.l.b16 %v3095
  %v3827 = vunpack.c.h.b16 %v3095
  %v3828 = vunpack.c.l.b16 %v3096
  %v3829 = vunpack.c.h.b16 %v3096
  %v3830 = vunpack.c.l.b16 %v3097
  %v3831 = vunpack.c.h.b16 %v3097
  %v3832 = vunpack.c.l.b16 %v3098
  %v3833 = vunpack.c.h.b16 %v3098
  %v3834 = vunpack.c.l.b16 %v3099
  %v3835 = vunpack.c.h.b16 %v3099
  %v3836 = vunpack.c.l.b16 %v3100
  %v3837 = vunpack.c.h.b16 %v3100
  %v3838 = vunpack.c.l.b16 %v3101
  %v3839 = vunpack.c.h.b16 %v3101
  %v3840 = vunpack.c.l.b16 %v3102
  %v3841 = vunpack.c.h.b16 %v3102
  %v3842 = vunpack.c.l.b16 %v3103
  %v3843 = vunpack.c.h.b16 %v3103
  %v3844 = vunpack.c.l.b16 %v3104
  %v3845 = vunpack.c.h.b16 %v3104
  %v3846 = vunpack.c.l.b16 %v3105
  %v3847 = vunpack.c.h.b16 %v3105
  %v3848 = vunpack.c.l.b16 %v3106
  %v3849 = vunpack.c.h.b16 %v3106
  %v3850 = vunpack.c.l.b16 %v3107
  %v3851 = vunpack.c.h.b16 %v3107
  %v3852 = vunpack.c.l.b16 %v3108
  %v3853 = vunpack.c.h.b16 %v3108
  %v3854 = vunpack.c.l.b16 %v3109
  %v3855 = vunpack.c.h.b16 %v3109
  %v3856 = vunpack.c.l.b16 %v3110
  %v3857 = vunpack.c.h.b16 %v3110
  %v3858 = vunpack.c.l.b16 %v3111
  %v3859 = vunpack.c.h.b16 %v3111
  %v3860 = vunpack.c.l.b16 %v3112
  %v3861 = vunpack.c.h.b16 %v3112
  %v3862 = vunpack.c.l.b16 %v3113
  %v3863 = vunpack.c.h.b16 %v3113
  %v3864 = vunpack.c.l.b16 %v3114
  %v3865 = vunpack.c.h.b16 %v3114
  %v3866 = vunpack.c.l.b16 %v3115
  %v3867 = vunpack.c.h.b16 %v3115
  %v3868 = vunpack.c.l.b16 %v3116
  %v3869 = vunpack.c.h.b16 %v3116
  %v3870 = vunpack.c.l.b16 %v3117
  %v3871 = vunpack.c.h.b16 %v3117
  %v3872 = vunpack.c.l.b16 %v3118
  %v3873 = vunpack.c.h.b16 %v3118
  %v3874 = vunpack.c.l.b16 %v3119
  %v3875 = vunpack.c.h.b16 %v3119
  %v3876 = vunpack.c.l.b16 %v3120
  %v3877 = vunpack.c.h.b16 %v3120
  %v3878 = vunpack.c.l.b16 %v3121
  %v3879 = vunpack.c.h.b16 %v3121
  %v3880 = vunpack.c.l.b16 %v3122
  %v3881 = vunpack.c.h.b16 %v3122
  %v3882 = vunpack.c.l.b16 %v3123
  %v3883 = vunpack.c.h.b16 %v3123
  %v3884 = vunpack.c.l.b16 %v3124
  %v3885 = vunpack.c.h.b16 %v3124
  %v3886 = vunpack.c.l.b16 %v3125
  %v3887 = vunpack.c.h.b16 %v3125
  %v3888 = vunpack.c.l.b16 %v3126
  %v3889 = vunpack.c.h.b16 %v3126
  %v3890 = vunpack.c.l.b16 %v3127
  %v3891 = vunpack.c.h.b16 %v3127
  %v3892 = vunpack.c.l.b16 %v3128
  %v3893 = vunpack.c.h.b16 %v3128
  %v3894 = vunpack.c.l.b16 %v3129
  %v3895 = vunpack.c.h.b16 %v3129
  %v3896 = vunpack.c.l.b16 %v3130
  %v3897 = vunpack.c.h.b16 %v3130
  %v3898 = vunpack.c.l.b16 %v3131
  %v3899 = vunpack.c.h.b16 %v3131
  %v3900 = vunpack.c.l.b16 %v3132
  %v3901 = vunpack.c.h.b16 %v3132
  %v3902 = vunpack.c.l.b16 %v3133
  %v3903 = vunpack.c.h.b16 %v3133
  %v3904 = vunpack.c.l.b16 %v3134
  %v3905 = vunpack.c.h.b16 %v3134
  %v3906 = vunpack.c.l.b16 %v3135
  %v3907 = vunpack.c.h.b16 %v3135
  %v3908 = vunpack.c.l.b16 %v3136
  %v3909 = vunpack.c.h.b16 %v3136
  %v3910 = vunpack.c.l.b16 %v3137
  %v3911 = vunpack.c.h.b16 %v3137
  %v3912 = vunpack.c.l.b16 %v3138
  %v3913 = vunpack.c.h.b16 %v3138
  %v3914 = vunpack.c.l.b16 %v3139
  %v3915 = vunpack.c.h.b16 %v3139
  %v3916 = vunpack.c.l.b16 %v3140
  %v3917 = vunpack.c.h.b16 %v3140
  %v3918 = vunpack.c.l.b16 %v3141
  %v3919 = vunpack.c.h.b16 %v3141
  %v3920 = vpack.c.b16 %v3412, %v3408
  %v3921 = vpack.c.b16 %v3413, %v3409
  %v3922 = vpack.c.b16 %v3414, %v3410
  %v3923 = vpack.c.b16 %v3415, %v3411
  %v3924 = vpack.c.b16 %v3420, %v3416
  %v3925 = vpack.c.b16 %v3421, %v3417
  %v3926 = vpack.c.b16 %v3422, %v3418
  %v3927 = vpack.c.b16 %v3423, %v3419
  %v3928 = vpack.c.b16 %v3428, %v3424
  %v3929 = vpack.c.b16 %v3429, %v3425
  %v3930 = vpack.c.b16 %v3430, %v3426
  %v3931 = vpack.c.b16 %v3431, %v3427
  %v3932 = vpack.c.b16 %v3436, %v3432
  %v3933 = vpack.c.b16 %v3437, %v3433
  %v3934 = vpack.c.b16 %v3438, %v3434
  %v3935 = vpack.c.b16 %v3439, %v3435
  %v3936 = vpack.c.b16 %v3444, %v3440
  %v3937 = vpack.c.b16 %v3445, %v3441
  %v3938 = vpack.c.b16 %v3446, %v3442
  %v3939 = vpack.c.b16 %v3447, %v3443
  %v3940 = vpack.c.b16 %v3452, %v3448
  %v3941 = vpack.c.b16 %v3453, %v3449
  %v3942 = vpack.c.b16 %v3454, %v3450
  %v3943 = vpack.c.b16 %v3455, %v3451
  %v3944 = vpack.c.b16 %v3460, %v3456
  %v3945 = vpack.c.b16 %v3461, %v3457
  %v3946 = vpack.c.b16 %v3462, %v3458
  %v3947 = vpack.c.b16 %v3463, %v3459
  %v3948 = vpack.c.b16 %v3468, %v3464
  %v3949 = vpack.c.b16 %v3469, %v3465
  %v3950 = vpack.c.b16 %v3470, %v3466
  %v3951 = vpack.c.b16 %v3471, %v3467
  %v3952 = vpack.c.b16 %v3476, %v3472
  %v3953 = vpack.c.b16 %v3477, %v3473
  %v3954 = vpack.c.b16 %v3478, %v3474
  %v3955 = vpack.c.b16 %v3479, %v3475
  %v3956 = vpack.c.b16 %v3484, %v3480
  %v3957 = vpack.c.b16 %v3485, %v3481
  %v3958 = vpack.c.b16 %v3486, %v3482
  %v3959 = vpack.c.b16 %v3487, %v3483
  %v3960 = vpack.c.b16 %v3492, %v3488
  %v3961 = vpack.c.b16 %v3493, %v3489
  %v3962 = vpack.c.b16 %v3494, %v3490
  %v3963 = vpack.c.b16 %v3495, %v3491
  %v3964 = vpack.c.b16 %v3500, %v3496
  %v3965 = vpack.c.b16 %v3501, %v3497
  %v3966 = vpack.c.b16 %v3502, %v3498
  %v3967 = vpack.c.b16 %v3503, %v3499
  %v3968 = vpack.c.b16 %v3508, %v3504
  %v3969 = vpack.c.b16 %v3509, %v3505
  %v3970 = vpack.c.b16 %v3510, %v3506
  %v3971 = vpack.c.b16 %v3511, %v3507
  %v3972 = vpack.c.b16 %v3516, %v3512
  %v3973 = vpack.c.b16 %v3517, %v3513
  %v3974 = vpack.c.b16 %v3518, %v3514
  %v3975 = vpack.c.b16 %v3519, %v3515
  %v3976 = vpack.c.b16 %v3524, %v3520
  %v3977 = vpack.c.b16 %v3525, %v3521
  %v3978 = vpack.c.b16 %v3526, %v3522
  %v3979 = vpack.c.b16 %v3527, %v3523
  %v3980 = vpack.c.b16 %v3532, %v3528
  %v3981 = vpack.c.b16 %v3533, %v3529
  %v3982 = vpack.c.b16 %v3534, %v3530
  %v3983 = vpack.c.b16 %v3535, %v3531
  %v3984 = vpack.c.b16 %v3540, %v3536
  %v3985 = vpack.c.b16 %v3541, %v3537
  %v3986 = vpack.c.b16 %v3542, %v3538
  %v3987 = vpack.c.b16 %v3543, %v3539
  %v3988 = vpack.c.b16 %v3548, %v3544
  %v3989 = vpack.c.b16 %v3549, %v3545
  %v3990 = vpack.c.b16 %v3550, %v3546
  %v3991 = vpack.c.b16 %v3551, %v3547
  %v3992 = vpack.c.b16 %v3556, %v3552
  %v3993 = vpack.c.b16 %v3557, %v3553
  %v3994 = vpack.c.b16 %v3558, %v3554
  %v3995 = vpack.c.b16 %v3559, %v3555
  %v3996 = vpack.c.b16 %v3564, %v3560
  %v3997 = vpack.c.b16 %v3565, %v3561
  %v3998 = vpack.c.b16 %v3566, %v3562
  %v3999 = vpack.c.b16 %v3567, %v3563
  %v4000 = vpack.c.b16 %v3572, %v3568
  %v4001 = vpack.c.b16 %v3573, %v3569
  %v4002 = vpack.c.b16 %v3574, %v3570
  %v4003 = vpack.c.b16 %v3575, %v3571
  %v4004 = vpack.c.b16 %v3580, %v3576
  %v4005 = vpack.c.b16 %v3581, %v3577
  %v4006 = vpack.c.b16 %v3582, %v3578
  %v4007 = vpack.c.b16 %v3583, %v3579
  %v4008 = vpack.c.b16 %v3588, %v3584
  %v4009 = vpack.c.b16 %v3589, %v3585
  %v4010 = vpack.c.b16 %v3590, %v3586
  %v4011 = vpack.c.b16 %v3591, %v3587
  %v4012 = vpack.c.b16 %v3596, %v3592
  %v4013 = vpack.c.b16 %v3597, %v3593
  %v4014 = vpack.c.b16 %v3598, %v3594
  %v4015 = vpack.c.b16 %v3599, %v3595
  %v4016 = vpack.c.b16 %v3604, %v3600
  %v4017 = vpack.c.b16 %v3605, %v3601
  %v4018 = vpack.c.b16 %v3606, %v3602
  %v4019 = vpack.c.b16 %v3607, %v3603
  %v4020 = vpack.c.b16 %v3612, %v3608
  %v4021 = vpack.c.b16 %v3613, %v3609
  %v4022 = vpack.c.b16 %v3614, %v3610
  %v4023 = vpack.c.b16 %v3615, %v3611
  %v4024 = vpack.c.b16 %v3620, %v3616
  %v4025 = vpack.c.b16 %v3621, %v3617
  %v4026 = vpack.c.b16 %v3622, %v3618
  %v4027 = vpack.c.b16 %v3623, %v3619
  %v4028 = vpack.c.b16 %v3628, %v3624
  %v4029 = vpack.c.b16 %v3629, %v3625
  %v4030 = vpack.c.b16 %v3630, %v3626
  %v4031 = vpack.c.b16 %v3631, %v3627
  %v4032 = vpack.c.b16 %v3636, %v3632
  %v4033 = vpack.c.b16 %v3637, %v3633
  %v4034 = vpack.c.b16 %v3638, %v3634
  %v4035 = vpack.c.b16 %v3639, %v3635
  %v4036 = vpack.c.b16 %v3644, %v3640
  %v4037 = vpack.c.b16 %v3645, %v3641
  %v4038 = vpack.c.b16 %v3646, %v3642
  %v4039 = vpack.c.b16 %v3647, %v3643
  %v4040 = vpack.c.b16 %v3652, %v3648
  %v4041 = vpack.c.b16 %v3653, %v3649
  %v4042 = vpack.c.b16 %v3654, %v3650
  %v4043 = vpack.c.b16 %v3655, %v3651
  %v4044 = vpack.c.b16 %v3660, %v3656
  %v4045 = vpack.c.b16 %v3661, %v3657
  %v4046 = vpack.c.b16 %v3662, %v3658
  %v4047 = vpack.c.b16 %v3663, %v3659
  %v4048 = vpack.c.b16 %v3668, %v3664
  %v4049 = vpack.c.b16 %v3669, %v3665
  %v4050 = vpack.c.b16 %v3670, %v3666
  %v4051 = vpack.c.b16 %v3671, %v3667
  %v4052 = vpack.c.b16 %v3676, %v3672
  %v4053 = vpack.c.b16 %v3677, %v3673
  %v4054 = vpack.c.b16 %v3678, %v3674
  %v4055 = vpack.c.b16 %v3679, %v3675
  %v4056 = vpack.c.b16 %v3684, %v3680
  %v4057 = vpack.c.b16 %v3685, %v3681
  %v4058 = vpack.c.b16 %v3686, %v3682
  %v4059 = vpack.c.b16 %v3687, %v3683
  %v4060 = vpack.c.b16 %v3692, %v3688
  %v4061 = vpack.c.b16 %v3693, %v3689
  %v4062 = vpack.c.b16 %v3694, %v3690
  %v4063 = vpack.c.b16 %v3695, %v3691
  %v4064 = vpack.c.b16 %v3700, %v3696
  %v4065 = vpack.c.b16 %v3701, %v3697
  %v4066 = vpack.c.b16 %v3702, %v3698
  %v4067 = vpack.c.b16 %v3703, %v3699
  %v4068 = vpack.c.b16 %v3708, %v3704
  %v4069 = vpack.c.b16 %v3709, %v3705
  %v4070 = vpack.c.b16 %v3710, %v3706
  %v4071 = vpack.c.b16 %v3711, %v3707
  %v4072 = vpack.c.b16 %v3716, %v3712
  %v4073 = vpack.c.b16 %v3717, %v3713
  %v4074 = vpack.c.b16 %v3718, %v3714
  %v4075 = vpack.c.b16 %v3719, %v3715
  %v4076 = vpack.c.b16 %v3724, %v3720
  %v4077 = vpack.c.b16 %v3725, %v3721
  %v4078 = vpack.c.b16 %v3726, %v3722
  %v4079 = vpack.c.b16 %v3727, %v3723
  %v4080 = vpack.c.b16 %v3732, %v3728
  %v4081 = vpack.c.b16 %v3733, %v3729
  %v4082 = vpack.c.b16 %v3734, %v3730
  %v4083 = vpack.c.b16 %v3735, %v3731
  %v4084 = vpack.c.b16 %v3740, %v3736
  %v4085 = vpack.c.b16 %v3741, %v3737
  %v4086 = vpack.c.b16 %v3742, %v3738
  %v4087 = vpack.c.b16 %v3743, %v3739
  %v4088 = vpack.c.b16 %v3748, %v3744
  %v4089 = vpack.c.b16 %v3749, %v3745
  %v4090 = vpack.c.b16 %v3750, %v3746
  %v4091 = vpack.c.b16 %v3751, %v3747
  %v4092 = vpack.c.b16 %v3756, %v3752
  %v4093 = vpack.c.b16 %v3757, %v3753
  %v4094 = vpack.c.b16 %v3758, %v3754
  %v4095 = vpack.c.b16 %v3759, %v3755
  %v4096 = vpack.c.b16 %v3764, %v3760
  %v4097 = vpack.c.b16 %v3765, %v3761
  %v4098 = vpack.c.b16 %v3766, %v3762
  %v4099 = vpack.c.b16 %v3767, %v3763
  %v4100 = vpack.c.b16 %v3772, %v3768
  %v4101 = vpack.c.b16 %v3773, %v3769
  %v4102 = vpack.c.b16 %v3774, %v3770
  %v4103 = vpack.c.b16 %v3775, %v3771
  %v4104 = vpack.c.b16 %v3780, %v3776
  %v4105 = vpack.c.b16 %v3781, %v3777
  %v4106 = vpack.c.b16 %v3782, %v3778
  %v4107 = vpack.c.b16 %v3783, %v3779
  %v4108 = vpack.c.b16 %v3788, %v3784
  %v4109 = vpack.c.b16 %v3789, %v3785
  %v4110 = vpack.c.b16 %v3790, %v3786
  %v4111 = vpack.c.b16 %v3791, %v3787
  %v4112 = vpack.c.b16 %v3796, %v3792
  %v4113 = vpack.c.b16 %v3797, %v3793
  %v4114 = vpack.c.b16 %v3798, %v3794
  %v4115 = vpack.c.b16 %v3799, %v3795
  %v4116 = vpack.c.b16 %v3804, %v3800
  %v4117 = vpack.c.b16 %v3805, %v3801
  %v4118 = vpack.c.b16 %v3806, %v3802
  %v4119 = vpack.c.b16 %v3807, %v3803
  %v4120 = vpack.c.b16 %v3812, %v3808
  %v4121 = vpack.c.b16 %v3813, %v3809
  %v4122 = vpack.c.b16 %v3814, %v3810
  %v4123 = vpack.c.b16 %v3815, %v3811
  %v4124 = vpack.c.b16 %v3820, %v3816
  %v4125 = vpack.c.b16 %v3821, %v3817
  %v4126 = vpack.c.b16 %v3822, %v3818
  %v4127 = vpack.c.b16 %v3823, %v3819
  %v4128 = vpack.c.b16 %v3828, %v3824
  %v4129 = vpack.c.b16 %v3829, %v3825
  %v4130 = vpack.c.b16 %v3830, %v3826
  %v4131 = vpack.c.b16 %v3831, %v3827
  %v4132 = vpack.c.b16 %v3836, %v3832
  %v4133 = vpack.c.b16 %v3837, %v3833
  %v4134 = vpack.c.b16 %v3838, %v3834
  %v4135 = vpack.c.b16 %v3839, %v3835
  %v4136 = vpack.c.b16 %v3844, %v3840
  %v4137 = vpack.c.b16 %v3845, %v3841
  %v4138 = vpack.c.b16 %v3846, %v3842
  %v4139 = vpack.c.b16 %v3847, %v3843
  %v4140 = vpack.c.b16 %v3852, %v3848
  %v4141 = vpack.c.b16 %v3853, %v3849
  %v4142 = vpack.c.b16 %v3854, %v3850
  %v4143 = vpack.c.b16 %v3855, %v3851
  %v4144 = vpack.c.b16 %v3860, %v3856
  %v4145 = vpack.c.b16 %v3861, %v3857
  %v4146 = vpack.c.b16 %v3862, %v3858
  %v4147 = vpack.c.b16 %v3863, %v3859
  %v4148 = vpack.c.b16 %v3868, %v3864
  %v4149 = vpack.c.b16 %v3869, %v3865
  %v4150 = vpack.c.b16 %v3870, %v3866
  %v4151 = vpack.c.b16 %v3871, %v3867
  %v4152 = vpack.c.b16 %v3876, %v3872
  %v4153 = vpack.c.b16 %v3877, %v3873
  %v4154 = vpack.c.b16 %v3878, %v3874
  %v4155 = vpack.c.b16 %v3879, %v3875
  %v4156 = vpack.c.b16 %v3884, %v3880
  %v4157 = vpack.c.b16 %v3885, %v3881
  %v4158 = vpack.c.b16 %v3886, %v3882
  %v4159 = vpack.c.b16 %v3887, %v3883
  %v4160 = vpack.c.b16 %v3892, %v3888
  %v4161 = vpack.c.b16 %v3893, %v3889
  %v4162 = vpack.c.b16 %v3894, %v3890
  %v4163 = vpack.c.b16 %v3895, %v3891
  %v4164 = vpack.c.b16 %v3900, %v3896
  %v4165 = vpack.c.b16 %v3901, %v3897
  %v4166 = vpack.c.b16 %v3902, %v3898
  %v4167 = vpack.c.b16 %v3903, %v3899
  %v4168 = vpack.c.b16 %v3908, %v3904
  %v4169 = vpack.c.b16 %v3909, %v3905
  %v4170 = vpack.c.b16 %v3910, %v3906
  %v4171 = vpack.c.b16 %v3911, %v3907
  %v4172 = vpack.c.b16 %v3916, %v3912
  %v4173 = vpack.c.b16 %v3917, %v3913
  %v4174 = vpack.c.b16 %v3918, %v3914
  %v4175 = vpack.c.b16 %v3919, %v3915
  %4432 = vmatpush.bf16.msra.mxu0 %v3948
  %4433 = vmatpush.bf16.msra.mxu0 %v3944
  %4434 = vmatpush.bf16.msra.mxu0 %v3940
  %4435 = vmatpush.bf16.msra.mxu0 %v3936
  %4436 = vmatpush.bf16.msra.mxu0 %v3932
  %4437 = vmatpush.bf16.msra.mxu0 %v3928
  %4438 = vmatpush.bf16.msra.mxu0 %v3924
  %4439 = vmatpush.bf16.msra.mxu0 %v3920
  %4440 = vmatmul.bf16.gmra.mxu0 %v2878
  %v4441 = vpop.f32.mrf.mxu0
  %v4442 = vadd.f32 %v3144, %v4441
  %v4443 = vpop.f32.mrf.mxu0
  %4444 = vdwg.mxu0
  %4445 = vmatpush.bf16.msra.mxu0 %v3980
  %4446 = vmatpush.bf16.msra.mxu0 %v3976
  %4447 = vmatpush.bf16.msra.mxu0 %v3972
  %4448 = vmatpush.bf16.msra.mxu0 %v3968
  %4449 = vmatpush.bf16.msra.mxu0 %v3964
  %4450 = vmatpush.bf16.msra.mxu0 %v3960
  %4451 = vmatpush.bf16.msra.mxu0 %v3956
  %4452 = vmatpush.bf16.msra.mxu0 %v3952
  %4453 = vmatmul.bf16.gmra.mxu0 %v2879
  %v4454 = vpop.f32.mrf.mxu0
  %v4455 = vadd.f32 %v4442, %v4454
  %v4456 = vpop.f32.mrf.mxu0
  %4457 = vdwg.mxu0
  %4458 = vmatpush.bf16.msra.mxu0 %v4012
  %4459 = vmatpush.bf16.msra.mxu0 %v4008
  %4460 = vmatpush.bf16.msra.mxu0 %v4004
  %4461 = vmatpush.bf16.msra.mxu0 %v4000
  %4462 = vmatpush.bf16.msra.mxu0 %v3996
  %4463 = vmatpush.bf16.msra.mxu0 %v3992
  %4464 = vmatpush.bf16.msra.mxu0 %v3988
  %4465 = vmatpush.bf16.msra.mxu0 %v3984
  %4466 = vmatmul.bf16.gmra.mxu0 %v2880
  %v4467 = vpop.f32.mrf.mxu0
  %v4468 = vadd.f32 %v4455, %v4467
  %v4469 = vpop.f32.mrf.mxu0
  %4470 = vdwg.mxu0
  %4471 = vmatpush.bf16.msra.mxu0 %v4044
  %4472 = vmatpush.bf16.msra.mxu0 %v4040
  %4473 = vmatpush.bf16.msra.mxu0 %v4036
  %4474 = vmatpush.bf16.msra.mxu0 %v4032
  %4475 = vmatpush.bf16.msra.mxu0 %v4028
  %4476 = vmatpush.bf16.msra.mxu0 %v4024
  %4477 = vmatpush.bf16.msra.mxu0 %v4020
  %4478 = vmatpush.bf16.msra.mxu0 %v4016
  %4479 = vmatmul.bf16.gmra.mxu0 %v2881
  %v4480 = vpop.f32.mrf.mxu0
  %v4481 = vadd.f32 %v4468, %v4480
  %v4482 = vpop.f32.mrf.mxu0
  %4483 = vdwg.mxu0
  %4484 = vmatpush.bf16.msra.mxu0 %v4076
  %4485 = vmatpush.bf16.msra.mxu0 %v4072
  %4486 = vmatpush.bf16.msra.mxu0 %v4068
  %4487 = vmatpush.bf16.msra.mxu0 %v4064
  %4488 = vmatpush.bf16.msra.mxu0 %v4060
  %4489 = vmatpush.bf16.msra.mxu0 %v4056
  %4490 = vmatpush.bf16.msra.mxu0 %v4052
  %4491 = vmatpush.bf16.msra.mxu0 %v4048
  %4492 = vmatmul.bf16.gmra.mxu0 %v2882
  %v4493 = vpop.f32.mrf.mxu0
  %v4494 = vadd.f32 %v4481, %v4493
  %v4495 = vpop.f32.mrf.mxu0
  %4496 = vdwg.mxu0
  %4497 = vmatpush.bf16.msra.mxu0 %v4108
  %4498 = vmatpush.bf16.msra.mxu0 %v4104
  %4499 = vmatpush.bf16.msra.mxu0 %v4100
  %4500 = vmatpush.bf16.msra.mxu0 %v4096
  %4501 = vmatpush.bf16.msra.mxu0 %v4092
  %4502 = vmatpush.bf16.msra.mxu0 %v4088
  %4503 = vmatpush.bf16.msra.mxu0 %v4084
  %4504 = vmatpush.bf16.msra.mxu0 %v4080
  %4505 = vmatmul.bf16.gmra.mxu0 %v2883
  %v4506 = vpop.f32.mrf.mxu0
  %v4507 = vadd.f32 %v4494, %v4506
  %v4508 = vpop.f32.mrf.mxu0
  %4509 = vdwg.mxu0
  %4510 = vmatpush.bf16.msra.mxu0 %v4140
  %4511 = vmatpush.bf16.msra.mxu0 %v4136
  %4512 = vmatpush.bf16.msra.mxu0 %v4132
  %4513 = vmatpush.bf16.msra.mxu0 %v4128
  %4514 = vmatpush.bf16.msra.mxu0 %v4124
  %4515 = vmatpush.bf16.msra.mxu0 %v4120
  %4516 = vmatpush.bf16.msra.mxu0 %v4116
  %4517 = vmatpush.bf16.msra.mxu0 %v4112
  %4518 = vmatmul.bf16.gmra.mxu0 %v2884
  %v4519 = vpop.f32.mrf.mxu0
  %v4520 = vadd.f32 %v4507, %v4519
  %v4521 = vpop.f32.mrf.mxu0
  %4522 = vdwg.mxu0
  %4523 = vmatpush.bf16.msra.mxu0 %v4172
  %4524 = vmatpush.bf16.msra.mxu0 %v4168
  %4525 = vmatpush.bf16.msra.mxu0 %v4164
  %4526 = vmatpush.bf16.msra.mxu0 %v4160
  %4527 = vmatpush.bf16.msra.mxu0 %v4156
  %4528 = vmatpush.bf16.msra.mxu0 %v4152
  %4529 = vmatpush.bf16.msra.mxu0 %v4148
  %4530 = vmatpush.bf16.msra.mxu0 %v4144
  %4531 = vmatmul.bf16.gmra.mxu0 %v2885
  %v4532 = vpop.f32.mrf.mxu0
  %v4533 = vadd.f32 %v4520, %v4532
  %v4534 = vpop.f32.mrf.mxu0
  %4535 = vdwg.mxu0
  %4536 = vmatpush.bf16.msra.mxu0 %v3949
  %4537 = vmatpush.bf16.msra.mxu0 %v3945
  %4538 = vmatpush.bf16.msra.mxu0 %v3941
  %4539 = vmatpush.bf16.msra.mxu0 %v3937
  %4540 = vmatpush.bf16.msra.mxu0 %v3933
  %4541 = vmatpush.bf16.msra.mxu0 %v3929
  %4542 = vmatpush.bf16.msra.mxu0 %v3925
  %4543 = vmatpush.bf16.msra.mxu0 %v3921
  %4544 = vmatmul.bf16.gmra.mxu0 %v2878
  %v4545 = vpop.f32.mrf.mxu0
  %v4546 = vadd.f32 %v3145, %v4545
  %v4547 = vpop.f32.mrf.mxu0
  %4548 = vdwg.mxu0
  %4549 = vmatpush.bf16.msra.mxu0 %v3981
  %4550 = vmatpush.bf16.msra.mxu0 %v3977
  %4551 = vmatpush.bf16.msra.mxu0 %v3973
  %4552 = vmatpush.bf16.msra.mxu0 %v3969
  %4553 = vmatpush.bf16.msra.mxu0 %v3965
  %4554 = vmatpush.bf16.msra.mxu0 %v3961
  %4555 = vmatpush.bf16.msra.mxu0 %v3957
  %4556 = vmatpush.bf16.msra.mxu0 %v3953
  %4557 = vmatmul.bf16.gmra.mxu0 %v2879
  %v4558 = vpop.f32.mrf.mxu0
  %v4559 = vadd.f32 %v4546, %v4558
  %v4560 = vpop.f32.mrf.mxu0
  %4561 = vdwg.mxu0
  %4562 = vmatpush.bf16.msra.mxu0 %v4013
  %4563 = vmatpush.bf16.msra.mxu0 %v4009
  %4564 = vmatpush.bf16.msra.mxu0 %v4005
  %4565 = vmatpush.bf16.msra.mxu0 %v4001
  %4566 = vmatpush.bf16.msra.mxu0 %v3997
  %4567 = vmatpush.bf16.msra.mxu0 %v3993
  %4568 = vmatpush.bf16.msra.mxu0 %v3989
  %4569 = vmatpush.bf16.msra.mxu0 %v3985
  %4570 = vmatmul.bf16.gmra.mxu0 %v2880
  %v4571 = vpop.f32.mrf.mxu0
  %v4572 = vadd.f32 %v4559, %v4571
  %v4573 = vpop.f32.mrf.mxu0
  %4574 = vdwg.mxu0
  %4575 = vmatpush.bf16.msra.mxu0 %v4045
  %4576 = vmatpush.bf16.msra.mxu0 %v4041
  %4577 = vmatpush.bf16.msra.mxu0 %v4037
  %4578 = vmatpush.bf16.msra.mxu0 %v4033
  %4579 = vmatpush.bf16.msra.mxu0 %v4029
  %4580 = vmatpush.bf16.msra.mxu0 %v4025
  %4581 = vmatpush.bf16.msra.mxu0 %v4021
  %4582 = vmatpush.bf16.msra.mxu0 %v4017
  %4583 = vmatmul.bf16.gmra.mxu0 %v2881
  %v4584 = vpop.f32.mrf.mxu0
  %v4585 = vadd.f32 %v4572, %v4584
  %v4586 = vpop.f32.mrf.mxu0
  %4587 = vdwg.mxu0
  %4588 = vmatpush.bf16.msra.mxu0 %v4077
  %4589 = vmatpush.bf16.msra.mxu0 %v4073
  %4590 = vmatpush.bf16.msra.mxu0 %v4069
  %4591 = vmatpush.bf16.msra.mxu0 %v4065
  %4592 = vmatpush.bf16.msra.mxu0 %v4061
  %4593 = vmatpush.bf16.msra.mxu0 %v4057
  %4594 = vmatpush.bf16.msra.mxu0 %v4053
  %4595 = vmatpush.bf16.msra.mxu0 %v4049
  %4596 = vmatmul.bf16.gmra.mxu0 %v2882
  %v4597 = vpop.f32.mrf.mxu0
  %v4598 = vadd.f32 %v4585, %v4597
  %v4599 = vpop.f32.mrf.mxu0
  %4600 = vdwg.mxu0
  %4601 = vmatpush.bf16.msra.mxu0 %v4109
  %4602 = vmatpush.bf16.msra.mxu0 %v4105
  %4603 = vmatpush.bf16.msra.mxu0 %v4101
  %4604 = vmatpush.bf16.msra.mxu0 %v4097
  %4605 = vmatpush.bf16.msra.mxu0 %v4093
  %4606 = vmatpush.bf16.msra.mxu0 %v4089
  %4607 = vmatpush.bf16.msra.mxu0 %v4085
  %4608 = vmatpush.bf16.msra.mxu0 %v4081
  %4609 = vmatmul.bf16.gmra.mxu0 %v2883
  %v4610 = vpop.f32.mrf.mxu0
  %v4611 = vadd.f32 %v4598, %v4610
  %v4612 = vpop.f32.mrf.mxu0
  %4613 = vdwg.mxu0
  %4614 = vmatpush.bf16.msra.mxu0 %v4141
  %4615 = vmatpush.bf16.msra.mxu0 %v4137
  %4616 = vmatpush.bf16.msra.mxu0 %v4133
  %4617 = vmatpush.bf16.msra.mxu0 %v4129
  %4618 = vmatpush.bf16.msra.mxu0 %v4125
  %4619 = vmatpush.bf16.msra.mxu0 %v4121
  %4620 = vmatpush.bf16.msra.mxu0 %v4117
  %4621 = vmatpush.bf16.msra.mxu0 %v4113
  %4622 = vmatmul.bf16.gmra.mxu0 %v2884
  %v4623 = vpop.f32.mrf.mxu0
  %v4624 = vadd.f32 %v4611, %v4623
  %v4625 = vpop.f32.mrf.mxu0
  %4626 = vdwg.mxu0
  %4627 = vmatpush.bf16.msra.mxu0 %v4173
  %4628 = vmatpush.bf16.msra.mxu0 %v4169
  %4629 = vmatpush.bf16.msra.mxu0 %v4165
  %4630 = vmatpush.bf16.msra.mxu0 %v4161
  %4631 = vmatpush.bf16.msra.mxu0 %v4157
  %4632 = vmatpush.bf16.msra.mxu0 %v4153
  %4633 = vmatpush.bf16.msra.mxu0 %v4149
  %4634 = vmatpush.bf16.msra.mxu0 %v4145
  %4635 = vmatmul.bf16.gmra.mxu0 %v2885
  %v4636 = vpop.f32.mrf.mxu0
  %v4637 = vadd.f32 %v4624, %v4636
  %v4638 = vpop.f32.mrf.mxu0
  %4639 = vdwg.mxu0
  %4640 = vmatpush.bf16.msra.mxu0 %v3950
  %4641 = vmatpush.bf16.msra.mxu0 %v3946
  %4642 = vmatpush.bf16.msra.mxu0 %v3942
  %4643 = vmatpush.bf16.msra.mxu0 %v3938
  %4644 = vmatpush.bf16.msra.mxu0 %v3934
  %4645 = vmatpush.bf16.msra.mxu0 %v3930
  %4646 = vmatpush.bf16.msra.mxu0 %v3926
  %4647 = vmatpush.bf16.msra.mxu0 %v3922
  %4648 = vmatmul.bf16.gmra.mxu0 %v2878
  %v4649 = vpop.f32.mrf.mxu0
  %v4650 = vadd.f32 %v3146, %v4649
  %v4651 = vpop.f32.mrf.mxu0
  %4652 = vdwg.mxu0
  %4653 = vmatpush.bf16.msra.mxu0 %v3982
  %4654 = vmatpush.bf16.msra.mxu0 %v3978
  %4655 = vmatpush.bf16.msra.mxu0 %v3974
  %4656 = vmatpush.bf16.msra.mxu0 %v3970
  %4657 = vmatpush.bf16.msra.mxu0 %v3966
  %4658 = vmatpush.bf16.msra.mxu0 %v3962
  %4659 = vmatpush.bf16.msra.mxu0 %v3958
  %4660 = vmatpush.bf16.msra.mxu0 %v3954
  %4661 = vmatmul.bf16.gmra.mxu0 %v2879
  %v4662 = vpop.f32.mrf.mxu0
  %v4663 = vadd.f32 %v4650, %v4662
  %v4664 = vpop.f32.mrf.mxu0
  %4665 = vdwg.mxu0
  %4666 = vmatpush.bf16.msra.mxu0 %v4014
  %4667 = vmatpush.bf16.msra.mxu0 %v4010
  %4668 = vmatpush.bf16.msra.mxu0 %v4006
  %4669 = vmatpush.bf16.msra.mxu0 %v4002
  %4670 = vmatpush.bf16.msra.mxu0 %v3998
  %4671 = vmatpush.bf16.msra.mxu0 %v3994
  %4672 = vmatpush.bf16.msra.mxu0 %v3990
  %4673 = vmatpush.bf16.msra.mxu0 %v3986
  %4674 = vmatmul.bf16.gmra.mxu0 %v2880
  %v4675 = vpop.f32.mrf.mxu0
  %v4676 = vadd.f32 %v4663, %v4675
  %v4677 = vpop.f32.mrf.mxu0
  %4678 = vdwg.mxu0
  %4679 = vmatpush.bf16.msra.mxu0 %v4046
  %4680 = vmatpush.bf16.msra.mxu0 %v4042
  %4681 = vmatpush.bf16.msra.mxu0 %v4038
  %4682 = vmatpush.bf16.msra.mxu0 %v4034
  %4683 = vmatpush.bf16.msra.mxu0 %v4030
  %4684 = vmatpush.bf16.msra.mxu0 %v4026
  %4685 = vmatpush.bf16.msra.mxu0 %v4022
  %4686 = vmatpush.bf16.msra.mxu0 %v4018
  %4687 = vmatmul.bf16.gmra.mxu0 %v2881
  %v4688 = vpop.f32.mrf.mxu0
  %v4689 = vadd.f32 %v4676, %v4688
  %v4690 = vpop.f32.mrf.mxu0
  %4691 = vdwg.mxu0
  %4692 = vmatpush.bf16.msra.mxu0 %v4078
  %4693 = vmatpush.bf16.msra.mxu0 %v4074
  %4694 = vmatpush.bf16.msra.mxu0 %v4070
  %4695 = vmatpush.bf16.msra.mxu0 %v4066
  %4696 = vmatpush.bf16.msra.mxu0 %v4062
  %4697 = vmatpush.bf16.msra.mxu0 %v4058
  %4698 = vmatpush.bf16.msra.mxu0 %v4054
  %4699 = vmatpush.bf16.msra.mxu0 %v4050
  %4700 = vmatmul.bf16.gmra.mxu0 %v2882
  %v4701 = vpop.f32.mrf.mxu0
  %v4702 = vadd.f32 %v4689, %v4701
  %v4703 = vpop.f32.mrf.mxu0
  %4704 = vdwg.mxu0
  %4705 = vmatpush.bf16.msra.mxu0 %v4110
  %4706 = vmatpush.bf16.msra.mxu0 %v4106
  %4707 = vmatpush.bf16.msra.mxu0 %v4102
  %4708 = vmatpush.bf16.msra.mxu0 %v4098
  %4709 = vmatpush.bf16.msra.mxu0 %v4094
  %4710 = vmatpush.bf16.msra.mxu0 %v4090
  %4711 = vmatpush.bf16.msra.mxu0 %v4086
  %4712 = vmatpush.bf16.msra.mxu0 %v4082
  %4713 = vmatmul.bf16.gmra.mxu0 %v2883
  %v4714 = vpop.f32.mrf.mxu0
  %v4715 = vadd.f32 %v4702, %v4714
  %v4716 = vpop.f32.mrf.mxu0
  %4717 = vdwg.mxu0
  %4718 = vmatpush.bf16.msra.mxu0 %v4142
  %4719 = vmatpush.bf16.msra.mxu0 %v4138
  %4720 = vmatpush.bf16.msra.mxu0 %v4134
  %4721 = vmatpush.bf16.msra.mxu0 %v4130
  %4722 = vmatpush.bf16.msra.mxu0 %v4126
  %4723 = vmatpush.bf16.msra.mxu0 %v4122
  %4724 = vmatpush.bf16.msra.mxu0 %v4118
  %4725 = vmatpush.bf16.msra.mxu0 %v4114
  %4726 = vmatmul.bf16.gmra.mxu0 %v2884
  %v4727 = vpop.f32.mrf.mxu0
  %v4728 = vadd.f32 %v4715, %v4727
  %v4729 = vpop.f32.mrf.mxu0
  %4730 = vdwg.mxu0
  %4731 = vmatpush.bf16.msra.mxu0 %v4174
  %4732 = vmatpush.bf16.msra.mxu0 %v4170
  %4733 = vmatpush.bf16.msra.mxu0 %v4166
  %4734 = vmatpush.bf16.msra.mxu0 %v4162
  %4735 = vmatpush.bf16.msra.mxu0 %v4158
  %4736 = vmatpush.bf16.msra.mxu0 %v4154
  %4737 = vmatpush.bf16.msra.mxu0 %v4150
  %4738 = vmatpush.bf16.msra.mxu0 %v4146
  %4739 = vmatmul.bf16.gmra.mxu0 %v2885
  %v4740 = vpop.f32.mrf.mxu0
  %v4741 = vadd.f32 %v4728, %v4740
  %v4742 = vpop.f32.mrf.mxu0
  %4743 = vdwg.mxu0
  %4744 = vmatpush.bf16.msra.mxu0 %v3951
  %4745 = vmatpush.bf16.msra.mxu0 %v3947
  %4746 = vmatpush.bf16.msra.mxu0 %v3943
  %4747 = vmatpush.bf16.msra.mxu0 %v3939
  %4748 = vmatpush.bf16.msra.mxu0 %v3935
  %4749 = vmatpush.bf16.msra.mxu0 %v3931
  %4750 = vmatpush.bf16.msra.mxu0 %v3927
  %4751 = vmatpush.bf16.msra.mxu0 %v3923
  %4752 = vmatmul.bf16.gmra.mxu0 %v2878
  %v4753 = vpop.f32.mrf.mxu0
  %v4754 = vadd.f32 %v3147, %v4753
  %v4755 = vpop.f32.mrf.mxu0
  %4756 = vdwg.mxu0
  %4757 = vmatpush.bf16.msra.mxu0 %v3983
  %4758 = vmatpush.bf16.msra.mxu0 %v3979
  %4759 = vmatpush.bf16.msra.mxu0 %v3975
  %4760 = vmatpush.bf16.msra.mxu0 %v3971
  %4761 = vmatpush.bf16.msra.mxu0 %v3967
  %4762 = vmatpush.bf16.msra.mxu0 %v3963
  %4763 = vmatpush.bf16.msra.mxu0 %v3959
  %4764 = vmatpush.bf16.msra.mxu0 %v3955
  %4765 = vmatmul.bf16.gmra.mxu0 %v2879
  %v4766 = vpop.f32.mrf.mxu0
  %v4767 = vadd.f32 %v4754, %v4766
  %v4768 = vpop.f32.mrf.mxu0
  %4769 = vdwg.mxu0
  %4770 = vmatpush.bf16.msra.mxu0 %v4015
  %4771 = vmatpush.bf16.msra.mxu0 %v4011
  %4772 = vmatpush.bf16.msra.mxu0 %v4007
  %4773 = vmatpush.bf16.msra.mxu0 %v4003
  %4774 = vmatpush.bf16.msra.mxu0 %v3999
  %4775 = vmatpush.bf16.msra.mxu0 %v3995
  %4776 = vmatpush.bf16.msra.mxu0 %v3991
  %4777 = vmatpush.bf16.msra.mxu0 %v3987
  %4778 = vmatmul.bf16.gmra.mxu0 %v2880
  %v4779 = vpop.f32.mrf.mxu0
  %v4780 = vadd.f32 %v4767, %v4779
  %v4781 = vpop.f32.mrf.mxu0
  %4782 = vdwg.mxu0
  %4783 = vmatpush.bf16.msra.mxu0 %v4047
  %4784 = vmatpush.bf16.msra.mxu0 %v4043
  %4785 = vmatpush.bf16.msra.mxu0 %v4039
  %4786 = vmatpush.bf16.msra.mxu0 %v4035
  %4787 = vmatpush.bf16.msra.mxu0 %v4031
  %4788 = vmatpush.bf16.msra.mxu0 %v4027
  %4789 = vmatpush.bf16.msra.mxu0 %v4023
  %4790 = vmatpush.bf16.msra.mxu0 %v4019
  %4791 = vmatmul.bf16.gmra.mxu0 %v2881
  %v4792 = vpop.f32.mrf.mxu0
  %v4793 = vadd.f32 %v4780, %v4792
  %v4794 = vpop.f32.mrf.mxu0
  %4795 = vdwg.mxu0
  %4796 = vmatpush.bf16.msra.mxu0 %v4079
  %4797 = vmatpush.bf16.msra.mxu0 %v4075
  %4798 = vmatpush.bf16.msra.mxu0 %v4071
  %4799 = vmatpush.bf16.msra.mxu0 %v4067
  %4800 = vmatpush.bf16.msra.mxu0 %v4063
  %4801 = vmatpush.bf16.msra.mxu0 %v4059
  %4802 = vmatpush.bf16.msra.mxu0 %v4055
  %4803 = vmatpush.bf16.msra.mxu0 %v4051
  %4804 = vmatmul.bf16.gmra.mxu0 %v2882
  %v4805 = vpop.f32.mrf.mxu0
  %v4806 = vadd.f32 %v4793, %v4805
  %v4807 = vpop.f32.mrf.mxu0
  %4808 = vdwg.mxu0
  %4809 = vmatpush.bf16.msra.mxu0 %v4111
  %4810 = vmatpush.bf16.msra.mxu0 %v4107
  %4811 = vmatpush.bf16.msra.mxu0 %v4103
  %4812 = vmatpush.bf16.msra.mxu0 %v4099
  %4813 = vmatpush.bf16.msra.mxu0 %v4095
  %4814 = vmatpush.bf16.msra.mxu0 %v4091
  %4815 = vmatpush.bf16.msra.mxu0 %v4087
  %4816 = vmatpush.bf16.msra.mxu0 %v4083
  %4817 = vmatmul.bf16.gmra.mxu0 %v2883
  %v4818 = vpop.f32.mrf.mxu0
  %v4819 = vadd.f32 %v4806, %v4818
  %v4820 = vpop.f32.mrf.mxu0
  %4821 = vdwg.mxu0
  %4822 = vmatpush.bf16.msra.mxu0 %v4143
  %4823 = vmatpush.bf16.msra.mxu0 %v4139
  %4824 = vmatpush.bf16.msra.mxu0 %v4135
  %4825 = vmatpush.bf16.msra.mxu0 %v4131
  %4826 = vmatpush.bf16.msra.mxu0 %v4127
  %4827 = vmatpush.bf16.msra.mxu0 %v4123
  %4828 = vmatpush.bf16.msra.mxu0 %v4119
  %4829 = vmatpush.bf16.msra.mxu0 %v4115
  %4830 = vmatmul.bf16.gmra.mxu0 %v2884
  %v4831 = vpop.f32.mrf.mxu0
  %v4832 = vadd.f32 %v4819, %v4831
  %v4833 = vpop.f32.mrf.mxu0
  %4834 = vdwg.mxu0
  %4835 = vmatpush.bf16.msra.mxu0 %v4175
  %4836 = vmatpush.bf16.msra.mxu0 %v4171
  %4837 = vmatpush.bf16.msra.mxu0 %v4167
  %4838 = vmatpush.bf16.msra.mxu0 %v4163
  %4839 = vmatpush.bf16.msra.mxu0 %v4159
  %4840 = vmatpush.bf16.msra.mxu0 %v4155
  %4841 = vmatpush.bf16.msra.mxu0 %v4151
  %4842 = vmatpush.bf16.msra.mxu0 %v4147
  %4843 = vmatmul.bf16.gmra.mxu0 %v2885
  %v4844 = vpop.f32.mrf.mxu0
  %v4845 = vadd.f32 %v4832, %v4844
  %v4846 = vpop.f32.mrf.mxu0
  %4847 = vdwg.mxu0
  %v4848 = vmax.f32 %v4533, 0.0
  %v4849 = vmax.f32 %v4637, 0.0
  %v4850 = vmax.f32 %v4741, 0.0
  %v4851 = vmax.f32 %v4845, 0.0
  %v4852 = vpack.c.bf16 %v4848, %v4848
  %v4853 = vpack.c.bf16 %v4849, %v4849
  %v4854 = vpack.c.bf16 %v4850, %v4850
  %v4855 = vpack.c.bf16 %v4851, %v4851
  %v4856 = vld [vmem:[%s10] sm:$0xf]
  %v4857 = vld [vmem:[%s10 + $0x4] sm:$0xf]
  %v4858 = vld [vmem:[%s10 + $0x8] sm:$0xf]
  %v4859 = vld [vmem:[%s10 + $0xc] sm:$0xf]
  %v4860 = vld [vmem:[%s10 + $0x10] sm:$0xf]
  %v4861 = vld [vmem:[%s10 + $0x14] sm:$0xf]
  %v4862 = vld [vmem:[%s10 + $0x18] sm:$0xf]
  %v4863 = vld [vmem:[%s10 + $0x1c] sm:$0xf]
  %v4864 = vld [vmem:[%s10 + $0x20] sm:$0xf]
  %v4865 = vld [vmem:[%s10 + $0x24] sm:$0xf]
  %v4866 = vld [vmem:[%s10 + $0x28] sm:$0xf]
  %v4867 = vld [vmem:[%s10 + $0x2c] sm:$0xf]
  %v4868 = vld [vmem:[%s10 + $0x30] sm:$0xf]
  %v4869 = vld [vmem:[%s10 + $0x34] sm:$0xf]
  %v4870 = vld [vmem:[%s10 + $0x38] sm:$0xf]
  %v4871 = vld [vmem:[%s10 + $0x3c] sm:$0xf]
  %v4872 = vld [vmem:[%s10 + $0x40] sm:$0xf]
  %v4873 = vld [vmem:[%s10 + $0x44] sm:$0xf]
  %v4874 = vld [vmem:[%s10 + $0x48] sm:$0xf]
  %v4875 = vld [vmem:[%s10 + $0x4c] sm:$0xf]
  %v4876 = vld [vmem:[%s10 + $0x50] sm:$0xf]
  %v4877 = vld [vmem:[%s10 + $0x54] sm:$0xf]
  %v4878 = vld [vmem:[%s10 + $0x58] sm:$0xf]
  %v4879 = vld [vmem:[%s10 + $0x5c] sm:$0xf]
  %v4880 = vld [vmem:[%s10 + $0x60] sm:$0xf]
  %v4881 = vld [vmem:[%s10 + $0x64] sm:$0xf]
  %v4882 = vld [vmem:[%s10 + $0x68] sm:$0xf]
  %v4883 = vld [vmem:[%s10 + $0x6c] sm:$0xf]
  %v4884 = vld [vmem:[%s10 + $0x70] sm:$0xf]
  %v4885 = vld [vmem:[%s10 + $0x74] sm:$0xf]
  %v4886 = vld [vmem:[%s10 + $0x78] sm:$0xf]
  %v4887 = vld [vmem:[%s10 + $0x7c] sm:$0xf]
  %v4888 = vld [vmem:[%s10 + $0x80] sm:$0xf]
  %v4889 = vld [vmem:[%s10 + $0x84] sm:$0xf]
  %v4890 = vld [vmem:[%s10 + $0x88] sm:$0xf]
  %v4891 = vld [vmem:[%s10 + $0x8c] sm:$0xf]
  %v4892 = vld [vmem:[%s10 + $0x90] sm:$0xf]
  %v4893 = vld [vmem:[%s10 + $0x94] sm:$0xf]
  %v4894 = vld [vmem:[%s10 + $0x98] sm:$0xf]
  %v4895 = vld [vmem:[%s10 + $0x9c] sm:$0xf]
  %v4896 = vld [vmem:[%s10 + $0xa0] sm:$0xf]
  %v4897 = vld [vmem:[%s10 + $0xa4] sm:$0xf]
  %v4898 = vld [vmem:[%s10 + $0xa8] sm:$0xf]
  %v4899 = vld [vmem:[%s10 + $0xac] sm:$0xf]
  %v4900 = vld [vmem:[%s10 + $0xb0] sm:$0xf]
  %v4901 = vld [vmem:[%s10 + $0xb4] sm:$0xf]
  %v4902 = vld [vmem:[%s10 + $0xb8] sm:$0xf]
  %v4903 = vld [vmem:[%s10 + $0xbc] sm:$0xf]
  %v4904 = vld [vmem:[%s10 + $0xc0] sm:$0xf]
  %v4905 = vld [vmem:[%s10 + $0xc4] sm:$0xf]
  %v4906 = vld [vmem:[%s10 + $0xc8] sm:$0xf]
  %v4907 = vld [vmem:[%s10 + $0xcc] sm:$0xf]
  %v4908 = vld [vmem:[%s10 + $0xd0] sm:$0xf]
  %v4909 = vld [vmem:[%s10 + $0xd4] sm:$0xf]
  %v4910 = vld [vmem:[%s10 + $0xd8] sm:$0xf]
  %v4911 = vld [vmem:[%s10 + $0xdc] sm:$0xf]
  %v4912 = vld [vmem:[%s10 + $0xe0] sm:$0xf]
  %v4913 = vld [vmem:[%s10 + $0xe4] sm:$0xf]
  %v4914 = vld [vmem:[%s10 + $0xe8] sm:$0xf]
  %v4915 = vld [vmem:[%s10 + $0xec] sm:$0xf]
  %v4916 = vld [vmem:[%s10 + $0xf0] sm:$0xf]
  %v4917 = vld [vmem:[%s10 + $0xf4] sm:$0xf]
  %v4918 = vld [vmem:[%s10 + $0xf8] sm:$0xf]
  %v4919 = vld [vmem:[%s10 + $0xfc] sm:$0xf]
  %v4920 = vld [vmem:[%s11] sm:$0x1]
  %v4922 = vperm.slane %v4920, 0
  %v4988 = vunpack.c.l.b16 %v4856
  %v4989 = vunpack.c.l.b16 %v4857
  %v4990 = vunpack.c.l.b16 %v4858
  %v4991 = vunpack.c.l.b16 %v4859
  %v4992 = vunpack.c.l.b16 %v4860
  %v4993 = vunpack.c.l.b16 %v4861
  %v4994 = vunpack.c.l.b16 %v4862
  %v4995 = vunpack.c.l.b16 %v4863
  %v4996 = vunpack.c.l.b16 %v4864
  %v4997 = vunpack.c.l.b16 %v4865
  %v4998 = vunpack.c.l.b16 %v4866
  %v4999 = vunpack.c.l.b16 %v4867
  %v5000 = vunpack.c.l.b16 %v4868
  %v5001 = vunpack.c.l.b16 %v4869
  %v5002 = vunpack.c.l.b16 %v4870
  %v5003 = vunpack.c.l.b16 %v4871
  %v5004 = vunpack.c.l.b16 %v4872
  %v5005 = vunpack.c.l.b16 %v4873
  %v5006 = vunpack.c.l.b16 %v4874
  %v5007 = vunpack.c.l.b16 %v4875
  %v5008 = vunpack.c.l.b16 %v4876
  %v5009 = vunpack.c.l.b16 %v4877
  %v5010 = vunpack.c.l.b16 %v4878
  %v5011 = vunpack.c.l.b16 %v4879
  %v5012 = vunpack.c.l.b16 %v4880
  %v5013 = vunpack.c.l.b16 %v4881
  %v5014 = vunpack.c.l.b16 %v4882
  %v5015 = vunpack.c.l.b16 %v4883
  %v5016 = vunpack.c.l.b16 %v4884
  %v5017 = vunpack.c.l.b16 %v4885
  %v5018 = vunpack.c.l.b16 %v4886
  %v5019 = vunpack.c.l.b16 %v4887
  %v5020 = vunpack.c.l.b16 %v4888
  %v5021 = vunpack.c.l.b16 %v4889
  %v5022 = vunpack.c.l.b16 %v4890
  %v5023 = vunpack.c.l.b16 %v4891
  %v5024 = vunpack.c.l.b16 %v4892
  %v5025 = vunpack.c.l.b16 %v4893
  %v5026 = vunpack.c.l.b16 %v4894
  %v5027 = vunpack.c.l.b16 %v4895
  %v5028 = vunpack.c.l.b16 %v4896
  %v5029 = vunpack.c.l.b16 %v4897
  %v5030 = vunpack.c.l.b16 %v4898
  %v5031 = vunpack.c.l.b16 %v4899
  %v5032 = vunpack.c.l.b16 %v4900
  %v5033 = vunpack.c.l.b16 %v4901
  %v5034 = vunpack.c.l.b16 %v4902
  %v5035 = vunpack.c.l.b16 %v4903
  %v5036 = vunpack.c.l.b16 %v4904
  %v5037 = vunpack.c.l.b16 %v4905
  %v5038 = vunpack.c.l.b16 %v4906
  %v5039 = vunpack.c.l.b16 %v4907
  %v5040 = vunpack.c.l.b16 %v4908
  %v5041 = vunpack.c.l.b16 %v4909
  %v5042 = vunpack.c.l.b16 %v4910
  %v5043 = vunpack.c.l.b16 %v4911
  %v5044 = vunpack.c.l.b16 %v4912
  %v5045 = vunpack.c.l.b16 %v4913
  %v5046 = vunpack.c.l.b16 %v4914
  %v5047 = vunpack.c.l.b16 %v4915
  %v5048 = vunpack.c.l.b16 %v4916
  %v5049 = vunpack.c.l.b16 %v4917
  %v5050 = vunpack.c.l.b16 %v4918
  %v5051 = vunpack.c.l.b16 %v4919
  %v5052 = vpack.c.b16 %v4989, %v4988
  %v5053 = vpack.c.b16 %v4991, %v4990
  %v5054 = vpack.c.b16 %v4993, %v4992
  %v5055 = vpack.c.b16 %v4995, %v4994
  %v5056 = vpack.c.b16 %v4997, %v4996
  %v5057 = vpack.c.b16 %v4999, %v4998
  %v5058 = vpack.c.b16 %v5001, %v5000
  %v5059 = vpack.c.b16 %v5003, %v5002
  %v5060 = vpack.c.b16 %v5005, %v5004
  %v5061 = vpack.c.b16 %v5007, %v5006
  %v5062 = vpack.c.b16 %v5009, %v5008
  %v5063 = vpack.c.b16 %v5011, %v5010
  %v5064 = vpack.c.b16 %v5013, %v5012
  %v5065 = vpack.c.b16 %v5015, %v5014
  %v5066 = vpack.c.b16 %v5017, %v5016
  %v5067 = vpack.c.b16 %v5019, %v5018
  %v5068 = vpack.c.b16 %v5021, %v5020
  %v5069 = vpack.c.b16 %v5023, %v5022
  %v5070 = vpack.c.b16 %v5025, %v5024
  %v5071 = vpack.c.b16 %v5027, %v5026
  %v5072 = vpack.c.b16 %v5029, %v5028
  %v5073 = vpack.c.b16 %v5031, %v5030
  %v5074 = vpack.c.b16 %v5033, %v5032
  %v5075 = vpack.c.b16 %v5035, %v5034
  %v5076 = vpack.c.b16 %v5037, %v5036
  %v5077 = vpack.c.b16 %v5039, %v5038
  %v5078 = vpack.c.b16 %v5041, %v5040
  %v5079 = vpack.c.b16 %v5043, %v5042
  %v5080 = vpack.c.b16 %v5045, %v5044
  %v5081 = vpack.c.b16 %v5047, %v5046
  %v5082 = vpack.c.b16 %v5049, %v5048
  %v5083 = vpack.c.b16 %v5051, %v5050
  %5116 = vmatpush.bf16.msra.mxu0 %v5059
  %5117 = vmatpush.bf16.msra.mxu0 %v5058
  %5118 = vmatpush.bf16.msra.mxu0 %v5057
  %5119 = vmatpush.bf16.msra.mxu0 %v5056
  %5120 = vmatpush.bf16.msra.mxu0 %v5055
  %5121 = vmatpush.bf16.msra.mxu0 %v5054
  %5122 = vmatpush.bf16.msra.mxu0 %v5053
  %5123 = vmatpush.bf16.msra.mxu0 %v5052
  %5124 = vmatmul.bf16.gmra.mxu0 %v4852
  %v5125 = vpop.f32.mrf.mxu0
  %v5126 = vadd.f32 %v4922, %v5125
  %v5127 = vpop.f32.mrf.mxu0
  %5128 = vdwg.mxu0
  %5129 = vmatpush.bf16.msra.mxu0 %v5067
  %5130 = vmatpush.bf16.msra.mxu0 %v5066
  %5131 = vmatpush.bf16.msra.mxu0 %v5065
  %5132 = vmatpush.bf16.msra.mxu0 %v5064
  %5133 = vmatpush.bf16.msra.mxu0 %v5063
  %5134 = vmatpush.bf16.msra.mxu0 %v5062
  %5135 = vmatpush.bf16.msra.mxu0 %v5061
  %5136 = vmatpush.bf16.msra.mxu0 %v5060
  %5137 = vmatmul.bf16.gmra.mxu0 %v4853
  %v5138 = vpop.f32.mrf.mxu0
  %v5139 = vadd.f32 %v5126, %v5138
  %v5140 = vpop.f32.mrf.mxu0
  %5141 = vdwg.mxu0
  %5142 = vmatpush.bf16.msra.mxu0 %v5075
  %5143 = vmatpush.bf16.msra.mxu0 %v5074
  %5144 = vmatpush.bf16.msra.mxu0 %v5073
  %5145 = vmatpush.bf16.msra.mxu0 %v5072
  %5146 = vmatpush.bf16.msra.mxu0 %v5071
  %5147 = vmatpush.bf16.msra.mxu0 %v5070
  %5148 = vmatpush.bf16.msra.mxu0 %v5069
  %5149 = vmatpush.bf16.msra.mxu0 %v5068
  %5150 = vmatmul.bf16.gmra.mxu0 %v4854
  %v5151 = vpop.f32.mrf.mxu0
  %v5152 = vadd.f32 %v5139, %v5151
  %v5153 = vpop.f32.mrf.mxu0
  %5154 = vdwg.mxu0
  %5155 = vmatpush.bf16.msra.mxu0 %v5083
  %5156 = vmatpush.bf16.msra.mxu0 %v5082
  %5157 = vmatpush.bf16.msra.mxu0 %v5081
  %5158 = vmatpush.bf16.msra.mxu0 %v5080
  %5159 = vmatpush.bf16.msra.mxu0 %v5079
  %5160 = vmatpush.bf16.msra.mxu0 %v5078
  %5161 = vmatpush.bf16.msra.mxu0 %v5077
  %5162 = vmatpush.bf16.msra.mxu0 %v5076
  %5163 = vmatmul.bf16.gmra.mxu0 %v4855
  %v5164 = vpop.f32.mrf.mxu0
  %v5165 = vadd.f32 %v5152, %v5164
  %v5166 = vpop.f32.mrf.mxu0
  %5167 = vdwg.mxu0
  %v5168 = vmax.f32 %v5165, 0.0
  %v5169 = vld [vmem:[%s12] sm:$0x1]
  %v5171 = vperm.slane %v5169, 0
  %v5173 = vmul.f32 %v5168, %v5171
  %5174 = vadd.xlane.f32.xlu0 %v5173
  %v5175 = vpop.xlane.xlu0 %5174
  %v5176 = vld [vmem:[#allocation4] sm:$0x1]
  %v5178 = vperm.slane %v5176, 0
  %v5180 = vadd.f32 %v5175, %v5178
  %v5182 = vrot.slane %v5180, 2
  %v5184 = vmax.f32 %v5180, %v5182
  %v5185 = vrot.slane %v5180, 4
  %v5187 = vmax.f32 %v5184, %v5185
  %vm5188 = vcmask 1024
  %5189 = vst.msk [vmem:[%s14] sm:$0x3] %vm5188, %v5187
  // Predicated region
  $region58: #{critic_forward.1} parent=0 // pred_check
    _
  $region59: #{critic_forward.1} parent=0 // pred_check_branch
    %5191 = sbr.rel (0) target = $region61
  $region60: #{critic_forward.1} parent=0 // pred_region
    _
  $region61: #{critic_forward.1} parent=0 // pred_fallthru
    _
  // Predicated region
  $region62: #{critic_forward.1} parent=0 // pred_check
    _
  $region63: #{critic_forward.1} parent=0 // pred_check_branch
    %5193 = sbr.rel (0) target = $region65
  $region64: #{critic_forward.1} parent=0 // pred_region
    _
  $region65: #{critic_forward.1} parent=0 // pred_fallthru
    _

</llo_original>
